<compile_context>
chip_gen: v5e
topology: v5e:2x2
jax: 0.10.0
libtpu: 0.0.40
codegen_flags: <defaults>
</compile_context>

<pallas_src>
import functools

import jax
import jax.numpy as jnp
from jax import lax
from jax.experimental import pallas as pl
from jax.experimental.pallas import tpu as pltpu


_LAYER_PARAMS = ("wqk", "bqk", "wv", "bv", "wo", "bo",
                 "g1", "be1", "w1", "b1", "w2", "b2", "g2", "be2")
_CONST_PARAMS = ("gn", "bn")
_PARAM_ORDER = _LAYER_PARAMS + _CONST_PARAMS


def _layer_norm(x, gamma, beta, eps=1e-5):
    mu = jnp.mean(x, axis=-1, keepdims=True)
    var = jnp.mean((x - mu) ** 2, axis=-1, keepdims=True)
    return (x - mu) * lax.rsqrt(var + eps) * gamma + beta


# ----------------------------------------------------------------------------
# Kernel: ONE encoder layer for ONE batch element per grid step (grid=(B, L)).
# The activation is carried across layers in a VMEM scratch accumulator.
# ----------------------------------------------------------------------------
def _encoder_layer_kernel(src_ref, pos_ref,
                          wqk_ref, bqk_ref, wv_ref, bv_ref, wo_ref, bo_ref,
                          g1_ref, be1_ref, w1_ref, b1_ref, w2_ref, b2_ref,
                          g2_ref, be2_ref, gn_ref, bn_ref,
                          out_ref, x_scr,
                          *, nhead, apply_final_norm):
    l = pl.program_id(1)
    n_layers = pl.num_programs(1)

    @pl.when(l == 0)
    def _():
        x_scr[...] = src_ref[0].astype(jnp.float32)

    x = x_scr[...]                              # (S, D) f32, resident in VMEM
    p = pos_ref[0].astype(jnp.float32)          # (S, D)
    S, D = x.shape
    dh = D // nhead

    # ---- self-attention: q = k = x + pos, v = x.  Fused QK projection;
    #      the 1/sqrt(dh) scale is folded into the q half host-side. ----
    qk_in = (x + p).astype(jnp.bfloat16)
    qkp = jnp.dot(qk_in, wqk_ref[0],
                  preferred_element_type=jnp.float32) + bqk_ref[0]   # (S, 2D)
    q = qkp[:, :D]
    k = qkp[:, D:]
    v = jnp.dot(x.astype(jnp.bfloat16), wv_ref[0],
                preferred_element_type=jnp.float32) + bv_ref[0]      # (S, D)

    # Head-major (H, S, dh) views.
    # TODO(synk): replace the lane-slice+stack with a single layout-aware
    # pltpu.einshape('q(hd)->hqd') once the split-group syntax is confirmed;
    # the dh-wide lane slices cost an XLU relayout each.
    def to_heads(t):
        return jnp.stack([t[:, h * dh:(h + 1) * dh] for h in range(nhead)],
                         axis=0).astype(jnp.bfloat16)

    q3, k3, v3 = to_heads(q), to_heads(k), to_heads(v)

    # ---- flash-style online softmax over KV tiles: only an (H, S, tk)
    #      score tile is live, never the full (H, S, S) f32 tensor. ----
    # TODO(synk): at real DETR sizes (S~1100, D=256) also add a query-row
    # grid axis marked "parallel" (v7x megacore) and a bf16 exp path (v6e/v7x).
    tk = 128 if S % 128 == 0 else S
    n_kv = S // tk
    m = jnp.full((nhead, S, 1), -jnp.inf, jnp.float32)
    lsum = jnp.zeros((nhead, S, 1), jnp.float32)
    acc = jnp.zeros((nhead, S, dh), jnp.float32)
    for t in range(n_kv):                       # static unroll over KV tiles
        kt = k3[:, t * tk:(t + 1) * tk, :]
        vt = v3[:, t * tk:(t + 1) * tk, :]
        s = jnp.einsum('hqd,hkd->hqk', q3, kt,
                       preferred_element_type=jnp.float32)           # (H,S,tk)
        m_new = jnp.maximum(m, jnp.max(s, axis=-1, keepdims=True))
        alpha = jnp.exp(m - m_new)
        pexp = jnp.exp(s - m_new)
        lsum = alpha * lsum + jnp.sum(pexp, axis=-1, keepdims=True)
        acc = alpha * acc + jnp.einsum('hqk,hkd->hqd',
                                       pexp.astype(jnp.bfloat16), vt,
                                       preferred_element_type=jnp.float32)
        m = m_new
    ctx = acc * pl.reciprocal(lsum, approx=True)                     # (H,S,dh)

    # ---- output projection without the H-way concat: sum_h ctx[h] @ Wo[h] ----
    attn_h = jnp.einsum('hqd,hdo->hqo', ctx.astype(jnp.bfloat16), wo_ref[0],
                        preferred_element_type=jnp.float32)          # (H,S,D)
    attn = jnp.sum(attn_h, axis=0) + bo_ref[0]                       # (S, D)

    # ---- residual + LayerNorm 1 ----
    x1 = _layer_norm(x + attn, g1_ref[0], be1_ref[0])

    # ---- feed-forward (ReLU) ----
    h1 = jnp.dot(x1.astype(jnp.bfloat16), w1_ref[0],
                 preferred_element_type=jnp.float32) + b1_ref[0]
    h1 = jnp.maximum(h1, 0.0)
    ff = jnp.dot(h1.astype(jnp.bfloat16), w2_ref[0],
                 preferred_element_type=jnp.float32) + b2_ref[0]

    # ---- residual + LayerNorm 2; carry activation to the next layer ----
    x_new = _layer_norm(x1 + ff, g2_ref[0], be2_ref[0])
    x_scr[...] = x_new

    @pl.when(l == n_layers - 1)
    def _():
        y = x_new
        if apply_final_norm:
            y = _layer_norm(y, gn_ref[...], bn_ref[...])
        out_ref[0] = y.astype(out_ref.dtype)


# ----------------------------------------------------------------------------
# Host-side parameter prep (one-time): stack layers, fuse Wq|Wk, fold scale,
# reshape Wo to (H, dh, D), cast matmul weights to bf16.
# ----------------------------------------------------------------------------
def prepare_encoder_params(layer_params, norm_params, d_model, nhead):
    dh = d_model // nhead
    scale = 1.0 / (dh ** 0.5)
    L = len(layer_params)

    def stack(name):
        return jnp.stack([lp[name] for lp in layer_params], axis=0)

    def as_vec(x):                          # (L, N) -> (L, 1, N) f32
        return x[:, None, :].astype(jnp.float32)

    wqk = jnp.concatenate([stack("wq") * scale, stack("wk")], axis=-1)
    bqk = jnp.concatenate([stack("bq") * scale, stack("bk")], axis=-1)
    packed = {
        "wqk": wqk.astype(jnp.bfloat16),                              # (L,D,2D)
        "bqk": as_vec(bqk),                                           # (L,1,2D)
        "wv": stack("wv").astype(jnp.bfloat16),
        "bv": as_vec(stack("bv")),
        "wo": stack("wo").reshape(L, nhead, dh, d_model).astype(jnp.bfloat16),
        "bo": as_vec(stack("bo")),
        "g1": as_vec(stack("g1")), "be1": as_vec(stack("be1")),
        "w1": stack("w1").astype(jnp.bfloat16), "b1": as_vec(stack("b1")),
        "w2": stack("w2").astype(jnp.bfloat16), "b2": as_vec(stack("b2")),
        "g2": as_vec(stack("g2")), "be2": as_vec(stack("be2")),
    }
    if norm_params is not None:
        packed["gn"] = norm_params["g"].reshape(1, d_model).astype(jnp.float32)
        packed["bn"] = norm_params["b"].reshape(1, d_model).astype(jnp.float32)
        apply_final_norm = True
    else:
        packed["gn"] = jnp.ones((1, d_model), jnp.float32)
        packed["bn"] = jnp.zeros((1, d_model), jnp.float32)
        apply_final_norm = False
    return packed, apply_final_norm


# ----------------------------------------------------------------------------
# Wrapper: one pallas_call, grid=(B, L) — batch parallel, layers sequential.
# ----------------------------------------------------------------------------
def transformer_encoder(src_sbd, pos_sbd, packed, nhead, apply_final_norm):
    """src_sbd, pos_sbd: (S, B, D) like PyTorch.  Returns (S, B, D)."""
    x = jnp.transpose(src_sbd, (1, 0, 2))       # (B, S, D)
    p = jnp.transpose(pos_sbd, (1, 0, 2))
    B, S, D = x.shape
    L, _, F = packed["w1"].shape
    H = nhead
    dh = D // H

    act_spec = pl.BlockSpec((1, S, D), lambda b, l: (b, 0, 0))

    def layer_spec(arr):                        # one layer per l-step, pipelined
        tail = arr.shape[1:]
        return pl.BlockSpec((1,) + tail,
                            lambda b, l, n=len(tail): (l,) + (0,) * n)

    def const_spec(arr):                        # final-norm params, fetched once
        return pl.BlockSpec(arr.shape, lambda b, l, n=arr.ndim: (0,) * n)

    in_specs = ([act_spec, act_spec]
                + [layer_spec(packed[n]) for n in _LAYER_PARAMS]
                + [const_spec(packed[n]) for n in _CONST_PARAMS])
    params = [packed[n] for n in _PARAM_ORDER]

    # Explicit VMEM budget: double-buffered per-layer weights + activation
    # scratch + src/pos/out blocks + f32 intermediates (attention tile, FFN).
    tk = 128 if S % 128 == 0 else S
    w_bytes = (D * 2 * D + 2 * D * D + 2 * D * F) * 2        # bf16 weights/layer
    b_bytes = (2 * D + 7 * D + F) * 4                        # f32 vecs/layer
    inter_bytes = (S * 2 * D + 4 * S * D + 3 * H * S * dh
                   + 3 * H * S * tk + H * S * D + S * F) * 4
    budget = (2 * (w_bytes + b_bytes)          # double-buffered layer params
              + 2 * 2 * S * D * 4              # src/pos blocks (double-buffered)
              + 2 * S * D * 4                  # out block + activation scratch
              + inter_bytes)
    vmem_limit = int(min(128 * 1024 * 1024, max(32 * 1024 * 1024, 2 * budget)))

    flops_layer = (2 * S * D * 2 * D + 2 * S * D * D + 4 * S * S * D
                   + 2 * S * D * D + 4 * S * D * F)
    cost = pl.CostEstimate(
        flops=int(B * L * flops_layer),
        transcendentals=int(B * L * (H * S * S + 4 * S)),
        bytes_accessed=int(3 * B * S * D * 4 + L * (w_bytes + b_bytes)))

    out = pl.pallas_call(
        functools.partial(_encoder_layer_kernel, nhead=nhead,
                          apply_final_norm=apply_final_norm),
        out_shape=jax.ShapeDtypeStruct((B, S, D), x.dtype),
        grid_spec=pltpu.PrefetchScalarGridSpec(
            num_scalar_prefetch=0,
            grid=(B, L),
            in_specs=in_specs,
            out_specs=act_spec,
            scratch_shapes=[pltpu.VMEM((S, D), jnp.float32)]),
        compiler_params=pltpu.CompilerParams(
            dimension_semantics=("parallel", "arbitrary"),
            vmem_limit_bytes=vmem_limit),
        cost_estimate=cost,
    )(x, p, *params)
    return jnp.transpose(out, (1, 0, 2))        # back to (S, B, D)


# ----------------------------------------------------------------------------
# Deterministic parameters + pure-JAX f32 reference for a sanity check.
# ----------------------------------------------------------------------------
def make_layer_params(key, d_model, dim_ff):
    keys = jax.random.split(key, 10)
    s = 0.05

    def w(k, shape):
        return jax.random.normal(k, shape, jnp.float32) * s

    return {
        "wq": w(keys[0], (d_model, d_model)), "bq": w(keys[1], (d_model,)),
        "wk": w(keys[2], (d_model, d_model)), "bk": w(keys[3], (d_model,)),
        "wv": w(keys[4], (d_model, d_model)), "bv": w(keys[5], (d_model,)),
        "wo": w(keys[6], (d_model, d_model)), "bo": w(keys[7], (d_model,)),
        "g1": jnp.ones((d_model,), jnp.float32),
        "be1": jnp.zeros((d_model,), jnp.float32),
        "w1": w(keys[8], (d_model, dim_ff)),
        "b1": jnp.zeros((dim_ff,), jnp.float32),
        "w2": w(keys[9], (dim_ff, d_model)),
        "b2": jnp.zeros((d_model,), jnp.float32),
        "g2": jnp.ones((d_model,), jnp.float32),
        "be2": jnp.zeros((d_model,), jnp.float32),
    }


def _reference_forward(src_sbd, pos_sbd, layer_params, norm_params, nhead):
    def ln(x, g, b):
        mu = jnp.mean(x, -1, keepdims=True)
        var = jnp.mean((x - mu) ** 2, -1, keepdims=True)
        return (x - mu) / jnp.sqrt(var + 1e-5) * g + b

    x = jnp.transpose(src_sbd, (1, 0, 2)).astype(jnp.float32)
    p = jnp.transpose(pos_sbd, (1, 0, 2)).astype(jnp.float32)
    B, S, D = x.shape
    dh = D // nhead
    scale = 1.0 / (dh ** 0.5)
    for lp in layer_params:
        qk = x + p
        q = (qk @ lp["wq"] + lp["bq"]).reshape(B, S, nhead, dh).transpose(0, 2, 1, 3) * scale
        k = (qk @ lp["wk"] + lp["bk"]).reshape(B, S, nhead, dh).transpose(0, 2, 1, 3)
        v = (x @ lp["wv"] + lp["bv"]).reshape(B, S, nhead, dh).transpose(0, 2, 1, 3)
        a = jax.nn.softmax(jnp.einsum('bhqd,bhkd->bhqk', q, k), axis=-1)
        ctx = jnp.einsum('bhqk,bhkd->bhqd', a, v).transpose(0, 2, 1, 3).reshape(B, S, D)
        attn = ctx @ lp["wo"] + lp["bo"]
        x = ln(x + attn, lp["g1"], lp["be1"])
        h = jnp.maximum(x @ lp["w1"] + lp["b1"], 0.0)
        x = ln(x + h @ lp["w2"] + lp["b2"], lp["g2"], lp["be2"])
    if norm_params is not None:
        x = ln(x, norm_params["g"], norm_params["b"])
    return jnp.transpose(x, (1, 0, 2))


if __name__ == "__main__":
    # Small DETR-like configuration: 8x8 feature map flattened -> S = 64.
    # NOTE: toy shapes only exercise correctness/structure; tune at real DETR
    # sizes (D=256, FF=2048, S~1100) where lane-dense layouts matter.
    d_model, nhead, dim_ff, num_layers = 32, 4, 64, 2
    B, S = 2, 64

    root = jax.random.PRNGKey(0)
    k_src, k_pos, k_params = jax.random.split(root, 3)

    src = jax.random.normal(k_src, (S, B, d_model), jnp.float32)   # (S, B, D)
    pos = jax.random.normal(k_pos, (S, B, d_model), jnp.float32)

    layer_keys = jax.random.split(k_params, num_layers)
    layer_params = [make_layer_params(k, d_model, dim_ff) for k in layer_keys]
    norm_params = {"g": jnp.ones((d_model,), jnp.float32),
                   "b": jnp.zeros((d_model,), jnp.float32)}

    packed, apply_final_norm = prepare_encoder_params(
        layer_params, norm_params, d_model, nhead)

    out = transformer_encoder(src, pos, packed, nhead, apply_final_norm)
    out = jax.block_until_ready(out)

    assert out.shape == (S, B, d_model)
    assert bool(jnp.all(jnp.isfinite(out)))

    # Sanity check vs f32 reference (bf16 MXU operands + approx reciprocal
    # introduce small numerical differences).
    ref = _reference_forward(src, pos, layer_params, norm_params, nhead)
    max_err = float(jnp.max(jnp.abs(out - ref)))
    assert max_err < 5e-2, f"max abs err vs reference: {max_err}"

    print("KERNEL_OK")
</pallas_src>

<mosaic_0001>
module attributes {stable_mosaic.version = 11 : i64} {
  func.func @_encoder_layer_kernel(%arg0: i32, %arg1: i32, %arg2: memref<1x64x32xf32, #tpu.memory_space<vmem>>, %arg3: memref<1x64x32xf32, #tpu.memory_space<vmem>>, %arg4: memref<1x32x64xbf16, #tpu.memory_space<vmem>>, %arg5: memref<1x1x64xf32, #tpu.memory_space<vmem>>, %arg6: memref<1x32x32xbf16, #tpu.memory_space<vmem>>, %arg7: memref<1x1x32xf32, #tpu.memory_space<vmem>>, %arg8: memref<1x4x8x32xbf16, #tpu.memory_space<vmem>>, %arg9: memref<1x1x32xf32, #tpu.memory_space<vmem>>, %arg10: memref<1x1x32xf32, #tpu.memory_space<vmem>>, %arg11: memref<1x1x32xf32, #tpu.memory_space<vmem>>, %arg12: memref<1x32x64xbf16, #tpu.memory_space<vmem>>, %arg13: memref<1x1x64xf32, #tpu.memory_space<vmem>>, %arg14: memref<1x64x32xbf16, #tpu.memory_space<vmem>>, %arg15: memref<1x1x32xf32, #tpu.memory_space<vmem>>, %arg16: memref<1x1x32xf32, #tpu.memory_space<vmem>>, %arg17: memref<1x1x32xf32, #tpu.memory_space<vmem>>, %arg18: memref<1x32xf32, #tpu.memory_space<vmem>>, %arg19: memref<1x32xf32, #tpu.memory_space<vmem>>, %arg20: memref<1x64x32xf32, #tpu.memory_space<vmem>>, %arg21: memref<64x32xf32, #tpu.memory_space<vmem>>) attributes {dimension_semantics = [#tpu.dimension_semantics<parallel>, #tpu.dimension_semantics<arbitrary>], iteration_bounds = array<i64: 2, 2>, scalar_prefetch = 0 : i64, scratch_operands = 1 : i64, tpu.core_type = #tpu.core_type<tc>, window_params = [{transform_indices = @transform_0, window_bounds = array<i64: 1, 64, 32>}, {transform_indices = @transform_1, window_bounds = array<i64: 1, 64, 32>}, {transform_indices = @transform_2, window_bounds = array<i64: 1, 32, 64>}, {transform_indices = @transform_3, window_bounds = array<i64: 1, 1, 64>}, {transform_indices = @transform_4, window_bounds = array<i64: 1, 32, 32>}, {transform_indices = @transform_5, window_bounds = array<i64: 1, 1, 32>}, {transform_indices = @transform_6, window_bounds = array<i64: 1, 4, 8, 32>}, {transform_indices = @transform_7, window_bounds = array<i64: 1, 1, 32>}, {transform_indices = @transform_8, window_bounds = array<i64: 1, 1, 32>}, {transform_indices = @transform_9, window_bounds = array<i64: 1, 1, 32>}, {transform_indices = @transform_10, window_bounds = array<i64: 1, 32, 64>}, {transform_indices = @transform_11, window_bounds = array<i64: 1, 1, 64>}, {transform_indices = @transform_12, window_bounds = array<i64: 1, 64, 32>}, {transform_indices = @transform_13, window_bounds = array<i64: 1, 1, 32>}, {transform_indices = @transform_14, window_bounds = array<i64: 1, 1, 32>}, {transform_indices = @transform_15, window_bounds = array<i64: 1, 1, 32>}, {pipeline_mode = #tpu.pipeline_mode<synchronous>, transform_indices = @transform_16, window_bounds = array<i64: 1, 32>}, {pipeline_mode = #tpu.pipeline_mode<synchronous>, transform_indices = @transform_17, window_bounds = array<i64: 1, 32>}, {transform_indices = @transform_18, window_bounds = array<i64: 1, 64, 32>}]} {
    %c0_i32 = arith.constant 0 : i32
    %0 = arith.cmpi eq, %arg1, %c0_i32 : i32
    %1 = arith.extui %0 : i1 to i32
    %c0_i32_0 = arith.constant 0 : i32
    %2 = arith.cmpi ne, %1, %c0_i32_0 : i32
    scf.if %2 {
      %c0_74 = arith.constant 0 : index
      %c0_75 = arith.constant 0 : index
      %c0_76 = arith.constant 0 : index
      %164 = vector.load %arg2[%c0_74, %c0_75, %c0_76] : memref<1x64x32xf32, #tpu.memory_space<vmem>>, vector<1x64x32xf32>
      %165 = vector.shape_cast %164 : vector<1x64x32xf32> to vector<64x32xf32>
      %c0_77 = arith.constant 0 : index
      %c0_78 = arith.constant 0 : index
      %166 = vector.load %arg21[%c0_77, %c0_78] : memref<64x32xf32, #tpu.memory_space<vmem>>, vector<64x32xf32>
      tpu.vector_store %arg21[%c0_77, %c0_78], %165 {strides = array<i32>} : memref<64x32xf32, #tpu.memory_space<vmem>>, vector<64x32xf32>,
    } else {
    }
    %c0 = arith.constant 0 : index
    %c0_1 = arith.constant 0 : index
    %3 = vector.load %arg21[%c0, %c0_1] : memref<64x32xf32, #tpu.memory_space<vmem>>, vector<64x32xf32>
    %c0_2 = arith.constant 0 : index
    %c0_3 = arith.constant 0 : index
    %c0_4 = arith.constant 0 : index
    %4 = vector.load %arg3[%c0_2, %c0_3, %c0_4] : memref<1x64x32xf32, #tpu.memory_space<vmem>>, vector<1x64x32xf32>
    %5 = vector.shape_cast %4 : vector<1x64x32xf32> to vector<64x32xf32>
    %6 = arith.addf %3, %5 : vector<64x32xf32>
    %7 = arith.truncf %6 : vector<64x32xf32> to vector<64x32xbf16>
    %c0_5 = arith.constant 0 : index
    %c0_6 = arith.constant 0 : index
    %c0_7 = arith.constant 0 : index
    %8 = vector.load %arg4[%c0_5, %c0_6, %c0_7] : memref<1x32x64xbf16, #tpu.memory_space<vmem>>, vector<1x32x64xbf16>
    %9 = vector.shape_cast %8 : vector<1x32x64xbf16> to vector<32x64xbf16>
    %cst = arith.constant dense<0.000000e+00> : vector<64x64xf32>
    %10 = tpu.matmul %7, %9, %cst {dimension_numbers = #tpu.dot_dimension_numbers<[1], [0], [0], [1], [0, 0, 1, 1], [], []>} : vector<64x32xbf16>, vector<32x64xbf16>, vector<64x64xf32> -> vector<64x64xf32>
    %c0_8 = arith.constant 0 : index
    %c0_9 = arith.constant 0 : index
    %c0_10 = arith.constant 0 : index
    %11 = vector.load %arg5[%c0_8, %c0_9, %c0_10] : memref<1x1x64xf32, #tpu.memory_space<vmem>>, vector<1x1x64xf32>
    %12 = vector.shape_cast %11 : vector<1x1x64xf32> to vector<1x64xf32>
    %13 = vector.broadcast %12 : vector<1x64xf32> to vector<64x64xf32>
    %14 = arith.addf %10, %13 : vector<64x64xf32>
    %15 = vector.extract_strided_slice %14 {offsets = [0, 0], sizes = [64, 32], strides = [1, 1]} : vector<64x64xf32> to vector<64x32xf32>
    %16 = vector.extract_strided_slice %14 {offsets = [0, 32], sizes = [64, 32], strides = [1, 1]} : vector<64x64xf32> to vector<64x32xf32>
    %17 = arith.truncf %3 : vector<64x32xf32> to vector<64x32xbf16>
    %c0_11 = arith.constant 0 : index
    %c0_12 = arith.constant 0 : index
    %c0_13 = arith.constant 0 : index
    %18 = vector.load %arg6[%c0_11, %c0_12, %c0_13] : memref<1x32x32xbf16, #tpu.memory_space<vmem>>, vector<1x32x32xbf16>
    %19 = vector.shape_cast %18 : vector<1x32x32xbf16> to vector<32x32xbf16>
    %cst_14 = arith.constant dense<0.000000e+00> : vector<64x32xf32>
    %20 = tpu.matmul %17, %19, %cst_14 {dimension_numbers = #tpu.dot_dimension_numbers<[1], [0], [0], [1], [0, 0, 1, 1], [], []>} : vector<64x32xbf16>, vector<32x32xbf16>, vector<64x32xf32> -> vector<64x32xf32>
    %c0_15 = arith.constant 0 : index
    %c0_16 = arith.constant 0 : index
    %c0_17 = arith.constant 0 : index
    %21 = vector.load %arg7[%c0_15, %c0_16, %c0_17] : memref<1x1x32xf32, #tpu.memory_space<vmem>>, vector<1x1x32xf32>
    %22 = vector.shape_cast %21 : vector<1x1x32xf32> to vector<1x32xf32>
    %23 = vector.broadcast %22 : vector<1x32xf32> to vector<64x32xf32>
    %24 = arith.addf %20, %23 : vector<64x32xf32>
    %25 = vector.extract_strided_slice %15 {offsets = [0, 0], sizes = [64, 8], strides = [1, 1]} : vector<64x32xf32> to vector<64x8xf32>
    %26 = vector.extract_strided_slice %15 {offsets = [0, 8], sizes = [64, 8], strides = [1, 1]} : vector<64x32xf32> to vector<64x8xf32>
    %27 = vector.extract_strided_slice %15 {offsets = [0, 16], sizes = [64, 8], strides = [1, 1]} : vector<64x32xf32> to vector<64x8xf32>
    %28 = vector.extract_strided_slice %15 {offsets = [0, 24], sizes = [64, 8], strides = [1, 1]} : vector<64x32xf32> to vector<64x8xf32>
    %29 = vector.shape_cast %25 : vector<64x8xf32> to vector<1x64x8xf32>
    %30 = vector.shape_cast %26 : vector<64x8xf32> to vector<1x64x8xf32>
    %31 = vector.shape_cast %27 : vector<64x8xf32> to vector<1x64x8xf32>
    %32 = vector.shape_cast %28 : vector<64x8xf32> to vector<1x64x8xf32>
    %33 = tpu.concatenate %29, %30, %31, %32 in 0 : vector<1x64x8xf32>, vector<1x64x8xf32>, vector<1x64x8xf32>, vector<1x64x8xf32> -> vector<4x64x8xf32>
    %34 = arith.truncf %33 : vector<4x64x8xf32> to vector<4x64x8xbf16>
    %35 = vector.extract_strided_slice %16 {offsets = [0, 0], sizes = [64, 8], strides = [1, 1]} : vector<64x32xf32> to vector<64x8xf32>
    %36 = vector.extract_strided_slice %16 {offsets = [0, 8], sizes = [64, 8], strides = [1, 1]} : vector<64x32xf32> to vector<64x8xf32>
    %37 = vector.extract_strided_slice %16 {offsets = [0, 16], sizes = [64, 8], strides = [1, 1]} : vector<64x32xf32> to vector<64x8xf32>
    %38 = vector.extract_strided_slice %16 {offsets = [0, 24], sizes = [64, 8], strides = [1, 1]} : vector<64x32xf32> to vector<64x8xf32>
    %39 = vector.shape_cast %35 : vector<64x8xf32> to vector<1x64x8xf32>
    %40 = vector.shape_cast %36 : vector<64x8xf32> to vector<1x64x8xf32>
    %41 = vector.shape_cast %37 : vector<64x8xf32> to vector<1x64x8xf32>
    %42 = vector.shape_cast %38 : vector<64x8xf32> to vector<1x64x8xf32>
    %43 = tpu.concatenate %39, %40, %41, %42 in 0 : vector<1x64x8xf32>, vector<1x64x8xf32>, vector<1x64x8xf32>, vector<1x64x8xf32> -> vector<4x64x8xf32>
    %44 = arith.truncf %43 : vector<4x64x8xf32> to vector<4x64x8xbf16>
    %45 = vector.extract_strided_slice %24 {offsets = [0, 0], sizes = [64, 8], strides = [1, 1]} : vector<64x32xf32> to vector<64x8xf32>
    %46 = vector.extract_strided_slice %24 {offsets = [0, 8], sizes = [64, 8], strides = [1, 1]} : vector<64x32xf32> to vector<64x8xf32>
    %47 = vector.extract_strided_slice %24 {offsets = [0, 16], sizes = [64, 8], strides = [1, 1]} : vector<64x32xf32> to vector<64x8xf32>
    %48 = vector.extract_strided_slice %24 {offsets = [0, 24], sizes = [64, 8], strides = [1, 1]} : vector<64x32xf32> to vector<64x8xf32>
    %49 = vector.shape_cast %45 : vector<64x8xf32> to vector<1x64x8xf32>
    %50 = vector.shape_cast %46 : vector<64x8xf32> to vector<1x64x8xf32>
    %51 = vector.shape_cast %47 : vector<64x8xf32> to vector<1x64x8xf32>
    %52 = vector.shape_cast %48 : vector<64x8xf32> to vector<1x64x8xf32>
    %53 = tpu.concatenate %49, %50, %51, %52 in 0 : vector<1x64x8xf32>, vector<1x64x8xf32>, vector<1x64x8xf32>, vector<1x64x8xf32> -> vector<4x64x8xf32>
    %54 = arith.truncf %53 : vector<4x64x8xf32> to vector<4x64x8xbf16>
    %cst_18 = arith.constant 0xFF800000 : f32
    %55 = vector.broadcast %cst_18 : f32 to vector<4x64x1xf32>
    %cst_19 = arith.constant 0.000000e+00 : f32
    %56 = vector.broadcast %cst_19 : f32 to vector<4x64x1xf32>
    %cst_20 = arith.constant 0.000000e+00 : f32
    %57 = vector.broadcast %cst_20 : f32 to vector<4x64x8xf32>
    "tpu.trace_start"() <{level = 10 : i32, message = "hqd,hkd->hqk"}> : () -> ()
    %cst_21 = arith.constant dense<0.000000e+00> : vector<4x64x64xf32>
    %58 = tpu.matmul %34, %44, %cst_21 {dimension_numbers = #tpu.dot_dimension_numbers<[2], [2], [1], [1], [0, 0, 0, 1, 1, 1], [0], [0]>} : vector<4x64x8xbf16>, vector<4x64x8xbf16>, vector<4x64x64xf32> -> vector<4x64x64xf32>
    "tpu.trace_stop"() : () -> ()
    %cst_22 = arith.constant dense<0xFF800000> : vector<4x64xf32>
    %59 = vector.multi_reduction <maximumf>, %58, %cst_22 [2] : vector<4x64x64xf32> to vector<4x64xf32>
    %60 = vector.shape_cast %59 : vector<4x64xf32> to vector<4x64x1xf32>
    %61 = arith.maximumf %55, %60 : vector<4x64x1xf32>
    %62 = arith.subf %55, %61 : vector<4x64x1xf32>
    %63 = math.exp %62 : vector<4x64x1xf32>
    %64 = vector.broadcast %61 : vector<4x64x1xf32> to vector<4x64x64xf32>
    %65 = arith.subf %58, %64 : vector<4x64x64xf32>
    %66 = math.exp %65 : vector<4x64x64xf32>
    %67 = arith.mulf %63, %56 : vector<4x64x1xf32>
    %cst_23 = arith.constant dense<0.000000e+00> : vector<4x64xf32>
    %68 = vector.multi_reduction <add>, %66, %cst_23 [2] : vector<4x64x64xf32> to vector<4x64xf32>
    %69 = vector.shape_cast %68 : vector<4x64xf32> to vector<4x64x1xf32>
    %70 = arith.addf %67, %69 : vector<4x64x1xf32>
    %71 = vector.broadcast %63 : vector<4x64x1xf32> to vector<4x64x8xf32>
    %72 = arith.mulf %71, %57 : vector<4x64x8xf32>
    %73 = arith.truncf %66 : vector<4x64x64xf32> to vector<4x64x64xbf16>
    "tpu.trace_start"() <{level = 10 : i32, message = "hqk,hkd->hqd"}> : () -> ()
    %cst_24 = arith.constant dense<0.000000e+00> : vector<4x64x8xf32>
    %74 = tpu.matmul %73, %54, %cst_24 {dimension_numbers = #tpu.dot_dimension_numbers<[2], [1], [1], [2], [0, 0, 0, 1, 1, 2], [0], [0]>} : vector<4x64x64xbf16>, vector<4x64x8xbf16>, vector<4x64x8xf32> -> vector<4x64x8xf32>
    "tpu.trace_stop"() : () -> ()
    %75 = arith.addf %72, %74 : vector<4x64x8xf32>
    %76 = tpu.reciprocal %70 {approx = true} : vector<4x64x1xf32> -> vector<4x64x1xf32>
    %77 = vector.broadcast %76 : vector<4x64x1xf32> to vector<4x64x8xf32>
    %78 = arith.mulf %75, %77 : vector<4x64x8xf32>
    %79 = arith.truncf %78 : vector<4x64x8xf32> to vector<4x64x8xbf16>
    %c0_25 = arith.constant 0 : index
    %c0_26 = arith.constant 0 : index
    %c0_27 = arith.constant 0 : index
    %c0_28 = arith.constant 0 : index
    %80 = vector.load %arg8[%c0_25, %c0_26, %c0_27, %c0_28] : memref<1x4x8x32xbf16, #tpu.memory_space<vmem>>, vector<1x4x8x32xbf16>
    %81 = vector.shape_cast %80 : vector<1x4x8x32xbf16> to vector<4x8x32xbf16>
    "tpu.trace_start"() <{level = 10 : i32, message = "hqd,hdo->hqo"}> : () -> ()
    %cst_29 = arith.constant dense<0.000000e+00> : vector<4x64x32xf32>
    %82 = tpu.matmul %79, %81, %cst_29 {dimension_numbers = #tpu.dot_dimension_numbers<[2], [1], [1], [2], [0, 0, 0, 1, 1, 2], [0], [0]>} : vector<4x64x8xbf16>, vector<4x8x32xbf16>, vector<4x64x32xf32> -> vector<4x64x32xf32>
    "tpu.trace_stop"() : () -> ()
    %cst_30 = arith.constant dense<0.000000e+00> : vector<64x32xf32>
    %83 = vector.multi_reduction <add>, %82, %cst_30 [0] : vector<4x64x32xf32> to vector<64x32xf32>
    %c0_31 = arith.constant 0 : index
    %c0_32 = arith.constant 0 : index
    %c0_33 = arith.constant 0 : index
    %84 = vector.load %arg9[%c0_31, %c0_32, %c0_33] : memref<1x1x32xf32, #tpu.memory_space<vmem>>, vector<1x1x32xf32>
    %85 = vector.shape_cast %84 : vector<1x1x32xf32> to vector<1x32xf32>
    %86 = vector.broadcast %85 : vector<1x32xf32> to vector<64x32xf32>
    %87 = arith.addf %83, %86 : vector<64x32xf32>
    %88 = arith.addf %3, %87 : vector<64x32xf32>
    %c0_34 = arith.constant 0 : index
    %c0_35 = arith.constant 0 : index
    %c0_36 = arith.constant 0 : index
    %89 = vector.load %arg10[%c0_34, %c0_35, %c0_36] : memref<1x1x32xf32, #tpu.memory_space<vmem>>, vector<1x1x32xf32>
    %90 = vector.shape_cast %89 : vector<1x1x32xf32> to vector<1x32xf32>
    %c0_37 = arith.constant 0 : index
    %c0_38 = arith.constant 0 : index
    %c0_39 = arith.constant 0 : index
    %91 = vector.load %arg11[%c0_37, %c0_38, %c0_39] : memref<1x1x32xf32, #tpu.memory_space<vmem>>, vector<1x1x32xf32>
    %92 = vector.shape_cast %91 : vector<1x1x32xf32> to vector<1x32xf32>
    %cst_40 = arith.constant dense<0.000000e+00> : vector<64xf32>
    %93 = vector.multi_reduction <add>, %88, %cst_40 [1] : vector<64x32xf32> to vector<64xf32>
    %94 = vector.shape_cast %93 : vector<64xf32> to vector<64x1xf32>
    %cst_41 = arith.constant 3.200000e+01 : f32
    %95 = vector.broadcast %cst_41 : f32 to vector<64x1xf32>
    %96 = arith.divf %94, %95 : vector<64x1xf32>
    %97 = vector.broadcast %96 : vector<64x1xf32> to vector<64x32xf32>
    %98 = arith.subf %88, %97 : vector<64x32xf32>
    %99 = arith.mulf %98, %98 : vector<64x32xf32>
    %cst_42 = arith.constant dense<0.000000e+00> : vector<64xf32>
    %100 = vector.multi_reduction <add>, %99, %cst_42 [1] : vector<64x32xf32> to vector<64xf32>
    %101 = vector.shape_cast %100 : vector<64xf32> to vector<64x1xf32>
    %cst_43 = arith.constant 3.200000e+01 : f32
    %102 = vector.broadcast %cst_43 : f32 to vector<64x1xf32>
    %103 = arith.divf %101, %102 : vector<64x1xf32>
    %104 = vector.broadcast %96 : vector<64x1xf32> to vector<64x32xf32>
    %105 = arith.subf %88, %104 : vector<64x32xf32>
    %cst_44 = arith.constant 9.99999974E-6 : f32
    %106 = vector.broadcast %cst_44 : f32 to vector<64x1xf32>
    %107 = arith.addf %103, %106 : vector<64x1xf32>
    %108 = math.rsqrt %107 : vector<64x1xf32>
    %109 = vector.broadcast %108 : vector<64x1xf32> to vector<64x32xf32>
    %110 = arith.mulf %105, %109 : vector<64x32xf32>
    %111 = vector.broadcast %90 : vector<1x32xf32> to vector<64x32xf32>
    %112 = arith.mulf %110, %111 : vector<64x32xf32>
    %113 = vector.broadcast %92 : vector<1x32xf32> to vector<64x32xf32>
    %114 = arith.addf %112, %113 : vector<64x32xf32>
    %115 = arith.truncf %114 : vector<64x32xf32> to vector<64x32xbf16>
    %c0_45 = arith.constant 0 : index
    %c0_46 = arith.constant 0 : index
    %c0_47 = arith.constant 0 : index
    %116 = vector.load %arg12[%c0_45, %c0_46, %c0_47] : memref<1x32x64xbf16, #tpu.memory_space<vmem>>, vector<1x32x64xbf16>
    %117 = vector.shape_cast %116 : vector<1x32x64xbf16> to vector<32x64xbf16>
    %cst_48 = arith.constant dense<0.000000e+00> : vector<64x64xf32>
    %118 = tpu.matmul %115, %117, %cst_48 {dimension_numbers = #tpu.dot_dimension_numbers<[1], [0], [0], [1], [0, 0, 1, 1], [], []>} : vector<64x32xbf16>, vector<32x64xbf16>, vector<64x64xf32> -> vector<64x64xf32>
    %c0_49 = arith.constant 0 : index
    %c0_50 = arith.constant 0 : index
    %c0_51 = arith.constant 0 : index
    %119 = vector.load %arg13[%c0_49, %c0_50, %c0_51] : memref<1x1x64xf32, #tpu.memory_space<vmem>>, vector<1x1x64xf32>
    %120 = vector.shape_cast %119 : vector<1x1x64xf32> to vector<1x64xf32>
    %121 = vector.broadcast %120 : vector<1x64xf32> to vector<64x64xf32>
    %122 = arith.addf %118, %121 : vector<64x64xf32>
    %cst_52 = arith.constant 0.000000e+00 : f32
    %123 = vector.broadcast %cst_52 : f32 to vector<64x64xf32>
    %124 = arith.maximumf %122, %123 : vector<64x64xf32>
    %125 = arith.truncf %124 : vector<64x64xf32> to vector<64x64xbf16>
    %c0_53 = arith.constant 0 : index
    %c0_54 = arith.constant 0 : index
    %c0_55 = arith.constant 0 : index
    %126 = vector.load %arg14[%c0_53, %c0_54, %c0_55] : memref<1x64x32xbf16, #tpu.memory_space<vmem>>, vector<1x64x32xbf16>
    %127 = vector.shape_cast %126 : vector<1x64x32xbf16> to vector<64x32xbf16>
    %cst_56 = arith.constant dense<0.000000e+00> : vector<64x32xf32>
    %128 = tpu.matmul %125, %127, %cst_56 {dimension_numbers = #tpu.dot_dimension_numbers<[1], [0], [0], [1], [0, 0, 1, 1], [], []>} : vector<64x64xbf16>, vector<64x32xbf16>, vector<64x32xf32> -> vector<64x32xf32>
    %c0_57 = arith.constant 0 : index
    %c0_58 = arith.constant 0 : index
    %c0_59 = arith.constant 0 : index
    %129 = vector.load %arg15[%c0_57, %c0_58, %c0_59] : memref<1x1x32xf32, #tpu.memory_space<vmem>>, vector<1x1x32xf32>
    %130 = vector.shape_cast %129 : vector<1x1x32xf32> to vector<1x32xf32>
    %131 = vector.broadcast %130 : vector<1x32xf32> to vector<64x32xf32>
    %132 = arith.addf %128, %131 : vector<64x32xf32>
    %133 = arith.addf %114, %132 : vector<64x32xf32>
    %c0_60 = arith.constant 0 : index
    %c0_61 = arith.constant 0 : index
    %c0_62 = arith.constant 0 : index
    %134 = vector.load %arg16[%c0_60, %c0_61, %c0_62] : memref<1x1x32xf32, #tpu.memory_space<vmem>>, vector<1x1x32xf32>
    %135 = vector.shape_cast %134 : vector<1x1x32xf32> to vector<1x32xf32>
    %c0_63 = arith.constant 0 : index
    %c0_64 = arith.constant 0 : index
    %c0_65 = arith.constant 0 : index
    %136 = vector.load %arg17[%c0_63, %c0_64, %c0_65] : memref<1x1x32xf32, #tpu.memory_space<vmem>>, vector<1x1x32xf32>
    %137 = vector.shape_cast %136 : vector<1x1x32xf32> to vector<1x32xf32>
    %cst_66 = arith.constant dense<0.000000e+00> : vector<64xf32>
    %138 = vector.multi_reduction <add>, %133, %cst_66 [1] : vector<64x32xf32> to vector<64xf32>
    %139 = vector.shape_cast %138 : vector<64xf32> to vector<64x1xf32>
    %cst_67 = arith.constant 3.200000e+01 : f32
    %140 = vector.broadcast %cst_67 : f32 to vector<64x1xf32>
    %141 = arith.divf %139, %140 : vector<64x1xf32>
    %142 = vector.broadcast %141 : vector<64x1xf32> to vector<64x32xf32>
    %143 = arith.subf %133, %142 : vector<64x32xf32>
    %144 = arith.mulf %143, %143 : vector<64x32xf32>
    %cst_68 = arith.constant dense<0.000000e+00> : vector<64xf32>
    %145 = vector.multi_reduction <add>, %144, %cst_68 [1] : vector<64x32xf32> to vector<64xf32>
    %146 = vector.shape_cast %145 : vector<64xf32> to vector<64x1xf32>
    %cst_69 = arith.constant 3.200000e+01 : f32
    %147 = vector.broadcast %cst_69 : f32 to vector<64x1xf32>
    %148 = arith.divf %146, %147 : vector<64x1xf32>
    %149 = vector.broadcast %141 : vector<64x1xf32> to vector<64x32xf32>
    %150 = arith.subf %133, %149 : vector<64x32xf32>
    %cst_70 = arith.constant 9.99999974E-6 : f32
    %151 = vector.broadcast %cst_70 : f32 to vector<64x1xf32>
    %152 = arith.addf %148, %151 : vector<64x1xf32>
    %153 = math.rsqrt %152 : vector<64x1xf32>
    %154 = vector.broadcast %153 : vector<64x1xf32> to vector<64x32xf32>
    %155 = arith.mulf %150, %154 : vector<64x32xf32>
    %156 = vector.broadcast %135 : vector<1x32xf32> to vector<64x32xf32>
    %157 = arith.mulf %155, %156 : vector<64x32xf32>
    %158 = vector.broadcast %137 : vector<1x32xf32> to vector<64x32xf32>
    %159 = arith.addf %157, %158 : vector<64x32xf32>
    %c0_71 = arith.constant 0 : index
    %c0_72 = arith.constant 0 : index
    %160 = vector.load %arg21[%c0_71, %c0_72] : memref<64x32xf32, #tpu.memory_space<vmem>>, vector<64x32xf32>
    tpu.vector_store %arg21[%c0_71, %c0_72], %159 {strides = array<i32>} : memref<64x32xf32, #tpu.memory_space<vmem>>, vector<64x32xf32>,
    %c1_i32 = arith.constant 1 : i32
    %161 = arith.cmpi eq, %arg1, %c1_i32 : i32
    %162 = arith.extui %161 : i1 to i32
    %c0_i32_73 = arith.constant 0 : i32
    %163 = arith.cmpi ne, %162, %c0_i32_73 : i32
    scf.if %163 {
      %c0_74 = arith.constant 0 : index
      %c0_75 = arith.constant 0 : index
      %164 = vector.load %arg18[%c0_74, %c0_75] : memref<1x32xf32, #tpu.memory_space<vmem>>, vector<1x32xf32>
      %c0_76 = arith.constant 0 : index
      %c0_77 = arith.constant 0 : index
      %165 = vector.load %arg19[%c0_76, %c0_77] : memref<1x32xf32, #tpu.memory_space<vmem>>, vector<1x32xf32>
      %cst_78 = arith.constant dense<0.000000e+00> : vector<64xf32>
      %166 = vector.multi_reduction <add>, %159, %cst_78 [1] : vector<64x32xf32> to vector<64xf32>
      %167 = vector.shape_cast %166 : vector<64xf32> to vector<64x1xf32>
      %cst_79 = arith.constant 3.200000e+01 : f32
      %168 = vector.broadcast %cst_79 : f32 to vector<64x1xf32>
      %169 = arith.divf %167, %168 : vector<64x1xf32>
      %170 = vector.broadcast %169 : vector<64x1xf32> to vector<64x32xf32>
      %171 = arith.subf %159, %170 : vector<64x32xf32>
      %172 = arith.mulf %171, %171 : vector<64x32xf32>
      %cst_80 = arith.constant dense<0.000000e+00> : vector<64xf32>
      %173 = vector.multi_reduction <add>, %172, %cst_80 [1] : vector<64x32xf32> to vector<64xf32>
      %174 = vector.shape_cast %173 : vector<64xf32> to vector<64x1xf32>
      %cst_81 = arith.constant 3.200000e+01 : f32
      %175 = vector.broadcast %cst_81 : f32 to vector<64x1xf32>
      %176 = arith.divf %174, %175 : vector<64x1xf32>
      %177 = vector.broadcast %169 : vector<64x1xf32> to vector<64x32xf32>
      %178 = arith.subf %159, %177 : vector<64x32xf32>
      %cst_82 = arith.constant 9.99999974E-6 : f32
      %179 = vector.broadcast %cst_82 : f32 to vector<64x1xf32>
      %180 = arith.addf %176, %179 : vector<64x1xf32>
      %181 = math.rsqrt %180 : vector<64x1xf32>
      %182 = vector.broadcast %181 : vector<64x1xf32> to vector<64x32xf32>
      %183 = arith.mulf %178, %182 : vector<64x32xf32>
      %184 = vector.broadcast %164 : vector<1x32xf32> to vector<64x32xf32>
      %185 = arith.mulf %183, %184 : vector<64x32xf32>
      %186 = vector.broadcast %165 : vector<1x32xf32> to vector<64x32xf32>
      %187 = arith.addf %185, %186 : vector<64x32xf32>
      %c0_83 = arith.constant 0 : index
      %c0_84 = arith.constant 0 : index
      %c0_85 = arith.constant 0 : index
      %188 = vector.load %arg20[%c0_83, %c0_84, %c0_85] : memref<1x64x32xf32, #tpu.memory_space<vmem>>, vector<1x64x32xf32>
      %189 = vector.shape_cast %188 : vector<1x64x32xf32> to vector<64x32xf32>
      %190 = vector.shape_cast %187 : vector<64x32xf32> to vector<1x64x32xf32>
      tpu.vector_store %arg20[%c0_83, %c0_84, %c0_85], %190 {strides = array<i32>} : memref<1x64x32xf32, #tpu.memory_space<vmem>>, vector<1x64x32xf32>,
    } else {
    }
    return
  }
  func.func @transform_0(%arg0: i32, %arg1: i32) -> (i32, i32, i32) {
    %c0_i32 = arith.constant 0 : i32
    %c0_i32_0 = arith.constant 0 : i32
    %c0_i32_1 = arith.constant 0 : i32
    return %arg0, %c0_i32, %c0_i32_0 : i32, i32, i32
  }
  func.func @transform_1(%arg0: i32, %arg1: i32) -> (i32, i32, i32) {
    %c0_i32 = arith.constant 0 : i32
    %c0_i32_0 = arith.constant 0 : i32
    %c0_i32_1 = arith.constant 0 : i32
    return %arg0, %c0_i32, %c0_i32_0 : i32, i32, i32
  }
  func.func @transform_2(%arg0: i32, %arg1: i32) -> (i32, i32, i32) {
    %c0_i32 = arith.constant 0 : i32
    %c0_i32_0 = arith.constant 0 : i32
    %c0_i32_1 = arith.constant 0 : i32
    return %arg1, %c0_i32, %c0_i32_0 : i32, i32, i32
  }
  func.func @transform_3(%arg0: i32, %arg1: i32) -> (i32, i32, i32) {
    %c0_i32 = arith.constant 0 : i32
    %c0_i32_0 = arith.constant 0 : i32
    %c0_i32_1 = arith.constant 0 : i32
    return %arg1, %c0_i32, %c0_i32_0 : i32, i32, i32
  }
  func.func @transform_4(%arg0: i32, %arg1: i32) -> (i32, i32, i32) {
    %c0_i32 = arith.constant 0 : i32
    %c0_i32_0 = arith.constant 0 : i32
    %c0_i32_1 = arith.constant 0 : i32
    return %arg1, %c0_i32, %c0_i32_0 : i32, i32, i32
  }
  func.func @transform_5(%arg0: i32, %arg1: i32) -> (i32, i32, i32) {
    %c0_i32 = arith.constant 0 : i32
    %c0_i32_0 = arith.constant 0 : i32
    %c0_i32_1 = arith.constant 0 : i32
    return %arg1, %c0_i32, %c0_i32_0 : i32, i32, i32
  }
  func.func @transform_6(%arg0: i32, %arg1: i32) -> (i32, i32, i32, i32) {
    %c0_i32 = arith.constant 0 : i32
    %c0_i32_0 = arith.constant 0 : i32
    %c0_i32_1 = arith.constant 0 : i32
    %c0_i32_2 = arith.constant 0 : i32
    return %arg1, %c0_i32, %c0_i32_0, %c0_i32_1 : i32, i32, i32, i32
  }
  func.func @transform_7(%arg0: i32, %arg1: i32) -> (i32, i32, i32) {
    %c0_i32 = arith.constant 0 : i32
    %c0_i32_0 = arith.constant 0 : i32
    %c0_i32_1 = arith.constant 0 : i32
    return %arg1, %c0_i32, %c0_i32_0 : i32, i32, i32
  }
  func.func @transform_8(%arg0: i32, %arg1: i32) -> (i32, i32, i32) {
    %c0_i32 = arith.constant 0 : i32
    %c0_i32_0 = arith.constant 0 : i32
    %c0_i32_1 = arith.constant 0 : i32
    return %arg1, %c0_i32, %c0_i32_0 : i32, i32, i32
  }
  func.func @transform_9(%arg0: i32, %arg1: i32) -> (i32, i32, i32) {
    %c0_i32 = arith.constant 0 : i32
    %c0_i32_0 = arith.constant 0 : i32
    %c0_i32_1 = arith.constant 0 : i32
    return %arg1, %c0_i32, %c0_i32_0 : i32, i32, i32
  }
  func.func @transform_10(%arg0: i32, %arg1: i32) -> (i32, i32, i32) {
    %c0_i32 = arith.constant 0 : i32
    %c0_i32_0 = arith.constant 0 : i32
    %c0_i32_1 = arith.constant 0 : i32
    return %arg1, %c0_i32, %c0_i32_0 : i32, i32, i32
  }
  func.func @transform_11(%arg0: i32, %arg1: i32) -> (i32, i32, i32) {
    %c0_i32 = arith.constant 0 : i32
    %c0_i32_0 = arith.constant 0 : i32
    %c0_i32_1 = arith.constant 0 : i32
    return %arg1, %c0_i32, %c0_i32_0 : i32, i32, i32
  }
  func.func @transform_12(%arg0: i32, %arg1: i32) -> (i32, i32, i32) {
    %c0_i32 = arith.constant 0 : i32
    %c0_i32_0 = arith.constant 0 : i32
    %c0_i32_1 = arith.constant 0 : i32
    return %arg1, %c0_i32, %c0_i32_0 : i32, i32, i32
  }
  func.func @transform_13(%arg0: i32, %arg1: i32) -> (i32, i32, i32) {
    %c0_i32 = arith.constant 0 : i32
    %c0_i32_0 = arith.constant 0 : i32
    %c0_i32_1 = arith.constant 0 : i32
    return %arg1, %c0_i32, %c0_i32_0 : i32, i32, i32
  }
  func.func @transform_14(%arg0: i32, %arg1: i32) -> (i32, i32, i32) {
    %c0_i32 = arith.constant 0 : i32
    %c0_i32_0 = arith.constant 0 : i32
    %c0_i32_1 = arith.constant 0 : i32
    return %arg1, %c0_i32, %c0_i32_0 : i32, i32, i32
  }
  func.func @transform_15(%arg0: i32, %arg1: i32) -> (i32, i32, i32) {
    %c0_i32 = arith.constant 0 : i32
    %c0_i32_0 = arith.constant 0 : i32
    %c0_i32_1 = arith.constant 0 : i32
    return %arg1, %c0_i32, %c0_i32_0 : i32, i32, i32
  }
  func.func @transform_16(%arg0: i32, %arg1: i32) -> (i32, i32) {
    %c0_i32 = arith.constant 0 : i32
    %c0_i32_0 = arith.constant 0 : i32
    %c0_i32_1 = arith.constant 0 : i32
    return %c0_i32, %c0_i32_0 : i32, i32
  }
  func.func @transform_17(%arg0: i32, %arg1: i32) -> (i32, i32) {
    %c0_i32 = arith.constant 0 : i32
    %c0_i32_0 = arith.constant 0 : i32
    %c0_i32_1 = arith.constant 0 : i32
    return %c0_i32, %c0_i32_0 : i32, i32
  }
  func.func @transform_18(%arg0: i32, %arg1: i32) -> (i32, i32, i32) {
    %c0_i32 = arith.constant 0 : i32
    %c0_i32_0 = arith.constant 0 : i32
    %c0_i32_1 = arith.constant 0 : i32
    return %arg0, %c0_i32, %c0_i32_0 : i32, i32, i32
  }
}

</mosaic_0001>

<llo_original>
// kernel: tpu_custom_call.1
$region0: #{tpu_custom_call.1}
  #allocation0 [shape = 'u32[]', space=smem, size = 0x4, offset = 0x4, fixed_abs, tag = 'smem constant byte address 0x4 - core index']
  #allocation1 [shape = 'u32[72,128]{1,0:T(1,128)}', space=vmem, size = 0x9000, scoped, tag = 'internal scratch']
  #allocation2 [shape = 'f32[64,32]{1,0:T(8,128)}', space=vmem, size = 0x8000, scoped, tag = 'scratch operand']
  %s0 = inlined_call_operand.vmem [shape: f32[2,64,32], index: 0, kind: input, shape index: {}]
  %s1 = inlined_call_operand.vmem [shape: f32[2,64,32], index: 1, kind: input, shape index: {}]
  %s2 = inlined_call_operand.vmem [shape: bf16[2,32,64], index: 2, kind: input, shape index: {}]
  %s3 = inlined_call_operand.vmem [shape: f32[2,1,64], index: 3, kind: input, shape index: {}]
  %s4 = inlined_call_operand.vmem [shape: bf16[2,32,32], index: 4, kind: input, shape index: {}]
  %s5 = inlined_call_operand.vmem [shape: f32[2,1,32], index: 5, kind: input, shape index: {}]
  %s6 = inlined_call_operand.vmem [shape: bf16[2,4,8,32], index: 6, kind: input, shape index: {}]
  %s7 = inlined_call_operand.vmem [shape: f32[2,1,32], index: 7, kind: input, shape index: {}]
  %s8 = inlined_call_operand.vmem [shape: f32[2,1,32], index: 8, kind: input, shape index: {}]
  %s9 = inlined_call_operand.vmem [shape: f32[2,1,32], index: 9, kind: input, shape index: {}]
  %s10 = inlined_call_operand.vmem [shape: bf16[2,32,64], index: 10, kind: input, shape index: {}]
  %s11 = inlined_call_operand.vmem [shape: f32[2,1,64], index: 11, kind: input, shape index: {}]
  %s12 = inlined_call_operand.vmem [shape: bf16[2,64,32], index: 12, kind: input, shape index: {}]
  %s13 = inlined_call_operand.vmem [shape: f32[2,1,32], index: 13, kind: input, shape index: {}]
  %s14 = inlined_call_operand.vmem [shape: f32[2,1,32], index: 14, kind: input, shape index: {}]
  %s15 = inlined_call_operand.vmem [shape: f32[2,1,32], index: 15, kind: input, shape index: {}]
  %s16 = inlined_call_operand.vmem [shape: f32[1,32], index: 16, kind: input, shape index: {}]
  %s17 = inlined_call_operand.vmem [shape: f32[1,32], index: 17, kind: input, shape index: {}]
  %s18 = inlined_call_operand.vmem [shape: f32[2,64,32], index: 18, kind: output, shape index: {}]
  %s19 = sld [smem:[#allocation0]]
  $region113: #{tpu_custom_call.1} parent=0
    _
  %s21 = ssub.s32 1, %s19
  %s22 = scalar_select 0, %s21, %s19
  loop: start=0, step=1, limit=6
  $region2: #{tpu_custom_call.1} parent=0 // loop_pre_header
    _
  $region3: #{tpu_custom_call.1} parent=0 // loop_header
    %s24 = sphi 0, %s28
    %p25 = scmp.ge.s32.totalorder %s24, 6
    %s31 = sphi 0, %s43
    %s32 = sphi 0, %s39
    %s33 = sphi 0, %s31
    %s34 = sphi 0, %s32
    %s35 = sphi 0, %s33
    %s36 = sphi 0, %s34
    %s46 = sphi 0, %s48
    %s49 = sphi 0, %s46
    %s50 = sphi 0, %s49
    %s66 = sphi 0, %s50
    %s72 = sphi 0, %s74
    %s75 = sphi 0, %s72
    %s76 = sphi 0, %s75
    %s92 = sphi 0, %s76
    %s98 = sphi 0, %s100
    %s101 = sphi 0, %s98
    %s102 = sphi 0, %s101
    %s118 = sphi 0, %s102
    %s124 = sphi 0, %s126
    %s127 = sphi 0, %s124
    %s128 = sphi 0, %s127
    %s144 = sphi 0, %s128
    %s150 = sphi 0, %s152
    %s153 = sphi 0, %s150
    %s154 = sphi 0, %s153
    %s170 = sphi 0, %s154
    %s176 = sphi 0, %s178
    %s179 = sphi 0, %s176
    %s180 = sphi 0, %s179
    %s196 = sphi 0, %s180
    %s202 = sphi 0, %s204
    %s205 = sphi 0, %s202
    %s206 = sphi 0, %s205
    %s222 = sphi 0, %s206
    %s228 = sphi 0, %s230
    %s231 = sphi 0, %s228
    %s232 = sphi 0, %s231
    %s248 = sphi 0, %s232
    %s254 = sphi 0, %s256
    %s257 = sphi 0, %s254
    %s258 = sphi 0, %s257
    %s274 = sphi 0, %s258
    %s280 = sphi 0, %s282
    %s283 = sphi 0, %s280
    %s284 = sphi 0, %s283
    %s300 = sphi 0, %s284
    %s306 = sphi 0, %s308
    %s309 = sphi 0, %s306
    %s310 = sphi 0, %s309
    %s326 = sphi 0, %s310
    %s332 = sphi 0, %s334
    %s335 = sphi 0, %s332
    %s336 = sphi 0, %s335
    %s352 = sphi 0, %s336
    %s358 = sphi 0, %s360
    %s361 = sphi 0, %s358
    %s362 = sphi 0, %s361
    %s378 = sphi 0, %s362
    %s384 = sphi 0, %s386
    %s387 = sphi 0, %s384
    %s388 = sphi 0, %s387
    %s404 = sphi 0, %s388
    %s410 = sphi 0, %s412
    %s413 = sphi 0, %s410
    %s414 = sphi 0, %s413
    %s430 = sphi 0, %s414
    %s436 = sphi 0, %s438
    %s439 = sphi 0, %s436
    %s440 = sphi 0, %s439
    %s456 = sphi 0, %s440
    %s460 = sphi 0, %s460
    %s462 = sphi 0, %s460
    %s463 = sphi 0, %s462
    %s477 = sphi 0, %s463
    %s481 = sphi 0, %s481
    %s483 = sphi 0, %s481
    %s484 = sphi 0, %s483
    %s498 = sphi 0, %s484
    %s504 = sphi 0, %s506
    %s507 = sphi 0, %s504
    %s508 = sphi 0, %s507
    %s524 = sphi 0, %s508
  $region4: #{tpu_custom_call.1} parent=0 // loop_header_branch
    %27 = sbr.rel (%p25) target = $region8
  $region5: #{tpu_custom_call.1} parent=0 // loop_body
    %s29 = ssub.s32 %s24, 1
    %s30 = ssub.s32 %s24, 2
    %s37 = sadd.s32 1, %s32
    %p38 = scmp.ge.s32.totalorder %s37, 2
    %s39 = scalar_select %p38, 0, %s37
    %s40 = sadd.s32 1, %s31
    %s41 = scalar_select %p38, %s40, %s31
    %p42 = scmp.ge.s32.totalorder %s41, 2
    %s43 = scalar_select %p42, 0, %s41
    %s44 = ssub.s32 %s31, %s43
    %p45 = scmp.eq.s32.totalorder %s44, 0
    %s47 = sadd.s32 %s46, 1
    %s48 = scalar_select %p45, %s46, %s47
    %p51 = pneg %p45
    %p52 = scmp.eq.s32.totalorder %s24, 3
    %p53 = por %p51, %p52
    %p54 = scmp.ne.s32.totalorder %s46, %s49
    %p55 = scmp.eq.s32.totalorder %s24, 0
    %p56 = por %p54, %p55
    %p57 = scmp.ne.s32.totalorder %s46, %s49
    %p58 = scmp.eq.s32.totalorder %s29, 3
    %p59 = por %p57, %p58
    %p60 = scmp.ne.s32.totalorder %s49, %s50
    %p61 = scmp.eq.s32.totalorder %s29, 0
    %p62 = por %p60, %p61
    %p63 = scmp.ne.s32.totalorder %s49, %s50
    %p64 = scmp.eq.s32.totalorder %s30, 3
    %p65 = por %p63, %p64
    %p67 = scmp.ne.s32.totalorder %s50, %s66
    %p68 = scmp.eq.s32.totalorder %s30, 0
    %p69 = por %p67, %p68
    %s70 = ssub.s32 %s31, %s43
    %p71 = scmp.eq.s32.totalorder %s70, 0
    %s73 = sadd.s32 %s72, 1
    %s74 = scalar_select %p71, %s72, %s73
    %p77 = pneg %p71
    %p78 = scmp.eq.s32.totalorder %s24, 3
    %p79 = por %p77, %p78
    %p80 = scmp.ne.s32.totalorder %s72, %s75
    %p81 = scmp.eq.s32.totalorder %s24, 0
    %p82 = por %p80, %p81
    %p83 = scmp.ne.s32.totalorder %s72, %s75
    %p84 = scmp.eq.s32.totalorder %s29, 3
    %p85 = por %p83, %p84
    %p86 = scmp.ne.s32.totalorder %s75, %s76
    %p87 = scmp.eq.s32.totalorder %s29, 0
    %p88 = por %p86, %p87
    %p89 = scmp.ne.s32.totalorder %s75, %s76
    %p90 = scmp.eq.s32.totalorder %s30, 3
    %p91 = por %p89, %p90
    %p93 = scmp.ne.s32.totalorder %s76, %s92
    %p94 = scmp.eq.s32.totalorder %s30, 0
    %p95 = por %p93, %p94
    %s96 = ssub.s32 %s32, %s39
    %p97 = scmp.eq.s32.totalorder %s96, 0
    %s99 = sadd.s32 %s98, 1
    %s100 = scalar_select %p97, %s98, %s99
    %p103 = pneg %p97
    %p104 = scmp.eq.s32.totalorder %s24, 3
    %p105 = por %p103, %p104
    %p106 = scmp.ne.s32.totalorder %s98, %s101
    %p107 = scmp.eq.s32.totalorder %s24, 0
    %p108 = por %p106, %p107
    %p109 = scmp.ne.s32.totalorder %s98, %s101
    %p110 = scmp.eq.s32.totalorder %s29, 3
    %p111 = por %p109, %p110
    %p112 = scmp.ne.s32.totalorder %s101, %s102
    %p113 = scmp.eq.s32.totalorder %s29, 0
    %p114 = por %p112, %p113
    %p115 = scmp.ne.s32.totalorder %s101, %s102
    %p116 = scmp.eq.s32.totalorder %s30, 3
    %p117 = por %p115, %p116
    %p119 = scmp.ne.s32.totalorder %s102, %s118
    %p120 = scmp.eq.s32.totalorder %s30, 0
    %p121 = por %p119, %p120
    %s122 = ssub.s32 %s32, %s39
    %p123 = scmp.eq.s32.totalorder %s122, 0
    %s125 = sadd.s32 %s124, 1
    %s126 = scalar_select %p123, %s124, %s125
    %p129 = pneg %p123
    %p130 = scmp.eq.s32.totalorder %s24, 3
    %p131 = por %p129, %p130
    %p132 = scmp.ne.s32.totalorder %s124, %s127
    %p133 = scmp.eq.s32.totalorder %s24, 0
    %p134 = por %p132, %p133
    %p135 = scmp.ne.s32.totalorder %s124, %s127
    %p136 = scmp.eq.s32.totalorder %s29, 3
    %p137 = por %p135, %p136
    %p138 = scmp.ne.s32.totalorder %s127, %s128
    %p139 = scmp.eq.s32.totalorder %s29, 0
    %p140 = por %p138, %p139
    %p141 = scmp.ne.s32.totalorder %s127, %s128
    %p142 = scmp.eq.s32.totalorder %s30, 3
    %p143 = por %p141, %p142
    %p145 = scmp.ne.s32.totalorder %s128, %s144
    %p146 = scmp.eq.s32.totalorder %s30, 0
    %p147 = por %p145, %p146
    %s148 = ssub.s32 %s32, %s39
    %p149 = scmp.eq.s32.totalorder %s148, 0
    %s151 = sadd.s32 %s150, 1
    %s152 = scalar_select %p149, %s150, %s151
    %p155 = pneg %p149
    %p156 = scmp.eq.s32.totalorder %s24, 3
    %p157 = por %p155, %p156
    %p158 = scmp.ne.s32.totalorder %s150, %s153
    %p159 = scmp.eq.s32.totalorder %s24, 0
    %p160 = por %p158, %p159
    %p161 = scmp.ne.s32.totalorder %s150, %s153
    %p162 = scmp.eq.s32.totalorder %s29, 3
    %p163 = por %p161, %p162
    %p164 = scmp.ne.s32.totalorder %s153, %s154
    %p165 = scmp.eq.s32.totalorder %s29, 0
    %p166 = por %p164, %p165
    %p167 = scmp.ne.s32.totalorder %s153, %s154
    %p168 = scmp.eq.s32.totalorder %s30, 3
    %p169 = por %p167, %p168
    %p171 = scmp.ne.s32.totalorder %s154, %s170
    %p172 = scmp.eq.s32.totalorder %s30, 0
    %p173 = por %p171, %p172
    %s174 = ssub.s32 %s32, %s39
    %p175 = scmp.eq.s32.totalorder %s174, 0
    %s177 = sadd.s32 %s176, 1
    %s178 = scalar_select %p175, %s176, %s177
    %p181 = pneg %p175
    %p182 = scmp.eq.s32.totalorder %s24, 3
    %p183 = por %p181, %p182
    %p184 = scmp.ne.s32.totalorder %s176, %s179
    %p185 = scmp.eq.s32.totalorder %s24, 0
    %p186 = por %p184, %p185
    %p187 = scmp.ne.s32.totalorder %s176, %s179
    %p188 = scmp.eq.s32.totalorder %s29, 3
    %p189 = por %p187, %p188
    %p190 = scmp.ne.s32.totalorder %s179, %s180
    %p191 = scmp.eq.s32.totalorder %s29, 0
    %p192 = por %p190, %p191
    %p193 = scmp.ne.s32.totalorder %s179, %s180
    %p194 = scmp.eq.s32.totalorder %s30, 3
    %p195 = por %p193, %p194
    %p197 = scmp.ne.s32.totalorder %s180, %s196
    %p198 = scmp.eq.s32.totalorder %s30, 0
    %p199 = por %p197, %p198
    %s200 = ssub.s32 %s32, %s39
    %p201 = scmp.eq.s32.totalorder %s200, 0
    %s203 = sadd.s32 %s202, 1
    %s204 = scalar_select %p201, %s202, %s203
    %p207 = pneg %p201
    %p208 = scmp.eq.s32.totalorder %s24, 3
    %p209 = por %p207, %p208
    %p210 = scmp.ne.s32.totalorder %s202, %s205
    %p211 = scmp.eq.s32.totalorder %s24, 0
    %p212 = por %p210, %p211
    %p213 = scmp.ne.s32.totalorder %s202, %s205
    %p214 = scmp.eq.s32.totalorder %s29, 3
    %p215 = por %p213, %p214
    %p216 = scmp.ne.s32.totalorder %s205, %s206
    %p217 = scmp.eq.s32.totalorder %s29, 0
    %p218 = por %p216, %p217
    %p219 = scmp.ne.s32.totalorder %s205, %s206
    %p220 = scmp.eq.s32.totalorder %s30, 3
    %p221 = por %p219, %p220
    %p223 = scmp.ne.s32.totalorder %s206, %s222
    %p224 = scmp.eq.s32.totalorder %s30, 0
    %p225 = por %p223, %p224
    %s226 = ssub.s32 %s32, %s39
    %p227 = scmp.eq.s32.totalorder %s226, 0
    %s229 = sadd.s32 %s228, 1
    %s230 = scalar_select %p227, %s228, %s229
    %p233 = pneg %p227
    %p234 = scmp.eq.s32.totalorder %s24, 3
    %p235 = por %p233, %p234
    %p236 = scmp.ne.s32.totalorder %s228, %s231
    %p237 = scmp.eq.s32.totalorder %s24, 0
    %p238 = por %p236, %p237
    %p239 = scmp.ne.s32.totalorder %s228, %s231
    %p240 = scmp.eq.s32.totalorder %s29, 3
    %p241 = por %p239, %p240
    %p242 = scmp.ne.s32.totalorder %s231, %s232
    %p243 = scmp.eq.s32.totalorder %s29, 0
    %p244 = por %p242, %p243
    %p245 = scmp.ne.s32.totalorder %s231, %s232
    %p246 = scmp.eq.s32.totalorder %s30, 3
    %p247 = por %p245, %p246
    %p249 = scmp.ne.s32.totalorder %s232, %s248
    %p250 = scmp.eq.s32.totalorder %s30, 0
    %p251 = por %p249, %p250
    %s252 = ssub.s32 %s32, %s39
    %p253 = scmp.eq.s32.totalorder %s252, 0
    %s255 = sadd.s32 %s254, 1
    %s256 = scalar_select %p253, %s254, %s255
    %p259 = pneg %p253
    %p260 = scmp.eq.s32.totalorder %s24, 3
    %p261 = por %p259, %p260
    %p262 = scmp.ne.s32.totalorder %s254, %s257
    %p263 = scmp.eq.s32.totalorder %s24, 0
    %p264 = por %p262, %p263
    %p265 = scmp.ne.s32.totalorder %s254, %s257
    %p266 = scmp.eq.s32.totalorder %s29, 3
    %p267 = por %p265, %p266
    %p268 = scmp.ne.s32.totalorder %s257, %s258
    %p269 = scmp.eq.s32.totalorder %s29, 0
    %p270 = por %p268, %p269
    %p271 = scmp.ne.s32.totalorder %s257, %s258
    %p272 = scmp.eq.s32.totalorder %s30, 3
    %p273 = por %p271, %p272
    %p275 = scmp.ne.s32.totalorder %s258, %s274
    %p276 = scmp.eq.s32.totalorder %s30, 0
    %p277 = por %p275, %p276
    %s278 = ssub.s32 %s32, %s39
    %p279 = scmp.eq.s32.totalorder %s278, 0
    %s281 = sadd.s32 %s280, 1
    %s282 = scalar_select %p279, %s280, %s281
    %p285 = pneg %p279
    %p286 = scmp.eq.s32.totalorder %s24, 3
    %p287 = por %p285, %p286
    %p288 = scmp.ne.s32.totalorder %s280, %s283
    %p289 = scmp.eq.s32.totalorder %s24, 0
    %p290 = por %p288, %p289
    %p291 = scmp.ne.s32.totalorder %s280, %s283
    %p292 = scmp.eq.s32.totalorder %s29, 3
    %p293 = por %p291, %p292
    %p294 = scmp.ne.s32.totalorder %s283, %s284
    %p295 = scmp.eq.s32.totalorder %s29, 0
    %p296 = por %p294, %p295
    %p297 = scmp.ne.s32.totalorder %s283, %s284
    %p298 = scmp.eq.s32.totalorder %s30, 3
    %p299 = por %p297, %p298
    %p301 = scmp.ne.s32.totalorder %s284, %s300
    %p302 = scmp.eq.s32.totalorder %s30, 0
    %p303 = por %p301, %p302
    %s304 = ssub.s32 %s32, %s39
    %p305 = scmp.eq.s32.totalorder %s304, 0
    %s307 = sadd.s32 %s306, 1
    %s308 = scalar_select %p305, %s306, %s307
    %p311 = pneg %p305
    %p312 = scmp.eq.s32.totalorder %s24, 3
    %p313 = por %p311, %p312
    %p314 = scmp.ne.s32.totalorder %s306, %s309
    %p315 = scmp.eq.s32.totalorder %s24, 0
    %p316 = por %p314, %p315
    %p317 = scmp.ne.s32.totalorder %s306, %s309
    %p318 = scmp.eq.s32.totalorder %s29, 3
    %p319 = por %p317, %p318
    %p320 = scmp.ne.s32.totalorder %s309, %s310
    %p321 = scmp.eq.s32.totalorder %s29, 0
    %p322 = por %p320, %p321
    %p323 = scmp.ne.s32.totalorder %s309, %s310
    %p324 = scmp.eq.s32.totalorder %s30, 3
    %p325 = por %p323, %p324
    %p327 = scmp.ne.s32.totalorder %s310, %s326
    %p328 = scmp.eq.s32.totalorder %s30, 0
    %p329 = por %p327, %p328
    %s330 = ssub.s32 %s32, %s39
    %p331 = scmp.eq.s32.totalorder %s330, 0
    %s333 = sadd.s32 %s332, 1
    %s334 = scalar_select %p331, %s332, %s333
    %p337 = pneg %p331
    %p338 = scmp.eq.s32.totalorder %s24, 3
    %p339 = por %p337, %p338
    %p340 = scmp.ne.s32.totalorder %s332, %s335
    %p341 = scmp.eq.s32.totalorder %s24, 0
    %p342 = por %p340, %p341
    %p343 = scmp.ne.s32.totalorder %s332, %s335
    %p344 = scmp.eq.s32.totalorder %s29, 3
    %p345 = por %p343, %p344
    %p346 = scmp.ne.s32.totalorder %s335, %s336
    %p347 = scmp.eq.s32.totalorder %s29, 0
    %p348 = por %p346, %p347
    %p349 = scmp.ne.s32.totalorder %s335, %s336
    %p350 = scmp.eq.s32.totalorder %s30, 3
    %p351 = por %p349, %p350
    %p353 = scmp.ne.s32.totalorder %s336, %s352
    %p354 = scmp.eq.s32.totalorder %s30, 0
    %p355 = por %p353, %p354
    %s356 = ssub.s32 %s32, %s39
    %p357 = scmp.eq.s32.totalorder %s356, 0
    %s359 = sadd.s32 %s358, 1
    %s360 = scalar_select %p357, %s358, %s359
    %p363 = pneg %p357
    %p364 = scmp.eq.s32.totalorder %s24, 3
    %p365 = por %p363, %p364
    %p366 = scmp.ne.s32.totalorder %s358, %s361
    %p367 = scmp.eq.s32.totalorder %s24, 0
    %p368 = por %p366, %p367
    %p369 = scmp.ne.s32.totalorder %s358, %s361
    %p370 = scmp.eq.s32.totalorder %s29, 3
    %p371 = por %p369, %p370
    %p372 = scmp.ne.s32.totalorder %s361, %s362
    %p373 = scmp.eq.s32.totalorder %s29, 0
    %p374 = por %p372, %p373
    %p375 = scmp.ne.s32.totalorder %s361, %s362
    %p376 = scmp.eq.s32.totalorder %s30, 3
    %p377 = por %p375, %p376
    %p379 = scmp.ne.s32.totalorder %s362, %s378
    %p380 = scmp.eq.s32.totalorder %s30, 0
    %p381 = por %p379, %p380
    %s382 = ssub.s32 %s32, %s39
    %p383 = scmp.eq.s32.totalorder %s382, 0
    %s385 = sadd.s32 %s384, 1
    %s386 = scalar_select %p383, %s384, %s385
    %p389 = pneg %p383
    %p390 = scmp.eq.s32.totalorder %s24, 3
    %p391 = por %p389, %p390
    %p392 = scmp.ne.s32.totalorder %s384, %s387
    %p393 = scmp.eq.s32.totalorder %s24, 0
    %p394 = por %p392, %p393
    %p395 = scmp.ne.s32.totalorder %s384, %s387
    %p396 = scmp.eq.s32.totalorder %s29, 3
    %p397 = por %p395, %p396
    %p398 = scmp.ne.s32.totalorder %s387, %s388
    %p399 = scmp.eq.s32.totalorder %s29, 0
    %p400 = por %p398, %p399
    %p401 = scmp.ne.s32.totalorder %s387, %s388
    %p402 = scmp.eq.s32.totalorder %s30, 3
    %p403 = por %p401, %p402
    %p405 = scmp.ne.s32.totalorder %s388, %s404
    %p406 = scmp.eq.s32.totalorder %s30, 0
    %p407 = por %p405, %p406
    %s408 = ssub.s32 %s32, %s39
    %p409 = scmp.eq.s32.totalorder %s408, 0
    %s411 = sadd.s32 %s410, 1
    %s412 = scalar_select %p409, %s410, %s411
    %p415 = pneg %p409
    %p416 = scmp.eq.s32.totalorder %s24, 3
    %p417 = por %p415, %p416
    %p418 = scmp.ne.s32.totalorder %s410, %s413
    %p419 = scmp.eq.s32.totalorder %s24, 0
    %p420 = por %p418, %p419
    %p421 = scmp.ne.s32.totalorder %s410, %s413
    %p422 = scmp.eq.s32.totalorder %s29, 3
    %p423 = por %p421, %p422
    %p424 = scmp.ne.s32.totalorder %s413, %s414
    %p425 = scmp.eq.s32.totalorder %s29, 0
    %p426 = por %p424, %p425
    %p427 = scmp.ne.s32.totalorder %s413, %s414
    %p428 = scmp.eq.s32.totalorder %s30, 3
    %p429 = por %p427, %p428
    %p431 = scmp.ne.s32.totalorder %s414, %s430
    %p432 = scmp.eq.s32.totalorder %s30, 0
    %p433 = por %p431, %p432
    %s434 = ssub.s32 %s32, %s39
    %p435 = scmp.eq.s32.totalorder %s434, 0
    %s437 = sadd.s32 %s436, 1
    %s438 = scalar_select %p435, %s436, %s437
    %p441 = pneg %p435
    %p442 = scmp.eq.s32.totalorder %s24, 3
    %p443 = por %p441, %p442
    %p444 = scmp.ne.s32.totalorder %s436, %s439
    %p445 = scmp.eq.s32.totalorder %s24, 0
    %p446 = por %p444, %p445
    %p447 = scmp.ne.s32.totalorder %s436, %s439
    %p448 = scmp.eq.s32.totalorder %s29, 3
    %p449 = por %p447, %p448
    %p450 = scmp.ne.s32.totalorder %s439, %s440
    %p451 = scmp.eq.s32.totalorder %s29, 0
    %p452 = por %p450, %p451
    %p453 = scmp.ne.s32.totalorder %s439, %s440
    %p454 = scmp.eq.s32.totalorder %s30, 3
    %p455 = por %p453, %p454
    %p457 = scmp.ne.s32.totalorder %s440, %s456
    %p458 = scmp.eq.s32.totalorder %s30, 0
    %p459 = por %p457, %p458
    %s461 = sadd.s32 %s460, 1
    %p464 = scmp.eq.s32.totalorder %s24, 3
    %p465 = scmp.ne.s32.totalorder %s460, %s462
    %p466 = scmp.eq.s32.totalorder %s24, 0
    %p467 = por %p465, %p466
    %p468 = scmp.ne.s32.totalorder %s460, %s462
    %p469 = scmp.eq.s32.totalorder %s29, 3
    %p470 = por %p468, %p469
    %p471 = scmp.ne.s32.totalorder %s462, %s463
    %p472 = scmp.eq.s32.totalorder %s29, 0
    %p473 = por %p471, %p472
    %p474 = scmp.ne.s32.totalorder %s462, %s463
    %p475 = scmp.eq.s32.totalorder %s30, 3
    %p476 = por %p474, %p475
    %p478 = scmp.ne.s32.totalorder %s463, %s477
    %p479 = scmp.eq.s32.totalorder %s30, 0
    %p480 = por %p478, %p479
    %s482 = sadd.s32 %s481, 1
    %p485 = scmp.eq.s32.totalorder %s24, 3
    %p486 = scmp.ne.s32.totalorder %s481, %s483
    %p487 = scmp.eq.s32.totalorder %s24, 0
    %p488 = por %p486, %p487
    %p489 = scmp.ne.s32.totalorder %s481, %s483
    %p490 = scmp.eq.s32.totalorder %s29, 3
    %p491 = por %p489, %p490
    %p492 = scmp.ne.s32.totalorder %s483, %s484
    %p493 = scmp.eq.s32.totalorder %s29, 0
    %p494 = por %p492, %p493
    %p495 = scmp.ne.s32.totalorder %s483, %s484
    %p496 = scmp.eq.s32.totalorder %s30, 3
    %p497 = por %p495, %p496
    %p499 = scmp.ne.s32.totalorder %s484, %s498
    %p500 = scmp.eq.s32.totalorder %s30, 0
    %p501 = por %p499, %p500
    %s502 = ssub.s32 %s31, %s43
    %p503 = scmp.eq.s32.totalorder %s502, 0
    %s505 = sadd.s32 %s504, 1
    %s506 = scalar_select %p503, %s504, %s505
    %p509 = pneg %p503
    %p510 = scmp.eq.s32.totalorder %s24, 3
    %p511 = por %p509, %p510
    %p512 = scmp.ne.s32.totalorder %s504, %s507
    %p513 = scmp.eq.s32.totalorder %s24, 0
    %p514 = por %p512, %p513
    %p515 = scmp.ne.s32.totalorder %s504, %s507
    %p516 = scmp.eq.s32.totalorder %s29, 3
    %p517 = por %p515, %p516
    %p518 = scmp.ne.s32.totalorder %s507, %s508
    %p519 = scmp.eq.s32.totalorder %s29, 0
    %p520 = por %p518, %p519
    %p521 = scmp.ne.s32.totalorder %s507, %s508
    %p522 = scmp.eq.s32.totalorder %s30, 3
    %p523 = por %p521, %p522
    %p525 = scmp.ne.s32.totalorder %s508, %s524
    %p526 = scmp.eq.s32.totalorder %s30, 0
    %p527 = por %p525, %p526
    %p528 = scmp.le.s32.totalorder 1, %s24
    %p529 = scmp.lt.s32.totalorder %s24, 5
    %p530 = pnand %p528, %p529
    %p531 = pneg %p530
    // Predicated region
    $region9: #{tpu_custom_call.1} parent=5 // pred_check
      _
    $region10: #{tpu_custom_call.1} parent=5 // pred_check_branch
      %533 = sbr.rel (%p530) target = $region12
    $region11: #{tpu_custom_call.1} parent=5 // pred_region
      %s534 = ssub.s32 %s24, 1
      // Predicated region
      $region13: #{tpu_custom_call.1} parent=11 // pred_check
        %p535 = pneg %p473
      $region14: #{tpu_custom_call.1} parent=11 // pred_check_branch
        %537 = sbr.rel (%p535) target = $region16
      $region15: #{tpu_custom_call.1} parent=11 // pred_region
        _
      $region16: #{tpu_custom_call.1} parent=11 // pred_fallthru
        _
      // Predicated region
      $region17: #{tpu_custom_call.1} parent=11 // pred_check
        %p538 = pneg %p494
      $region18: #{tpu_custom_call.1} parent=11 // pred_check_branch
        %540 = sbr.rel (%p538) target = $region20
      $region19: #{tpu_custom_call.1} parent=11 // pred_region
        _
      $region20: #{tpu_custom_call.1} parent=11 // pred_fallthru
        _
    $region12: #{tpu_custom_call.1} parent=5 // pred_fallthru
      _
    %p541 = scmp.lt.s32.totalorder %s24, 4
    // Predicated region
    $region21: #{tpu_custom_call.1} parent=5 // pred_check
      %p542 = pneg %p541
    $region22: #{tpu_custom_call.1} parent=5 // pred_check_branch
      %544 = sbr.rel (%p542) target = $region24
    $region23: #{tpu_custom_call.1} parent=5 // pred_region
      // Predicated region
      $region25: #{tpu_custom_call.1} parent=23 // pred_check
        %p545 = pneg %p56
      $region26: #{tpu_custom_call.1} parent=23 // pred_check_branch
        %547 = sbr.rel (%p545) target = $region28
      $region27: #{tpu_custom_call.1} parent=23 // pred_region
        %p548 = scmp.lt.s32.totalorder %s31, 1
        %s549 = scalar_select %p548, %s31, 1
        %s550 = smul.addr %s549, 8
        %s551 = smul.addr %s550, 8
        %s552 = scalar_lea.vmem %s0, %s551
      $region28: #{tpu_custom_call.1} parent=23 // pred_fallthru
        _
      // Predicated region
      $region29: #{tpu_custom_call.1} parent=23 // pred_check
        %p553 = pneg %p82
      $region30: #{tpu_custom_call.1} parent=23 // pred_check_branch
        %555 = sbr.rel (%p553) target = $region32
      $region31: #{tpu_custom_call.1} parent=23 // pred_region
        %p556 = scmp.lt.s32.totalorder %s31, 1
        %s557 = scalar_select %p556, %s31, 1
        %s558 = smul.addr %s557, 8
        %s559 = smul.addr %s558, 8
        %s560 = scalar_lea.vmem %s1, %s559
      $region32: #{tpu_custom_call.1} parent=23 // pred_fallthru
        _
      // Predicated region
      $region33: #{tpu_custom_call.1} parent=23 // pred_check
        %p561 = pneg %p108
      $region34: #{tpu_custom_call.1} parent=23 // pred_check_branch
        %563 = sbr.rel (%p561) target = $region36
      $region35: #{tpu_custom_call.1} parent=23 // pred_region
        %p564 = scmp.lt.s32.totalorder %s32, 1
        %s565 = scalar_select %p564, %s32, 1
        %s566 = smul.addr %s565, 4
        %s567 = smul.addr %s566, 4
        %s568 = scalar_lea.vmem %s2, %s567
      $region36: #{tpu_custom_call.1} parent=23 // pred_fallthru
        _
      // Predicated region
      $region37: #{tpu_custom_call.1} parent=23 // pred_check
        %p569 = pneg %p134
      $region38: #{tpu_custom_call.1} parent=23 // pred_check_branch
        %571 = sbr.rel (%p569) target = $region40
      $region39: #{tpu_custom_call.1} parent=23 // pred_region
        %p572 = scmp.lt.s32.totalorder %s32, 1
        %s573 = scalar_select %p572, %s32, 1
        %s574 = scalar_lea.vmem %s3, %s573
      $region40: #{tpu_custom_call.1} parent=23 // pred_fallthru
        _
      // Predicated region
      $region41: #{tpu_custom_call.1} parent=23 // pred_check
        %p575 = pneg %p160
      $region42: #{tpu_custom_call.1} parent=23 // pred_check_branch
        %577 = sbr.rel (%p575) target = $region44
      $region43: #{tpu_custom_call.1} parent=23 // pred_region
        %p578 = scmp.lt.s32.totalorder %s32, 1
        %s579 = scalar_select %p578, %s32, 1
        %s580 = smul.addr %s579, 4
        %s581 = smul.addr %s580, 4
        %s582 = scalar_lea.vmem %s4, %s581
      $region44: #{tpu_custom_call.1} parent=23 // pred_fallthru
        _
      // Predicated region
      $region45: #{tpu_custom_call.1} parent=23 // pred_check
        %p583 = pneg %p186
      $region46: #{tpu_custom_call.1} parent=23 // pred_check_branch
        %585 = sbr.rel (%p583) target = $region48
      $region47: #{tpu_custom_call.1} parent=23 // pred_region
        %p586 = scmp.lt.s32.totalorder %s32, 1
        %s587 = scalar_select %p586, %s32, 1
        %s588 = scalar_lea.vmem %s5, %s587
      $region48: #{tpu_custom_call.1} parent=23 // pred_fallthru
        _
      // Predicated region
      $region49: #{tpu_custom_call.1} parent=23 // pred_check
        %p589 = pneg %p212
      $region50: #{tpu_custom_call.1} parent=23 // pred_check_branch
        %591 = sbr.rel (%p589) target = $region52
      $region51: #{tpu_custom_call.1} parent=23 // pred_region
        %p592 = scmp.lt.s32.totalorder %s32, 1
        %s593 = scalar_select %p592, %s32, 1
        %s594 = smul.addr %s593, 4
        %s595 = smul.addr %s594, 4
        %s596 = scalar_lea.vmem %s6, %s595
      $region52: #{tpu_custom_call.1} parent=23 // pred_fallthru
        _
      // Predicated region
      $region53: #{tpu_custom_call.1} parent=23 // pred_check
        %p597 = pneg %p238
      $region54: #{tpu_custom_call.1} parent=23 // pred_check_branch
        %599 = sbr.rel (%p597) target = $region56
      $region55: #{tpu_custom_call.1} parent=23 // pred_region
        %p600 = scmp.lt.s32.totalorder %s32, 1
        %s601 = scalar_select %p600, %s32, 1
        %s602 = scalar_lea.vmem %s7, %s601
      $region56: #{tpu_custom_call.1} parent=23 // pred_fallthru
        _
      // Predicated region
      $region57: #{tpu_custom_call.1} parent=23 // pred_check
        %p603 = pneg %p264
      $region58: #{tpu_custom_call.1} parent=23 // pred_check_branch
        %605 = sbr.rel (%p603) target = $region60
      $region59: #{tpu_custom_call.1} parent=23 // pred_region
        %p606 = scmp.lt.s32.totalorder %s32, 1
        %s607 = scalar_select %p606, %s32, 1
        %s608 = scalar_lea.vmem %s8, %s607
      $region60: #{tpu_custom_call.1} parent=23 // pred_fallthru
        _
      // Predicated region
      $region61: #{tpu_custom_call.1} parent=23 // pred_check
        %p609 = pneg %p290
      $region62: #{tpu_custom_call.1} parent=23 // pred_check_branch
        %611 = sbr.rel (%p609) target = $region64
      $region63: #{tpu_custom_call.1} parent=23 // pred_region
        %p612 = scmp.lt.s32.totalorder %s32, 1
        %s613 = scalar_select %p612, %s32, 1
        %s614 = scalar_lea.vmem %s9, %s613
      $region64: #{tpu_custom_call.1} parent=23 // pred_fallthru
        _
      // Predicated region
      $region65: #{tpu_custom_call.1} parent=23 // pred_check
        %p615 = pneg %p316
      $region66: #{tpu_custom_call.1} parent=23 // pred_check_branch
        %617 = sbr.rel (%p615) target = $region68
      $region67: #{tpu_custom_call.1} parent=23 // pred_region
        %p618 = scmp.lt.s32.totalorder %s32, 1
        %s619 = scalar_select %p618, %s32, 1
        %s620 = smul.addr %s619, 4
        %s621 = smul.addr %s620, 4
        %s622 = scalar_lea.vmem %s10, %s621
      $region68: #{tpu_custom_call.1} parent=23 // pred_fallthru
        _
      // Predicated region
      $region69: #{tpu_custom_call.1} parent=23 // pred_check
        %p623 = pneg %p342
      $region70: #{tpu_custom_call.1} parent=23 // pred_check_branch
        %625 = sbr.rel (%p623) target = $region72
      $region71: #{tpu_custom_call.1} parent=23 // pred_region
        %p626 = scmp.lt.s32.totalorder %s32, 1
        %s627 = scalar_select %p626, %s32, 1
        %s628 = scalar_lea.vmem %s11, %s627
      $region72: #{tpu_custom_call.1} parent=23 // pred_fallthru
        _
      // Predicated region
      $region73: #{tpu_custom_call.1} parent=23 // pred_check
        %p629 = pneg %p368
      $region74: #{tpu_custom_call.1} parent=23 // pred_check_branch
        %631 = sbr.rel (%p629) target = $region76
      $region75: #{tpu_custom_call.1} parent=23 // pred_region
        %p632 = scmp.lt.s32.totalorder %s32, 1
        %s633 = scalar_select %p632, %s32, 1
        %s634 = smul.addr %s633, 8
        %s635 = smul.addr %s634, 4
        %s636 = scalar_lea.vmem %s12, %s635
      $region76: #{tpu_custom_call.1} parent=23 // pred_fallthru
        _
      // Predicated region
      $region77: #{tpu_custom_call.1} parent=23 // pred_check
        %p637 = pneg %p394
      $region78: #{tpu_custom_call.1} parent=23 // pred_check_branch
        %639 = sbr.rel (%p637) target = $region80
      $region79: #{tpu_custom_call.1} parent=23 // pred_region
        %p640 = scmp.lt.s32.totalorder %s32, 1
        %s641 = scalar_select %p640, %s32, 1
        %s642 = scalar_lea.vmem %s13, %s641
      $region80: #{tpu_custom_call.1} parent=23 // pred_fallthru
        _
      // Predicated region
      $region81: #{tpu_custom_call.1} parent=23 // pred_check
        %p643 = pneg %p420
      $region82: #{tpu_custom_call.1} parent=23 // pred_check_branch
        %645 = sbr.rel (%p643) target = $region84
      $region83: #{tpu_custom_call.1} parent=23 // pred_region
        %p646 = scmp.lt.s32.totalorder %s32, 1
        %s647 = scalar_select %p646, %s32, 1
        %s648 = scalar_lea.vmem %s14, %s647
      $region84: #{tpu_custom_call.1} parent=23 // pred_fallthru
        _
      // Predicated region
      $region85: #{tpu_custom_call.1} parent=23 // pred_check
        %p649 = pneg %p446
      $region86: #{tpu_custom_call.1} parent=23 // pred_check_branch
        %651 = sbr.rel (%p649) target = $region88
      $region87: #{tpu_custom_call.1} parent=23 // pred_region
        %p652 = scmp.lt.s32.totalorder %s32, 1
        %s653 = scalar_select %p652, %s32, 1
        %s654 = scalar_lea.vmem %s15, %s653
      $region88: #{tpu_custom_call.1} parent=23 // pred_fallthru
        _
    $region24: #{tpu_custom_call.1} parent=5 // pred_fallthru
      _
    %p655 = scmp.le.s32.totalorder 1, %s24
    %p656 = scmp.lt.s32.totalorder %s24, 5
    %p657 = pnand %p655, %p656
    %p658 = pneg %p657
    // Predicated region
    $region89: #{tpu_custom_call.1} parent=5 // pred_check
      _
    $region90: #{tpu_custom_call.1} parent=5 // pred_check_branch
      %660 = sbr.rel (%p657) target = $region92
    $region91: #{tpu_custom_call.1} parent=5 // pred_region
      %s661 = ssub.s32 %s24, 1
      %p662 = scmp.lt.s32.totalorder %s33, 1
      %s663 = scalar_select %p662, %s33, 1
      %s664 = smul.addr %s663, 8
      %s665 = smul.addr %s664, 8
      %s666 = scalar_lea.vmem %s0, %s665
      %p667 = pneg %p62
      %p668 = pneg %p59
      %p669 = scmp.lt.s32.totalorder %s33, 1
      %s670 = scalar_select %p669, %s33, 1
      %s671 = smul.addr %s670, 8
      %s672 = smul.addr %s671, 8
      %s673 = scalar_lea.vmem %s1, %s672
      %p674 = pneg %p88
      %p675 = pneg %p85
      %p676 = scmp.lt.s32.totalorder %s34, 1
      %s677 = scalar_select %p676, %s34, 1
      %s678 = smul.addr %s677, 4
      %s679 = smul.addr %s678, 4
      %s680 = scalar_lea.vmem %s2, %s679
      %p681 = pneg %p114
      %p682 = pneg %p111
      %p683 = scmp.lt.s32.totalorder %s34, 1
      %s684 = scalar_select %p683, %s34, 1
      %s685 = scalar_lea.vmem %s3, %s684
      %p686 = pneg %p140
      %p687 = pneg %p137
      %p688 = scmp.lt.s32.totalorder %s34, 1
      %s689 = scalar_select %p688, %s34, 1
      %s690 = smul.addr %s689, 4
      %s691 = smul.addr %s690, 4
      %s692 = scalar_lea.vmem %s4, %s691
      %p693 = pneg %p166
      %p694 = pneg %p163
      %p695 = scmp.lt.s32.totalorder %s34, 1
      %s696 = scalar_select %p695, %s34, 1
      %s697 = scalar_lea.vmem %s5, %s696
      %p698 = pneg %p192
      %p699 = pneg %p189
      %p700 = scmp.lt.s32.totalorder %s34, 1
      %s701 = scalar_select %p700, %s34, 1
      %s702 = smul.addr %s701, 4
      %s703 = smul.addr %s702, 4
      %s704 = scalar_lea.vmem %s6, %s703
      %p705 = pneg %p218
      %p706 = pneg %p215
      %p707 = scmp.lt.s32.totalorder %s34, 1
      %s708 = scalar_select %p707, %s34, 1
      %s709 = scalar_lea.vmem %s7, %s708
      %p710 = pneg %p244
      %p711 = pneg %p241
      %p712 = scmp.lt.s32.totalorder %s34, 1
      %s713 = scalar_select %p712, %s34, 1
      %s714 = scalar_lea.vmem %s8, %s713
      %p715 = pneg %p270
      %p716 = pneg %p267
      %p717 = scmp.lt.s32.totalorder %s34, 1
      %s718 = scalar_select %p717, %s34, 1
      %s719 = scalar_lea.vmem %s9, %s718
      %p720 = pneg %p296
      %p721 = pneg %p293
      %p722 = scmp.lt.s32.totalorder %s34, 1
      %s723 = scalar_select %p722, %s34, 1
      %s724 = smul.addr %s723, 4
      %s725 = smul.addr %s724, 4
      %s726 = scalar_lea.vmem %s10, %s725
      %p727 = pneg %p322
      %p728 = pneg %p319
      %p729 = scmp.lt.s32.totalorder %s34, 1
      %s730 = scalar_select %p729, %s34, 1
      %s731 = scalar_lea.vmem %s11, %s730
      %p732 = pneg %p348
      %p733 = pneg %p345
      %p734 = scmp.lt.s32.totalorder %s34, 1
      %s735 = scalar_select %p734, %s34, 1
      %s736 = smul.addr %s735, 8
      %s737 = smul.addr %s736, 4
      %s738 = scalar_lea.vmem %s12, %s737
      %p739 = pneg %p374
      %p740 = pneg %p371
      %p741 = scmp.lt.s32.totalorder %s34, 1
      %s742 = scalar_select %p741, %s34, 1
      %s743 = scalar_lea.vmem %s13, %s742
      %p744 = pneg %p400
      %p745 = pneg %p397
      %p746 = scmp.lt.s32.totalorder %s34, 1
      %s747 = scalar_select %p746, %s34, 1
      %s748 = scalar_lea.vmem %s14, %s747
      %p749 = pneg %p426
      %p750 = pneg %p423
      %p751 = scmp.lt.s32.totalorder %s34, 1
      %s752 = scalar_select %p751, %s34, 1
      %s753 = scalar_lea.vmem %s15, %s752
      %p754 = pneg %p452
      %p755 = pneg %p449
      %p756 = pneg %p473
      %p757 = pneg %p470
      %p758 = pneg %p494
      %p759 = pneg %p491
      %p760 = pneg %p520
      %p761 = pneg %p517
      %p762 = scmp.lt.s32.totalorder %s33, 1
      %s763 = scalar_select %p762, %s33, 1
      %s764 = smul.addr %s763, 8
      %s765 = smul.addr %s764, 8
      %s766 = scalar_lea.vmem %s18, %s765
      %p767 = scmp.lt.s32.totalorder %s33, 1
      %s768 = scalar_select %p767, %s33, 1
      %s769 = smul.addr %s768, 8
      %s770 = smul.addr %s769, 8
      %s771 = scalar_lea.vmem %s0, %s770
      %p772 = scmp.lt.s32.totalorder %s33, 1
      %s773 = scalar_select %p772, %s33, 1
      %s774 = smul.addr %s773, 8
      %s775 = smul.addr %s774, 8
      %s776 = scalar_lea.vmem %s1, %s775
      %p777 = scmp.lt.s32.totalorder %s34, 1
      %s778 = scalar_select %p777, %s34, 1
      %s779 = smul.addr %s778, 4
      %s780 = smul.addr %s779, 4
      %s781 = scalar_lea.vmem %s2, %s780
      %p782 = scmp.lt.s32.totalorder %s34, 1
      %s783 = scalar_select %p782, %s34, 1
      %s784 = scalar_lea.vmem %s3, %s783
      %p785 = scmp.lt.s32.totalorder %s34, 1
      %s786 = scalar_select %p785, %s34, 1
      %s787 = smul.addr %s786, 4
      %s788 = smul.addr %s787, 4
      %s789 = scalar_lea.vmem %s4, %s788
      %p790 = scmp.lt.s32.totalorder %s34, 1
      %s791 = scalar_select %p790, %s34, 1
      %s792 = scalar_lea.vmem %s5, %s791
      %p793 = scmp.lt.s32.totalorder %s34, 1
      %s794 = scalar_select %p793, %s34, 1
      %s795 = smul.addr %s794, 4
      %s796 = smul.addr %s795, 4
      %s797 = scalar_lea.vmem %s6, %s796
      %p798 = scmp.lt.s32.totalorder %s34, 1
      %s799 = scalar_select %p798, %s34, 1
      %s800 = scalar_lea.vmem %s7, %s799
      %p801 = scmp.lt.s32.totalorder %s34, 1
      %s802 = scalar_select %p801, %s34, 1
      %s803 = scalar_lea.vmem %s8, %s802
      %p804 = scmp.lt.s32.totalorder %s34, 1
      %s805 = scalar_select %p804, %s34, 1
      %s806 = scalar_lea.vmem %s9, %s805
      %p807 = scmp.lt.s32.totalorder %s34, 1
      %s808 = scalar_select %p807, %s34, 1
      %s809 = smul.addr %s808, 4
      %s810 = smul.addr %s809, 4
      %s811 = scalar_lea.vmem %s10, %s810
      %p812 = scmp.lt.s32.totalorder %s34, 1
      %s813 = scalar_select %p812, %s34, 1
      %s814 = scalar_lea.vmem %s11, %s813
      %p815 = scmp.lt.s32.totalorder %s34, 1
      %s816 = scalar_select %p815, %s34, 1
      %s817 = smul.addr %s816, 8
      %s818 = smul.addr %s817, 4
      %s819 = scalar_lea.vmem %s12, %s818
      %p820 = scmp.lt.s32.totalorder %s34, 1
      %s821 = scalar_select %p820, %s34, 1
      %s822 = scalar_lea.vmem %s13, %s821
      %p823 = scmp.lt.s32.totalorder %s34, 1
      %s824 = scalar_select %p823, %s34, 1
      %s825 = scalar_lea.vmem %s14, %s824
      %p826 = scmp.lt.s32.totalorder %s34, 1
      %s827 = scalar_select %p826, %s34, 1
      %s828 = scalar_lea.vmem %s15, %s827
      %p829 = scmp.lt.s32.totalorder %s33, 1
      %s830 = scalar_select %p829, %s33, 1
      %s831 = smul.addr %s830, 8
      %s832 = smul.addr %s831, 8
      %s833 = scalar_lea.vmem %s18, %s832
      %p835 = scmp.eq.s32.totalorder %s34, 0
      // Predicated region
      $region93: #{tpu_custom_call.1} parent=91 // pred_check
        %p836 = pneg %p835
      $region94: #{tpu_custom_call.1} parent=91 // pred_check_branch
        %838 = sbr.rel (%p836) target = $region96
      $region95: #{tpu_custom_call.1} parent=91 // pred_region
        %v839 = vld [vmem:[%s771] sm:$0xff]
        %v840 = vld [vmem:[%s771 + $0x8] sm:$0xff]
        %v841 = vld [vmem:[%s771 + $0x10] sm:$0xff]
        %v842 = vld [vmem:[%s771 + $0x18] sm:$0xff]
        %v843 = vld [vmem:[%s771 + $0x20] sm:$0xff]
        %v844 = vld [vmem:[%s771 + $0x28] sm:$0xff]
        %v845 = vld [vmem:[%s771 + $0x30] sm:$0xff]
        %v846 = vld [vmem:[%s771 + $0x38] sm:$0xff]
        %vm847 = vcmask 261120
        %848 = vst.msk [vmem:[#allocation2] sm:$0xff] %vm847, %v839
        %849 = vst.msk [vmem:[#allocation2 + $0x8] sm:$0xff] %vm847, %v840
        %850 = vst.msk [vmem:[#allocation2 + $0x10] sm:$0xff] %vm847, %v841
        %851 = vst.msk [vmem:[#allocation2 + $0x18] sm:$0xff] %vm847, %v842
        %852 = vst.msk [vmem:[#allocation2 + $0x20] sm:$0xff] %vm847, %v843
        %853 = vst.msk [vmem:[#allocation2 + $0x28] sm:$0xff] %vm847, %v844
        %854 = vst.msk [vmem:[#allocation2 + $0x30] sm:$0xff] %vm847, %v845
        %855 = vst.msk [vmem:[#allocation2 + $0x38] sm:$0xff] %vm847, %v846
      $region96: #{tpu_custom_call.1} parent=91 // pred_fallthru
        _
      %v856 = vld [vmem:[#allocation2] sm:$0xff]
      %v857 = vld [vmem:[#allocation2 + $0x8] sm:$0xff]
      %v858 = vld [vmem:[#allocation2 + $0x10] sm:$0xff]
      %v859 = vld [vmem:[#allocation2 + $0x18] sm:$0xff]
      %v860 = vld [vmem:[#allocation2 + $0x20] sm:$0xff]
      %v861 = vld [vmem:[#allocation2 + $0x28] sm:$0xff]
      %v862 = vld [vmem:[#allocation2 + $0x30] sm:$0xff]
      %v863 = vld [vmem:[#allocation2 + $0x38] sm:$0xff]
      %v864 = vld [vmem:[%s776] sm:$0xff]
      %v865 = vld [vmem:[%s776 + $0x8] sm:$0xff]
      %v866 = vld [vmem:[%s776 + $0x10] sm:$0xff]
      %v867 = vld [vmem:[%s776 + $0x18] sm:$0xff]
      %v868 = vld [vmem:[%s776 + $0x20] sm:$0xff]
      %v869 = vld [vmem:[%s776 + $0x28] sm:$0xff]
      %v870 = vld [vmem:[%s776 + $0x30] sm:$0xff]
      %v871 = vld [vmem:[%s776 + $0x38] sm:$0xff]
      %v872 = vadd.f32 %v856, %v864
      %v873 = vadd.f32 %v857, %v865
      %v874 = vadd.f32 %v858, %v866
      %v875 = vadd.f32 %v859, %v867
      %v876 = vadd.f32 %v860, %v868
      %v877 = vadd.f32 %v861, %v869
      %v878 = vadd.f32 %v862, %v870
      %v879 = vadd.f32 %v863, %v871
      %v880 = vpack.c.bf16 %v873, %v872
      %v881 = vpack.c.bf16 %v875, %v874
      %v882 = vpack.c.bf16 %v877, %v876
      %v883 = vpack.c.bf16 %v879, %v878
      %v884 = vld [vmem:[%s781] sm:$0xf]
      %v885 = vld [vmem:[%s781 + $0x4] sm:$0xf]
      %v886 = vld [vmem:[%s781 + $0x8] sm:$0xf]
      %v887 = vld [vmem:[%s781 + $0xc] sm:$0xf]
      %v888 = vld [vmem:[%s784] sm:$0x1]
      %v890 = vperm.slane %v888, 0
      %v896 = vunpack.c.l.b16 %v884
      %v897 = vunpack.c.l.b16 %v885
      %v898 = vunpack.c.l.b16 %v886
      %v899 = vunpack.c.l.b16 %v887
      %v900 = vpack.c.b16 %v897, %v896
      %v901 = vpack.c.b16 %v899, %v898
      %vm904 = vcmask 261120
      %v906 = vsel %vm904, %v880, 0
      %v909 = vsel %vm904, %v881, 0
      %v912 = vsel %vm904, %v882, 0
      %v915 = vsel %vm904, %v883, 0
      %917 = vmatpush.bf16.msra.mxu0 0
      %918 = vmatpush.bf16.msra.mxu0 0
      %919 = vmatpush.bf16.msra.mxu0 0
      %920 = vmatpush.bf16.msra.mxu0 0
      %921 = vmatpush.bf16.msra.mxu0 0
      %922 = vmatpush.bf16.msra.mxu0 0
      %923 = vmatpush.bf16.msra.mxu0 %v901
      %924 = vmatpush.bf16.msra.mxu0 %v900
      %925 = vmatmul.bf16.gmra.mxu0 %v906
      %v926 = vpop.f32.mrf.mxu0
      %v927 = vadd.f32 %v890, %v926
      %v928 = vpop.f32.mrf.mxu0
      %v929 = vadd.f32 %v890, %v928
      %930 = vmatmul.bf16.gmra.mxu0 %v909
      %v931 = vpop.f32.mrf.mxu0
      %v932 = vadd.f32 %v890, %v931
      %v933 = vpop.f32.mrf.mxu0
      %v934 = vadd.f32 %v890, %v933
      %935 = vmatmul.bf16.gmra.mxu0 %v912
      %v936 = vpop.f32.mrf.mxu0
      %v937 = vadd.f32 %v890, %v936
      %v938 = vpop.f32.mrf.mxu0
      %v939 = vadd.f32 %v890, %v938
      %940 = vmatmul.bf16.gmra.mxu0 %v915
      %v941 = vpop.f32.mrf.mxu0
      %v942 = vadd.f32 %v890, %v941
      %v943 = vpop.f32.mrf.mxu0
      %v944 = vadd.f32 %v890, %v943
      %945 = vdwg.mxu0
      %v946 = vpack.c.bf16 %v857, %v856
      %v947 = vpack.c.bf16 %v859, %v858
      %v948 = vpack.c.bf16 %v861, %v860
      %v949 = vpack.c.bf16 %v863, %v862
      %v950 = vld [vmem:[%s789] sm:$0xf]
      %v951 = vld [vmem:[%s789 + $0x4] sm:$0xf]
      %v952 = vld [vmem:[%s789 + $0x8] sm:$0xf]
      %v953 = vld [vmem:[%s789 + $0xc] sm:$0xf]
      %v954 = vld [vmem:[%s792] sm:$0x1]
      %v956 = vperm.slane %v954, 0
      %v962 = vunpack.c.l.b16 %v950
      %v963 = vunpack.c.l.b16 %v951
      %v964 = vunpack.c.l.b16 %v952
      %v965 = vunpack.c.l.b16 %v953
      %v966 = vpack.c.b16 %v963, %v962
      %v967 = vpack.c.b16 %v965, %v964
      %v971 = vsel %vm904, %v946, 0
      %v974 = vsel %vm904, %v947, 0
      %v977 = vsel %vm904, %v948, 0
      %v980 = vsel %vm904, %v949, 0
      %982 = vmatpush.bf16.msra.mxu0 0
      %983 = vmatpush.bf16.msra.mxu0 0
      %984 = vmatpush.bf16.msra.mxu0 0
      %985 = vmatpush.bf16.msra.mxu0 0
      %986 = vmatpush.bf16.msra.mxu0 0
      %987 = vmatpush.bf16.msra.mxu0 0
      %988 = vmatpush.bf16.msra.mxu0 %v967
      %989 = vmatpush.bf16.msra.mxu0 %v966
      %990 = vmatmul.bf16.gmra.mxu0 %v971
      %v991 = vpop.f32.mrf.mxu0
      %v992 = vadd.f32 %v956, %v991
      %v993 = vpop.f32.mrf.mxu0
      %v994 = vadd.f32 %v956, %v993
      %995 = vmatmul.bf16.gmra.mxu0 %v974
      %v996 = vpop.f32.mrf.mxu0
      %v997 = vadd.f32 %v956, %v996
      %v998 = vpop.f32.mrf.mxu0
      %v999 = vadd.f32 %v956, %v998
      %1000 = vmatmul.bf16.gmra.mxu0 %v977
      %v1001 = vpop.f32.mrf.mxu0
      %v1002 = vadd.f32 %v956, %v1001
      %v1003 = vpop.f32.mrf.mxu0
      %v1004 = vadd.f32 %v956, %v1003
      %1005 = vmatmul.bf16.gmra.mxu0 %v980
      %v1006 = vpop.f32.mrf.mxu0
      %v1007 = vadd.f32 %v956, %v1006
      %v1008 = vpop.f32.mrf.mxu0
      %v1009 = vadd.f32 %v956, %v1008
      %1010 = vdwg.mxu0
      %1019 = vrot.lane.b32.xlu0 %v927, 120
      %v1020 = vpop.permute.xlu0 %1019
      %1021 = vrot.lane.b32.xlu0 %v929, 120
      %v1022 = vpop.permute.xlu0 %1021
      %1023 = vrot.lane.b32.xlu0 %v932, 120
      %v1024 = vpop.permute.xlu0 %1023
      %1025 = vrot.lane.b32.xlu0 %v934, 120
      %v1026 = vpop.permute.xlu0 %1025
      %1027 = vrot.lane.b32.xlu0 %v937, 120
      %v1028 = vpop.permute.xlu0 %1027
      %1029 = vrot.lane.b32.xlu0 %v939, 120
      %v1030 = vpop.permute.xlu0 %1029
      %1031 = vrot.lane.b32.xlu0 %v942, 120
      %v1032 = vpop.permute.xlu0 %1031
      %1033 = vrot.lane.b32.xlu0 %v944, 120
      %v1034 = vpop.permute.xlu0 %1033
      %1043 = vrot.lane.b32.xlu0 %v927, 112
      %v1044 = vpop.permute.xlu0 %1043
      %1045 = vrot.lane.b32.xlu0 %v929, 112
      %v1046 = vpop.permute.xlu0 %1045
      %1047 = vrot.lane.b32.xlu0 %v932, 112
      %v1048 = vpop.permute.xlu0 %1047
      %1049 = vrot.lane.b32.xlu0 %v934, 112
      %v1050 = vpop.permute.xlu0 %1049
      %1051 = vrot.lane.b32.xlu0 %v937, 112
      %v1052 = vpop.permute.xlu0 %1051
      %1053 = vrot.lane.b32.xlu0 %v939, 112
      %v1054 = vpop.permute.xlu0 %1053
      %1055 = vrot.lane.b32.xlu0 %v942, 112
      %v1056 = vpop.permute.xlu0 %1055
      %1057 = vrot.lane.b32.xlu0 %v944, 112
      %v1058 = vpop.permute.xlu0 %1057
      %1067 = vrot.lane.b32.xlu0 %v927, 104
      %v1068 = vpop.permute.xlu0 %1067
      %1069 = vrot.lane.b32.xlu0 %v929, 104
      %v1070 = vpop.permute.xlu0 %1069
      %1071 = vrot.lane.b32.xlu0 %v932, 104
      %v1072 = vpop.permute.xlu0 %1071
      %1073 = vrot.lane.b32.xlu0 %v934, 104
      %v1074 = vpop.permute.xlu0 %1073
      %1075 = vrot.lane.b32.xlu0 %v937, 104
      %v1076 = vpop.permute.xlu0 %1075
      %1077 = vrot.lane.b32.xlu0 %v939, 104
      %v1078 = vpop.permute.xlu0 %1077
      %1079 = vrot.lane.b32.xlu0 %v942, 104
      %v1080 = vpop.permute.xlu0 %1079
      %1081 = vrot.lane.b32.xlu0 %v944, 104
      %v1082 = vpop.permute.xlu0 %1081
      %v1091 = vpack.c.bf16 %v927, %v927
      %v1092 = vpack.c.bf16 %v929, %v929
      %v1093 = vpack.c.bf16 %v932, %v932
      %v1094 = vpack.c.bf16 %v934, %v934
      %v1095 = vpack.c.bf16 %v937, %v937
      %v1096 = vpack.c.bf16 %v939, %v939
      %v1097 = vpack.c.bf16 %v942, %v942
      %v1098 = vpack.c.bf16 %v944, %v944
      %v1099 = vpack.c.bf16 %v1020, %v1020
      %v1100 = vpack.c.bf16 %v1022, %v1022
      %v1101 = vpack.c.bf16 %v1024, %v1024
      %v1102 = vpack.c.bf16 %v1026, %v1026
      %v1103 = vpack.c.bf16 %v1028, %v1028
      %v1104 = vpack.c.bf16 %v1030, %v1030
      %v1105 = vpack.c.bf16 %v1032, %v1032
      %v1106 = vpack.c.bf16 %v1034, %v1034
      %v1107 = vpack.c.bf16 %v1044, %v1044
      %v1108 = vpack.c.bf16 %v1046, %v1046
      %v1109 = vpack.c.bf16 %v1048, %v1048
      %v1110 = vpack.c.bf16 %v1050, %v1050
      %v1111 = vpack.c.bf16 %v1052, %v1052
      %v1112 = vpack.c.bf16 %v1054, %v1054
      %v1113 = vpack.c.bf16 %v1056, %v1056
      %v1114 = vpack.c.bf16 %v1058, %v1058
      %v1115 = vpack.c.bf16 %v1068, %v1068
      %v1116 = vpack.c.bf16 %v1070, %v1070
      %v1117 = vpack.c.bf16 %v1072, %v1072
      %v1118 = vpack.c.bf16 %v1074, %v1074
      %v1119 = vpack.c.bf16 %v1076, %v1076
      %v1120 = vpack.c.bf16 %v1078, %v1078
      %v1121 = vpack.c.bf16 %v1080, %v1080
      %v1122 = vpack.c.bf16 %v1082, %v1082
      %1131 = vrot.lane.b32.xlu0 %v992, 120
      %v1132 = vpop.permute.xlu0 %1131
      %1133 = vrot.lane.b32.xlu0 %v994, 120
      %v1134 = vpop.permute.xlu0 %1133
      %1135 = vrot.lane.b32.xlu0 %v997, 120
      %v1136 = vpop.permute.xlu0 %1135
      %1137 = vrot.lane.b32.xlu0 %v999, 120
      %v1138 = vpop.permute.xlu0 %1137
      %1139 = vrot.lane.b32.xlu0 %v1002, 120
      %v1140 = vpop.permute.xlu0 %1139
      %1141 = vrot.lane.b32.xlu0 %v1004, 120
      %v1142 = vpop.permute.xlu0 %1141
      %1143 = vrot.lane.b32.xlu0 %v1007, 120
      %v1144 = vpop.permute.xlu0 %1143
      %1145 = vrot.lane.b32.xlu0 %v1009, 120
      %v1146 = vpop.permute.xlu0 %1145
      %1155 = vrot.lane.b32.xlu0 %v992, 112
      %v1156 = vpop.permute.xlu0 %1155
      %1157 = vrot.lane.b32.xlu0 %v994, 112
      %v1158 = vpop.permute.xlu0 %1157
      %1159 = vrot.lane.b32.xlu0 %v997, 112
      %v1160 = vpop.permute.xlu0 %1159
      %1161 = vrot.lane.b32.xlu0 %v999, 112
      %v1162 = vpop.permute.xlu0 %1161
      %1163 = vrot.lane.b32.xlu0 %v1002, 112
      %v1164 = vpop.permute.xlu0 %1163
      %1165 = vrot.lane.b32.xlu0 %v1004, 112
      %v1166 = vpop.permute.xlu0 %1165
      %1167 = vrot.lane.b32.xlu0 %v1007, 112
      %v1168 = vpop.permute.xlu0 %1167
      %1169 = vrot.lane.b32.xlu0 %v1009, 112
      %v1170 = vpop.permute.xlu0 %1169
      %1179 = vrot.lane.b32.xlu0 %v992, 104
      %v1180 = vpop.permute.xlu0 %1179
      %1181 = vrot.lane.b32.xlu0 %v994, 104
      %v1182 = vpop.permute.xlu0 %1181
      %1183 = vrot.lane.b32.xlu0 %v997, 104
      %v1184 = vpop.permute.xlu0 %1183
      %1185 = vrot.lane.b32.xlu0 %v999, 104
      %v1186 = vpop.permute.xlu0 %1185
      %1187 = vrot.lane.b32.xlu0 %v1002, 104
      %v1188 = vpop.permute.xlu0 %1187
      %1189 = vrot.lane.b32.xlu0 %v1004, 104
      %v1190 = vpop.permute.xlu0 %1189
      %1191 = vrot.lane.b32.xlu0 %v1007, 104
      %v1192 = vpop.permute.xlu0 %1191
      %1193 = vrot.lane.b32.xlu0 %v1009, 104
      %v1194 = vpop.permute.xlu0 %1193
      %v1203 = vpack.c.bf16 %v992, %v992
      %v1204 = vpack.c.bf16 %v994, %v994
      %v1205 = vpack.c.bf16 %v997, %v997
      %v1206 = vpack.c.bf16 %v999, %v999
      %v1207 = vpack.c.bf16 %v1002, %v1002
      %v1208 = vpack.c.bf16 %v1004, %v1004
      %v1209 = vpack.c.bf16 %v1007, %v1007
      %v1210 = vpack.c.bf16 %v1009, %v1009
      %v1211 = vpack.c.bf16 %v1132, %v1132
      %v1212 = vpack.c.bf16 %v1134, %v1134
      %v1213 = vpack.c.bf16 %v1136, %v1136
      %v1214 = vpack.c.bf16 %v1138, %v1138
      %v1215 = vpack.c.bf16 %v1140, %v1140
      %v1216 = vpack.c.bf16 %v1142, %v1142
      %v1217 = vpack.c.bf16 %v1144, %v1144
      %v1218 = vpack.c.bf16 %v1146, %v1146
      %v1219 = vpack.c.bf16 %v1156, %v1156
      %v1220 = vpack.c.bf16 %v1158, %v1158
      %v1221 = vpack.c.bf16 %v1160, %v1160
      %v1222 = vpack.c.bf16 %v1162, %v1162
      %v1223 = vpack.c.bf16 %v1164, %v1164
      %v1224 = vpack.c.bf16 %v1166, %v1166
      %v1225 = vpack.c.bf16 %v1168, %v1168
      %v1226 = vpack.c.bf16 %v1170, %v1170
      %v1227 = vpack.c.bf16 %v1180, %v1180
      %v1228 = vpack.c.bf16 %v1182, %v1182
      %v1229 = vpack.c.bf16 %v1184, %v1184
      %v1230 = vpack.c.bf16 %v1186, %v1186
      %v1231 = vpack.c.bf16 %v1188, %v1188
      %v1232 = vpack.c.bf16 %v1190, %v1190
      %v1233 = vpack.c.bf16 %v1192, %v1192
      %v1234 = vpack.c.bf16 %v1194, %v1194
      %v1243 = vunpack.c.l.b16 %v1091
      %v1244 = vunpack.c.l.b16 %v1092
      %v1245 = vunpack.c.l.b16 %v1093
      %v1246 = vunpack.c.l.b16 %v1094
      %v1247 = vunpack.c.l.b16 %v1095
      %v1248 = vunpack.c.l.b16 %v1096
      %v1249 = vunpack.c.l.b16 %v1097
      %v1250 = vunpack.c.l.b16 %v1098
      %v1251 = vpack.c.b16 %v1244, %v1243
      %v1252 = vpack.c.b16 %v1246, %v1245
      %v1253 = vpack.c.b16 %v1248, %v1247
      %v1254 = vpack.c.b16 %v1250, %v1249
      %1255 = vrot.lane.b32.xlu0 %v1251, 96
      %v1256 = vpop.permute.xlu0 %1255
      %1257 = vrot.lane.b32.xlu0 %v1252, 96
      %v1258 = vpop.permute.xlu0 %1257
      %1259 = vrot.lane.b32.xlu0 %v1253, 96
      %v1260 = vpop.permute.xlu0 %1259
      %1261 = vrot.lane.b32.xlu0 %v1254, 96
      %v1262 = vpop.permute.xlu0 %1261
      %vm1263 = vcmask 64512
      %v1265 = vsel %vm1263, %v1251, 0
      %v1268 = vsel %vm1263, %v1252, 0
      %v1271 = vsel %vm1263, %v1253, 0
      %v1274 = vsel %vm1263, %v1254, 0
      %v1277 = vsel %vm1263, %v1256, 0
      %v1280 = vsel %vm1263, %v1258, 0
      %v1283 = vsel %vm1263, %v1260, 0
      %v1286 = vsel %vm1263, %v1262, 0
      %1288 = vmatpush.bf16.xpose.msra.mxu0 0
      %1289 = vmatpush.bf16.xpose.msra.mxu0 0
      %1290 = vmatpush.bf16.xpose.msra.mxu0 0
      %1291 = vmatpush.bf16.xpose.msra.mxu0 0
      %1292 = vmatpush.bf16.xpose.msra.mxu0 %v1286
      %1293 = vmatpush.bf16.xpose.msra.mxu0 %v1283
      %1294 = vmatpush.bf16.xpose.msra.mxu0 %v1280
      %1295 = vmatpush.bf16.xpose.msra.mxu0 %v1277
      %1296 = vmatmul.bf16.gmra.mxu0 %v1265
      %v1297 = vpop.f32.mrf.mxu0
      %v1298 = vadd.f32 0.0, %v1297
      %v1299 = vpop.f32.mrf.mxu0
      %v1300 = vadd.f32 0.0, %v1299
      %1301 = vmatmul.bf16.gmra.mxu0 %v1268
      %v1302 = vpop.f32.mrf.mxu0
      %v1303 = vadd.f32 0.0, %v1302
      %v1304 = vpop.f32.mrf.mxu0
      %v1305 = vadd.f32 0.0, %v1304
      %1306 = vmatmul.bf16.gmra.mxu0 %v1271
      %v1307 = vpop.f32.mrf.mxu0
      %v1308 = vadd.f32 0.0, %v1307
      %v1309 = vpop.f32.mrf.mxu0
      %v1310 = vadd.f32 0.0, %v1309
      %1311 = vmatmul.bf16.gmra.mxu0 %v1274
      %v1312 = vpop.f32.mrf.mxu0
      %v1313 = vadd.f32 0.0, %v1312
      %v1314 = vpop.f32.mrf.mxu0
      %v1315 = vadd.f32 0.0, %v1314
      %1316 = vdwg.mxu0
      %v1325 = vunpack.c.l.b16 %v1099
      %v1326 = vunpack.c.l.b16 %v1100
      %v1327 = vunpack.c.l.b16 %v1101
      %v1328 = vunpack.c.l.b16 %v1102
      %v1329 = vunpack.c.l.b16 %v1103
      %v1330 = vunpack.c.l.b16 %v1104
      %v1331 = vunpack.c.l.b16 %v1105
      %v1332 = vunpack.c.l.b16 %v1106
      %v1333 = vpack.c.b16 %v1326, %v1325
      %v1334 = vpack.c.b16 %v1328, %v1327
      %v1335 = vpack.c.b16 %v1330, %v1329
      %v1336 = vpack.c.b16 %v1332, %v1331
      %1337 = vrot.lane.b32.xlu0 %v1333, 96
      %v1338 = vpop.permute.xlu0 %1337
      %1339 = vrot.lane.b32.xlu0 %v1334, 96
      %v1340 = vpop.permute.xlu0 %1339
      %1341 = vrot.lane.b32.xlu0 %v1335, 96
      %v1342 = vpop.permute.xlu0 %1341
      %1343 = vrot.lane.b32.xlu0 %v1336, 96
      %v1344 = vpop.permute.xlu0 %1343
      %v1346 = vsel %vm1263, %v1333, 0
      %v1349 = vsel %vm1263, %v1334, 0
      %v1352 = vsel %vm1263, %v1335, 0
      %v1355 = vsel %vm1263, %v1336, 0
      %v1358 = vsel %vm1263, %v1338, 0
      %v1361 = vsel %vm1263, %v1340, 0
      %v1364 = vsel %vm1263, %v1342, 0
      %v1367 = vsel %vm1263, %v1344, 0
      %1369 = vmatpush.bf16.xpose.msra.mxu0 0
      %1370 = vmatpush.bf16.xpose.msra.mxu0 0
      %1371 = vmatpush.bf16.xpose.msra.mxu0 0
      %1372 = vmatpush.bf16.xpose.msra.mxu0 0
      %1373 = vmatpush.bf16.xpose.msra.mxu0 %v1367
      %1374 = vmatpush.bf16.xpose.msra.mxu0 %v1364
      %1375 = vmatpush.bf16.xpose.msra.mxu0 %v1361
      %1376 = vmatpush.bf16.xpose.msra.mxu0 %v1358
      %1377 = vmatmul.bf16.gmra.mxu0 %v1346
      %v1378 = vpop.f32.mrf.mxu0
      %v1379 = vadd.f32 0.0, %v1378
      %v1380 = vpop.f32.mrf.mxu0
      %v1381 = vadd.f32 0.0, %v1380
      %1382 = vmatmul.bf16.gmra.mxu0 %v1349
      %v1383 = vpop.f32.mrf.mxu0
      %v1384 = vadd.f32 0.0, %v1383
      %v1385 = vpop.f32.mrf.mxu0
      %v1386 = vadd.f32 0.0, %v1385
      %1387 = vmatmul.bf16.gmra.mxu0 %v1352
      %v1388 = vpop.f32.mrf.mxu0
      %v1389 = vadd.f32 0.0, %v1388
      %v1390 = vpop.f32.mrf.mxu0
      %v1391 = vadd.f32 0.0, %v1390
      %1392 = vmatmul.bf16.gmra.mxu0 %v1355
      %v1393 = vpop.f32.mrf.mxu0
      %v1394 = vadd.f32 0.0, %v1393
      %v1395 = vpop.f32.mrf.mxu0
      %v1396 = vadd.f32 0.0, %v1395
      %1397 = vdwg.mxu0
      %v1406 = vunpack.c.l.b16 %v1107
      %v1407 = vunpack.c.l.b16 %v1108
      %v1408 = vunpack.c.l.b16 %v1109
      %v1409 = vunpack.c.l.b16 %v1110
      %v1410 = vunpack.c.l.b16 %v1111
      %v1411 = vunpack.c.l.b16 %v1112
      %v1412 = vunpack.c.l.b16 %v1113
      %v1413 = vunpack.c.l.b16 %v1114
      %v1414 = vpack.c.b16 %v1407, %v1406
      %v1415 = vpack.c.b16 %v1409, %v1408
      %v1416 = vpack.c.b16 %v1411, %v1410
      %v1417 = vpack.c.b16 %v1413, %v1412
      %1418 = vrot.lane.b32.xlu0 %v1414, 96
      %v1419 = vpop.permute.xlu0 %1418
      %1420 = vrot.lane.b32.xlu0 %v1415, 96
      %v1421 = vpop.permute.xlu0 %1420
      %1422 = vrot.lane.b32.xlu0 %v1416, 96
      %v1423 = vpop.permute.xlu0 %1422
      %1424 = vrot.lane.b32.xlu0 %v1417, 96
      %v1425 = vpop.permute.xlu0 %1424
      %v1427 = vsel %vm1263, %v1414, 0
      %v1430 = vsel %vm1263, %v1415, 0
      %v1433 = vsel %vm1263, %v1416, 0
      %v1436 = vsel %vm1263, %v1417, 0
      %v1439 = vsel %vm1263, %v1419, 0
      %v1442 = vsel %vm1263, %v1421, 0
      %v1445 = vsel %vm1263, %v1423, 0
      %v1448 = vsel %vm1263, %v1425, 0
      %1450 = vmatpush.bf16.xpose.msra.mxu0 0
      %1451 = vmatpush.bf16.xpose.msra.mxu0 0
      %1452 = vmatpush.bf16.xpose.msra.mxu0 0
      %1453 = vmatpush.bf16.xpose.msra.mxu0 0
      %1454 = vmatpush.bf16.xpose.msra.mxu0 %v1448
      %1455 = vmatpush.bf16.xpose.msra.mxu0 %v1445
      %1456 = vmatpush.bf16.xpose.msra.mxu0 %v1442
      %1457 = vmatpush.bf16.xpose.msra.mxu0 %v1439
      %1458 = vmatmul.bf16.gmra.mxu0 %v1427
      %v1459 = vpop.f32.mrf.mxu0
      %v1460 = vadd.f32 0.0, %v1459
      %v1461 = vpop.f32.mrf.mxu0
      %v1462 = vadd.f32 0.0, %v1461
      %1463 = vmatmul.bf16.gmra.mxu0 %v1430
      %v1464 = vpop.f32.mrf.mxu0
      %v1465 = vadd.f32 0.0, %v1464
      %v1466 = vpop.f32.mrf.mxu0
      %v1467 = vadd.f32 0.0, %v1466
      %1468 = vmatmul.bf16.gmra.mxu0 %v1433
      %v1469 = vpop.f32.mrf.mxu0
      %v1470 = vadd.f32 0.0, %v1469
      %v1471 = vpop.f32.mrf.mxu0
      %v1472 = vadd.f32 0.0, %v1471
      %1473 = vmatmul.bf16.gmra.mxu0 %v1436
      %v1474 = vpop.f32.mrf.mxu0
      %v1475 = vadd.f32 0.0, %v1474
      %v1476 = vpop.f32.mrf.mxu0
      %v1477 = vadd.f32 0.0, %v1476
      %1478 = vdwg.mxu0
      %v1487 = vunpack.c.l.b16 %v1115
      %v1488 = vunpack.c.l.b16 %v1116
      %v1489 = vunpack.c.l.b16 %v1117
      %v1490 = vunpack.c.l.b16 %v1118
      %v1491 = vunpack.c.l.b16 %v1119
      %v1492 = vunpack.c.l.b16 %v1120
      %v1493 = vunpack.c.l.b16 %v1121
      %v1494 = vunpack.c.l.b16 %v1122
      %v1495 = vpack.c.b16 %v1488, %v1487
      %v1496 = vpack.c.b16 %v1490, %v1489
      %v1497 = vpack.c.b16 %v1492, %v1491
      %v1498 = vpack.c.b16 %v1494, %v1493
      %1499 = vrot.lane.b32.xlu0 %v1495, 96
      %v1500 = vpop.permute.xlu0 %1499
      %1501 = vrot.lane.b32.xlu0 %v1496, 96
      %v1502 = vpop.permute.xlu0 %1501
      %1503 = vrot.lane.b32.xlu0 %v1497, 96
      %v1504 = vpop.permute.xlu0 %1503
      %1505 = vrot.lane.b32.xlu0 %v1498, 96
      %v1506 = vpop.permute.xlu0 %1505
      %v1508 = vsel %vm1263, %v1495, 0
      %v1511 = vsel %vm1263, %v1496, 0
      %v1514 = vsel %vm1263, %v1497, 0
      %v1517 = vsel %vm1263, %v1498, 0
      %v1520 = vsel %vm1263, %v1500, 0
      %v1523 = vsel %vm1263, %v1502, 0
      %v1526 = vsel %vm1263, %v1504, 0
      %v1529 = vsel %vm1263, %v1506, 0
      %1531 = vmatpush.bf16.xpose.msra.mxu0 0
      %1532 = vmatpush.bf16.xpose.msra.mxu0 0
      %1533 = vmatpush.bf16.xpose.msra.mxu0 0
      %1534 = vmatpush.bf16.xpose.msra.mxu0 0
      %1535 = vmatpush.bf16.xpose.msra.mxu0 %v1529
      %1536 = vmatpush.bf16.xpose.msra.mxu0 %v1526
      %1537 = vmatpush.bf16.xpose.msra.mxu0 %v1523
      %1538 = vmatpush.bf16.xpose.msra.mxu0 %v1520
      %1539 = vmatmul.bf16.gmra.mxu0 %v1508
      %v1540 = vpop.f32.mrf.mxu0
      %v1541 = vadd.f32 0.0, %v1540
      %v1542 = vpop.f32.mrf.mxu0
      %v1543 = vadd.f32 0.0, %v1542
      %1544 = vmatmul.bf16.gmra.mxu0 %v1511
      %v1545 = vpop.f32.mrf.mxu0
      %v1546 = vadd.f32 0.0, %v1545
      %v1547 = vpop.f32.mrf.mxu0
      %v1548 = vadd.f32 0.0, %v1547
      %1549 = vmatmul.bf16.gmra.mxu0 %v1514
      %v1550 = vpop.f32.mrf.mxu0
      %v1551 = vadd.f32 0.0, %v1550
      %v1552 = vpop.f32.mrf.mxu0
      %v1553 = vadd.f32 0.0, %v1552
      %1554 = vmatmul.bf16.gmra.mxu0 %v1517
      %v1555 = vpop.f32.mrf.mxu0
      %v1556 = vadd.f32 0.0, %v1555
      %v1557 = vpop.f32.mrf.mxu0
      %v1558 = vadd.f32 0.0, %v1557
      %1559 = vdwg.mxu0
      %vm1560 = vcmask 523264
      %v1561 = vsel %vm1560, %v1298, -inf
      %1562 = vmax.xlane.f32.xlu0 %v1561
      %v1563 = vpop.xlane.xlu0 %1562
      %v1564 = vsel %vm1560, %v1300, -inf
      %1565 = vmax.xlane.f32.xlu0 %v1564
      %v1566 = vpop.xlane.xlu0 %1565
      %v1567 = vsel %vm1560, %v1303, -inf
      %1568 = vmax.xlane.f32.xlu0 %v1567
      %v1569 = vpop.xlane.xlu0 %1568
      %v1570 = vsel %vm1560, %v1305, -inf
      %1571 = vmax.xlane.f32.xlu0 %v1570
      %v1572 = vpop.xlane.xlu0 %1571
      %v1573 = vsel %vm1560, %v1308, -inf
      %1574 = vmax.xlane.f32.xlu0 %v1573
      %v1575 = vpop.xlane.xlu0 %1574
      %v1576 = vsel %vm1560, %v1310, -inf
      %1577 = vmax.xlane.f32.xlu0 %v1576
      %v1578 = vpop.xlane.xlu0 %1577
      %v1579 = vsel %vm1560, %v1313, -inf
      %1580 = vmax.xlane.f32.xlu0 %v1579
      %v1581 = vpop.xlane.xlu0 %1580
      %v1582 = vsel %vm1560, %v1315, -inf
      %1583 = vmax.xlane.f32.xlu0 %v1582
      %v1584 = vpop.xlane.xlu0 %1583
      %v1585 = vsel %vm1560, %v1379, -inf
      %1586 = vmax.xlane.f32.xlu0 %v1585
      %v1587 = vpop.xlane.xlu0 %1586
      %v1588 = vsel %vm1560, %v1381, -inf
      %1589 = vmax.xlane.f32.xlu0 %v1588
      %v1590 = vpop.xlane.xlu0 %1589
      %v1591 = vsel %vm1560, %v1384, -inf
      %1592 = vmax.xlane.f32.xlu0 %v1591
      %v1593 = vpop.xlane.xlu0 %1592
      %v1594 = vsel %vm1560, %v1386, -inf
      %1595 = vmax.xlane.f32.xlu0 %v1594
      %v1596 = vpop.xlane.xlu0 %1595
      %v1597 = vsel %vm1560, %v1389, -inf
      %1598 = vmax.xlane.f32.xlu0 %v1597
      %v1599 = vpop.xlane.xlu0 %1598
      %v1600 = vsel %vm1560, %v1391, -inf
      %1601 = vmax.xlane.f32.xlu0 %v1600
      %v1602 = vpop.xlane.xlu0 %1601
      %v1603 = vsel %vm1560, %v1394, -inf
      %1604 = vmax.xlane.f32.xlu0 %v1603
      %v1605 = vpop.xlane.xlu0 %1604
      %v1606 = vsel %vm1560, %v1396, -inf
      %1607 = vmax.xlane.f32.xlu0 %v1606
      %v1608 = vpop.xlane.xlu0 %1607
      %v1609 = vsel %vm1560, %v1460, -inf
      %1610 = vmax.xlane.f32.xlu0 %v1609
      %v1611 = vpop.xlane.xlu0 %1610
      %v1612 = vsel %vm1560, %v1462, -inf
      %1613 = vmax.xlane.f32.xlu0 %v1612
      %v1614 = vpop.xlane.xlu0 %1613
      %v1615 = vsel %vm1560, %v1465, -inf
      %1616 = vmax.xlane.f32.xlu0 %v1615
      %v1617 = vpop.xlane.xlu0 %1616
      %v1618 = vsel %vm1560, %v1467, -inf
      %1619 = vmax.xlane.f32.xlu0 %v1618
      %v1620 = vpop.xlane.xlu0 %1619
      %v1621 = vsel %vm1560, %v1470, -inf
      %1622 = vmax.xlane.f32.xlu0 %v1621
      %v1623 = vpop.xlane.xlu0 %1622
      %v1624 = vsel %vm1560, %v1472, -inf
      %1625 = vmax.xlane.f32.xlu0 %v1624
      %v1626 = vpop.xlane.xlu0 %1625
      %v1627 = vsel %vm1560, %v1475, -inf
      %1628 = vmax.xlane.f32.xlu0 %v1627
      %v1629 = vpop.xlane.xlu0 %1628
      %v1630 = vsel %vm1560, %v1477, -inf
      %1631 = vmax.xlane.f32.xlu0 %v1630
      %v1632 = vpop.xlane.xlu0 %1631
      %v1633 = vsel %vm1560, %v1541, -inf
      %1634 = vmax.xlane.f32.xlu0 %v1633
      %v1635 = vpop.xlane.xlu0 %1634
      %v1636 = vsel %vm1560, %v1543, -inf
      %1637 = vmax.xlane.f32.xlu0 %v1636
      %v1638 = vpop.xlane.xlu0 %1637
      %v1639 = vsel %vm1560, %v1546, -inf
      %1640 = vmax.xlane.f32.xlu0 %v1639
      %v1641 = vpop.xlane.xlu0 %1640
      %v1642 = vsel %vm1560, %v1548, -inf
      %1643 = vmax.xlane.f32.xlu0 %v1642
      %v1644 = vpop.xlane.xlu0 %1643
      %v1645 = vsel %vm1560, %v1551, -inf
      %1646 = vmax.xlane.f32.xlu0 %v1645
      %v1647 = vpop.xlane.xlu0 %1646
      %v1648 = vsel %vm1560, %v1553, -inf
      %1649 = vmax.xlane.f32.xlu0 %v1648
      %v1650 = vpop.xlane.xlu0 %1649
      %v1651 = vsel %vm1560, %v1556, -inf
      %1652 = vmax.xlane.f32.xlu0 %v1651
      %v1653 = vpop.xlane.xlu0 %1652
      %v1654 = vsel %vm1560, %v1558, -inf
      %1655 = vmax.xlane.f32.xlu0 %v1654
      %v1656 = vpop.xlane.xlu0 %1655
      %v1657 = vsub.f32 -inf, %v1563
      %v1658 = vsub.f32 -inf, %v1566
      %v1659 = vsub.f32 -inf, %v1569
      %v1660 = vsub.f32 -inf, %v1572
      %v1661 = vsub.f32 -inf, %v1575
      %v1662 = vsub.f32 -inf, %v1578
      %v1663 = vsub.f32 -inf, %v1581
      %v1664 = vsub.f32 -inf, %v1584
      %v1665 = vsub.f32 -inf, %v1587
      %v1666 = vsub.f32 -inf, %v1590
      %v1667 = vsub.f32 -inf, %v1593
      %v1668 = vsub.f32 -inf, %v1596
      %v1669 = vsub.f32 -inf, %v1599
      %v1670 = vsub.f32 -inf, %v1602
      %v1671 = vsub.f32 -inf, %v1605
      %v1672 = vsub.f32 -inf, %v1608
      %v1673 = vsub.f32 -inf, %v1611
      %v1674 = vsub.f32 -inf, %v1614
      %v1675 = vsub.f32 -inf, %v1617
      %v1676 = vsub.f32 -inf, %v1620
      %v1677 = vsub.f32 -inf, %v1623
      %v1678 = vsub.f32 -inf, %v1626
      %v1679 = vsub.f32 -inf, %v1629
      %v1680 = vsub.f32 -inf, %v1632
      %v1681 = vsub.f32 -inf, %v1635
      %v1682 = vsub.f32 -inf, %v1638
      %v1683 = vsub.f32 -inf, %v1641
      %v1684 = vsub.f32 -inf, %v1644
      %v1685 = vsub.f32 -inf, %v1647
      %v1686 = vsub.f32 -inf, %v1650
      %v1687 = vsub.f32 -inf, %v1653
      %v1688 = vsub.f32 -inf, %v1656
      %v1689 = vmul.f32 %v1657, 1.442695
      %v1690 = vpow.pop %v1689
      %v1691 = vmul.f32 %v1658, 1.442695
      %v1692 = vpow.pop %v1691
      %v1693 = vmul.f32 %v1659, 1.442695
      %v1694 = vpow.pop %v1693
      %v1695 = vmul.f32 %v1660, 1.442695
      %v1696 = vpow.pop %v1695
      %v1697 = vmul.f32 %v1661, 1.442695
      %v1698 = vpow.pop %v1697
      %v1699 = vmul.f32 %v1662, 1.442695
      %v1700 = vpow.pop %v1699
      %v1701 = vmul.f32 %v1663, 1.442695
      %v1702 = vpow.pop %v1701
      %v1703 = vmul.f32 %v1664, 1.442695
      %v1704 = vpow.pop %v1703
      %v1705 = vmul.f32 %v1665, 1.442695
      %v1706 = vpow.pop %v1705
      %v1707 = vmul.f32 %v1666, 1.442695
      %v1708 = vpow.pop %v1707
      %v1709 = vmul.f32 %v1667, 1.442695
      %v1710 = vpow.pop %v1709
      %v1711 = vmul.f32 %v1668, 1.442695
      %v1712 = vpow.pop %v1711
      %v1713 = vmul.f32 %v1669, 1.442695
      %v1714 = vpow.pop %v1713
      %v1715 = vmul.f32 %v1670, 1.442695
      %v1716 = vpow.pop %v1715
      %v1717 = vmul.f32 %v1671, 1.442695
      %v1718 = vpow.pop %v1717
      %v1719 = vmul.f32 %v1672, 1.442695
      %v1720 = vpow.pop %v1719
      %v1721 = vmul.f32 %v1673, 1.442695
      %v1722 = vpow.pop %v1721
      %v1723 = vmul.f32 %v1674, 1.442695
      %v1724 = vpow.pop %v1723
      %v1725 = vmul.f32 %v1675, 1.442695
      %v1726 = vpow.pop %v1725
      %v1727 = vmul.f32 %v1676, 1.442695
      %v1728 = vpow.pop %v1727
      %v1729 = vmul.f32 %v1677, 1.442695
      %v1730 = vpow.pop %v1729
      %v1731 = vmul.f32 %v1678, 1.442695
      %v1732 = vpow.pop %v1731
      %v1733 = vmul.f32 %v1679, 1.442695
      %v1734 = vpow.pop %v1733
      %v1735 = vmul.f32 %v1680, 1.442695
      %v1736 = vpow.pop %v1735
      %v1737 = vmul.f32 %v1681, 1.442695
      %v1738 = vpow.pop %v1737
      %v1739 = vmul.f32 %v1682, 1.442695
      %v1740 = vpow.pop %v1739
      %v1741 = vmul.f32 %v1683, 1.442695
      %v1742 = vpow.pop %v1741
      %v1743 = vmul.f32 %v1684, 1.442695
      %v1744 = vpow.pop %v1743
      %v1745 = vmul.f32 %v1685, 1.442695
      %v1746 = vpow.pop %v1745
      %v1747 = vmul.f32 %v1686, 1.442695
      %v1748 = vpow.pop %v1747
      %v1749 = vmul.f32 %v1687, 1.442695
      %v1750 = vpow.pop %v1749
      %v1751 = vmul.f32 %v1688, 1.442695
      %v1752 = vpow.pop %v1751
      %v1753 = vsub.f32 %v1298, %v1563
      %v1754 = vsub.f32 %v1300, %v1566
      %v1755 = vsub.f32 %v1303, %v1569
      %v1756 = vsub.f32 %v1305, %v1572
      %v1757 = vsub.f32 %v1308, %v1575
      %v1758 = vsub.f32 %v1310, %v1578
      %v1759 = vsub.f32 %v1313, %v1581
      %v1760 = vsub.f32 %v1315, %v1584
      %v1761 = vsub.f32 %v1379, %v1587
      %v1762 = vsub.f32 %v1381, %v1590
      %v1763 = vsub.f32 %v1384, %v1593
      %v1764 = vsub.f32 %v1386, %v1596
      %v1765 = vsub.f32 %v1389, %v1599
      %v1766 = vsub.f32 %v1391, %v1602
      %v1767 = vsub.f32 %v1394, %v1605
      %v1768 = vsub.f32 %v1396, %v1608
      %v1769 = vsub.f32 %v1460, %v1611
      %v1770 = vsub.f32 %v1462, %v1614
      %v1771 = vsub.f32 %v1465, %v1617
      %v1772 = vsub.f32 %v1467, %v1620
      %v1773 = vsub.f32 %v1470, %v1623
      %v1774 = vsub.f32 %v1472, %v1626
      %v1775 = vsub.f32 %v1475, %v1629
      %v1776 = vsub.f32 %v1477, %v1632
      %v1777 = vsub.f32 %v1541, %v1635
      %v1778 = vsub.f32 %v1543, %v1638
      %v1779 = vsub.f32 %v1546, %v1641
      %v1780 = vsub.f32 %v1548, %v1644
      %v1781 = vsub.f32 %v1551, %v1647
      %v1782 = vsub.f32 %v1553, %v1650
      %v1783 = vsub.f32 %v1556, %v1653
      %v1784 = vsub.f32 %v1558, %v1656
      %v1785 = vmul.f32 %v1753, 1.442695
      %v1786 = vpow.pop %v1785
      %v1787 = vmul.f32 %v1754, 1.442695
      %v1788 = vpow.pop %v1787
      %v1789 = vmul.f32 %v1755, 1.442695
      %v1790 = vpow.pop %v1789
      %v1791 = vmul.f32 %v1756, 1.442695
      %v1792 = vpow.pop %v1791
      %v1793 = vmul.f32 %v1757, 1.442695
      %v1794 = vpow.pop %v1793
      %v1795 = vmul.f32 %v1758, 1.442695
      %v1796 = vpow.pop %v1795
      %v1797 = vmul.f32 %v1759, 1.442695
      %v1798 = vpow.pop %v1797
      %v1799 = vmul.f32 %v1760, 1.442695
      %v1800 = vpow.pop %v1799
      %v1801 = vmul.f32 %v1761, 1.442695
      %v1802 = vpow.pop %v1801
      %v1803 = vmul.f32 %v1762, 1.442695
      %v1804 = vpow.pop %v1803
      %v1805 = vmul.f32 %v1763, 1.442695
      %v1806 = vpow.pop %v1805
      %v1807 = vmul.f32 %v1764, 1.442695
      %v1808 = vpow.pop %v1807
      %v1809 = vmul.f32 %v1765, 1.442695
      %v1810 = vpow.pop %v1809
      %v1811 = vmul.f32 %v1766, 1.442695
      %v1812 = vpow.pop %v1811
      %v1813 = vmul.f32 %v1767, 1.442695
      %v1814 = vpow.pop %v1813
      %v1815 = vmul.f32 %v1768, 1.442695
      %v1816 = vpow.pop %v1815
      %v1817 = vmul.f32 %v1769, 1.442695
      %v1818 = vpow.pop %v1817
      %v1819 = vmul.f32 %v1770, 1.442695
      %v1820 = vpow.pop %v1819
      %v1821 = vmul.f32 %v1771, 1.442695
      %v1822 = vpow.pop %v1821
      %v1823 = vmul.f32 %v1772, 1.442695
      %v1824 = vpow.pop %v1823
      %v1825 = vmul.f32 %v1773, 1.442695
      %v1826 = vpow.pop %v1825
      %v1827 = vmul.f32 %v1774, 1.442695
      %v1828 = vpow.pop %v1827
      %v1829 = vmul.f32 %v1775, 1.442695
      %v1830 = vpow.pop %v1829
      %v1831 = vmul.f32 %v1776, 1.442695
      %v1832 = vpow.pop %v1831
      %v1833 = vmul.f32 %v1777, 1.442695
      %v1834 = vpow.pop %v1833
      %v1835 = vmul.f32 %v1778, 1.442695
      %v1836 = vpow.pop %v1835
      %v1837 = vmul.f32 %v1779, 1.442695
      %v1838 = vpow.pop %v1837
      %v1839 = vmul.f32 %v1780, 1.442695
      %v1840 = vpow.pop %v1839
      %v1841 = vmul.f32 %v1781, 1.442695
      %v1842 = vpow.pop %v1841
      %v1843 = vmul.f32 %v1782, 1.442695
      %v1844 = vpow.pop %v1843
      %v1845 = vmul.f32 %v1783, 1.442695
      %v1846 = vpow.pop %v1845
      %v1847 = vmul.f32 %v1784, 1.442695
      %v1848 = vpow.pop %v1847
      %v1849 = vmul.f32 %v1690, 0.0
      %v1850 = vmul.f32 %v1692, 0.0
      %v1851 = vmul.f32 %v1694, 0.0
      %v1852 = vmul.f32 %v1696, 0.0
      %v1853 = vmul.f32 %v1698, 0.0
      %v1854 = vmul.f32 %v1700, 0.0
      %v1855 = vmul.f32 %v1702, 0.0
      %v1856 = vmul.f32 %v1704, 0.0
      %v1857 = vmul.f32 %v1706, 0.0
      %v1858 = vmul.f32 %v1708, 0.0
      %v1859 = vmul.f32 %v1710, 0.0
      %v1860 = vmul.f32 %v1712, 0.0
      %v1861 = vmul.f32 %v1714, 0.0
      %v1862 = vmul.f32 %v1716, 0.0
      %v1863 = vmul.f32 %v1718, 0.0
      %v1864 = vmul.f32 %v1720, 0.0
      %v1865 = vmul.f32 %v1722, 0.0
      %v1866 = vmul.f32 %v1724, 0.0
      %v1867 = vmul.f32 %v1726, 0.0
      %v1868 = vmul.f32 %v1728, 0.0
      %v1869 = vmul.f32 %v1730, 0.0
      %v1870 = vmul.f32 %v1732, 0.0
      %v1871 = vmul.f32 %v1734, 0.0
      %v1872 = vmul.f32 %v1736, 0.0
      %v1873 = vmul.f32 %v1738, 0.0
      %v1874 = vmul.f32 %v1740, 0.0
      %v1875 = vmul.f32 %v1742, 0.0
      %v1876 = vmul.f32 %v1744, 0.0
      %v1877 = vmul.f32 %v1746, 0.0
      %v1878 = vmul.f32 %v1748, 0.0
      %v1879 = vmul.f32 %v1750, 0.0
      %v1880 = vmul.f32 %v1752, 0.0
      %v1881 = vsel %vm1560, %v1786, 0.0
      %1882 = vadd.xlane.f32.xlu0 %v1881
      %v1883 = vpop.xlane.xlu0 %1882
      %v1884 = vsel %vm1560, %v1788, 0.0
      %1885 = vadd.xlane.f32.xlu0 %v1884
      %v1886 = vpop.xlane.xlu0 %1885
      %v1887 = vsel %vm1560, %v1790, 0.0
      %1888 = vadd.xlane.f32.xlu0 %v1887
      %v1889 = vpop.xlane.xlu0 %1888
      %v1890 = vsel %vm1560, %v1792, 0.0
      %1891 = vadd.xlane.f32.xlu0 %v1890
      %v1892 = vpop.xlane.xlu0 %1891
      %v1893 = vsel %vm1560, %v1794, 0.0
      %1894 = vadd.xlane.f32.xlu0 %v1893
      %v1895 = vpop.xlane.xlu0 %1894
      %v1896 = vsel %vm1560, %v1796, 0.0
      %1897 = vadd.xlane.f32.xlu0 %v1896
      %v1898 = vpop.xlane.xlu0 %1897
      %v1899 = vsel %vm1560, %v1798, 0.0
      %1900 = vadd.xlane.f32.xlu0 %v1899
      %v1901 = vpop.xlane.xlu0 %1900
      %v1902 = vsel %vm1560, %v1800, 0.0
      %1903 = vadd.xlane.f32.xlu0 %v1902
      %v1904 = vpop.xlane.xlu0 %1903
      %v1905 = vsel %vm1560, %v1802, 0.0
      %1906 = vadd.xlane.f32.xlu0 %v1905
      %v1907 = vpop.xlane.xlu0 %1906
      %v1908 = vsel %vm1560, %v1804, 0.0
      %1909 = vadd.xlane.f32.xlu0 %v1908
      %v1910 = vpop.xlane.xlu0 %1909
      %v1911 = vsel %vm1560, %v1806, 0.0
      %1912 = vadd.xlane.f32.xlu0 %v1911
      %v1913 = vpop.xlane.xlu0 %1912
      %v1914 = vsel %vm1560, %v1808, 0.0
      %1915 = vadd.xlane.f32.xlu0 %v1914
      %v1916 = vpop.xlane.xlu0 %1915
      %v1917 = vsel %vm1560, %v1810, 0.0
      %1918 = vadd.xlane.f32.xlu0 %v1917
      %v1919 = vpop.xlane.xlu0 %1918
      %v1920 = vsel %vm1560, %v1812, 0.0
      %1921 = vadd.xlane.f32.xlu0 %v1920
      %v1922 = vpop.xlane.xlu0 %1921
      %v1923 = vsel %vm1560, %v1814, 0.0
      %1924 = vadd.xlane.f32.xlu0 %v1923
      %v1925 = vpop.xlane.xlu0 %1924
      %v1926 = vsel %vm1560, %v1816, 0.0
      %1927 = vadd.xlane.f32.xlu0 %v1926
      %v1928 = vpop.xlane.xlu0 %1927
      %v1929 = vsel %vm1560, %v1818, 0.0
      %1930 = vadd.xlane.f32.xlu0 %v1929
      %v1931 = vpop.xlane.xlu0 %1930
      %v1932 = vsel %vm1560, %v1820, 0.0
      %1933 = vadd.xlane.f32.xlu0 %v1932
      %v1934 = vpop.xlane.xlu0 %1933
      %v1935 = vsel %vm1560, %v1822, 0.0
      %1936 = vadd.xlane.f32.xlu0 %v1935
      %v1937 = vpop.xlane.xlu0 %1936
      %v1938 = vsel %vm1560, %v1824, 0.0
      %1939 = vadd.xlane.f32.xlu0 %v1938
      %v1940 = vpop.xlane.xlu0 %1939
      %v1941 = vsel %vm1560, %v1826, 0.0
      %1942 = vadd.xlane.f32.xlu0 %v1941
      %v1943 = vpop.xlane.xlu0 %1942
      %v1944 = vsel %vm1560, %v1828, 0.0
      %1945 = vadd.xlane.f32.xlu0 %v1944
      %v1946 = vpop.xlane.xlu0 %1945
      %v1947 = vsel %vm1560, %v1830, 0.0
      %1948 = vadd.xlane.f32.xlu0 %v1947
      %v1949 = vpop.xlane.xlu0 %1948
      %v1950 = vsel %vm1560, %v1832, 0.0
      %1951 = vadd.xlane.f32.xlu0 %v1950
      %v1952 = vpop.xlane.xlu0 %1951
      %v1953 = vsel %vm1560, %v1834, 0.0
      %1954 = vadd.xlane.f32.xlu0 %v1953
      %v1955 = vpop.xlane.xlu0 %1954
      %v1956 = vsel %vm1560, %v1836, 0.0
      %1957 = vadd.xlane.f32.xlu0 %v1956
      %v1958 = vpop.xlane.xlu0 %1957
      %v1959 = vsel %vm1560, %v1838, 0.0
      %1960 = vadd.xlane.f32.xlu0 %v1959
      %v1961 = vpop.xlane.xlu0 %1960
      %v1962 = vsel %vm1560, %v1840, 0.0
      %1963 = vadd.xlane.f32.xlu0 %v1962
      %v1964 = vpop.xlane.xlu0 %1963
      %v1965 = vsel %vm1560, %v1842, 0.0
      %1966 = vadd.xlane.f32.xlu0 %v1965
      %v1967 = vpop.xlane.xlu0 %1966
      %v1968 = vsel %vm1560, %v1844, 0.0
      %1969 = vadd.xlane.f32.xlu0 %v1968
      %v1970 = vpop.xlane.xlu0 %1969
      %v1971 = vsel %vm1560, %v1846, 0.0
      %1972 = vadd.xlane.f32.xlu0 %v1971
      %v1973 = vpop.xlane.xlu0 %1972
      %v1974 = vsel %vm1560, %v1848, 0.0
      %1975 = vadd.xlane.f32.xlu0 %v1974
      %v1976 = vpop.xlane.xlu0 %1975
      %v1977 = vadd.f32 %v1849, %v1883
      %v1978 = vadd.f32 %v1850, %v1886
      %v1979 = vadd.f32 %v1851, %v1889
      %v1980 = vadd.f32 %v1852, %v1892
      %v1981 = vadd.f32 %v1853, %v1895
      %v1982 = vadd.f32 %v1854, %v1898
      %v1983 = vadd.f32 %v1855, %v1901
      %v1984 = vadd.f32 %v1856, %v1904
      %v1985 = vadd.f32 %v1857, %v1907
      %v1986 = vadd.f32 %v1858, %v1910
      %v1987 = vadd.f32 %v1859, %v1913
      %v1988 = vadd.f32 %v1860, %v1916
      %v1989 = vadd.f32 %v1861, %v1919
      %v1990 = vadd.f32 %v1862, %v1922
      %v1991 = vadd.f32 %v1863, %v1925
      %v1992 = vadd.f32 %v1864, %v1928
      %v1993 = vadd.f32 %v1865, %v1931
      %v1994 = vadd.f32 %v1866, %v1934
      %v1995 = vadd.f32 %v1867, %v1937
      %v1996 = vadd.f32 %v1868, %v1940
      %v1997 = vadd.f32 %v1869, %v1943
      %v1998 = vadd.f32 %v1870, %v1946
      %v1999 = vadd.f32 %v1871, %v1949
      %v2000 = vadd.f32 %v1872, %v1952
      %v2001 = vadd.f32 %v1873, %v1955
      %v2002 = vadd.f32 %v1874, %v1958
      %v2003 = vadd.f32 %v1875, %v1961
      %v2004 = vadd.f32 %v1876, %v1964
      %v2005 = vadd.f32 %v1877, %v1967
      %v2006 = vadd.f32 %v1878, %v1970
      %v2007 = vadd.f32 %v1879, %v1973
      %v2008 = vadd.f32 %v1880, %v1976
      %v2009 = vpack.c.bf16 %v1786, %v1786
      %v2010 = vpack.c.bf16 %v1788, %v1788
      %v2011 = vpack.c.bf16 %v1790, %v1790
      %v2012 = vpack.c.bf16 %v1792, %v1792
      %v2013 = vpack.c.bf16 %v1794, %v1794
      %v2014 = vpack.c.bf16 %v1796, %v1796
      %v2015 = vpack.c.bf16 %v1798, %v1798
      %v2016 = vpack.c.bf16 %v1800, %v1800
      %v2017 = vpack.c.bf16 %v1802, %v1802
      %v2018 = vpack.c.bf16 %v1804, %v1804
      %v2019 = vpack.c.bf16 %v1806, %v1806
      %v2020 = vpack.c.bf16 %v1808, %v1808
      %v2021 = vpack.c.bf16 %v1810, %v1810
      %v2022 = vpack.c.bf16 %v1812, %v1812
      %v2023 = vpack.c.bf16 %v1814, %v1814
      %v2024 = vpack.c.bf16 %v1816, %v1816
      %v2025 = vpack.c.bf16 %v1818, %v1818
      %v2026 = vpack.c.bf16 %v1820, %v1820
      %v2027 = vpack.c.bf16 %v1822, %v1822
      %v2028 = vpack.c.bf16 %v1824, %v1824
      %v2029 = vpack.c.bf16 %v1826, %v1826
      %v2030 = vpack.c.bf16 %v1828, %v1828
      %v2031 = vpack.c.bf16 %v1830, %v1830
      %v2032 = vpack.c.bf16 %v1832, %v1832
      %v2033 = vpack.c.bf16 %v1834, %v1834
      %v2034 = vpack.c.bf16 %v1836, %v1836
      %v2035 = vpack.c.bf16 %v1838, %v1838
      %v2036 = vpack.c.bf16 %v1840, %v1840
      %v2037 = vpack.c.bf16 %v1842, %v1842
      %v2038 = vpack.c.bf16 %v1844, %v1844
      %v2039 = vpack.c.bf16 %v1846, %v1846
      %v2040 = vpack.c.bf16 %v1848, %v1848
      %v2049 = vunpack.c.l.b16 %v2009
      %v2050 = vunpack.c.l.b16 %v2010
      %v2051 = vunpack.c.l.b16 %v2011
      %v2052 = vunpack.c.l.b16 %v2012
      %v2053 = vunpack.c.l.b16 %v2013
      %v2054 = vunpack.c.l.b16 %v2014
      %v2055 = vunpack.c.l.b16 %v2015
      %v2056 = vunpack.c.l.b16 %v2016
      %v2057 = vpack.c.b16 %v2050, %v2049
      %v2058 = vpack.c.b16 %v2052, %v2051
      %v2059 = vpack.c.b16 %v2054, %v2053
      %v2060 = vpack.c.b16 %v2056, %v2055
      %v2069 = vunpack.c.l.b16 %v1203
      %v2070 = vunpack.c.l.b16 %v1204
      %v2071 = vunpack.c.l.b16 %v1205
      %v2072 = vunpack.c.l.b16 %v1206
      %v2073 = vunpack.c.l.b16 %v1207
      %v2074 = vunpack.c.l.b16 %v1208
      %v2075 = vunpack.c.l.b16 %v1209
      %v2076 = vunpack.c.l.b16 %v1210
      %v2077 = vpack.c.b16 %v2070, %v2069
      %v2078 = vpack.c.b16 %v2072, %v2071
      %v2079 = vpack.c.b16 %v2074, %v2073
      %v2080 = vpack.c.b16 %v2076, %v2075
      %v2086 = vsel %vm1560, %v2057, 0
      %v2089 = vsel %vm1560, %v2058, 0
      %v2092 = vsel %vm1560, %v2059, 0
      %v2095 = vsel %vm1560, %v2060, 0
      %2097 = vmatpush.bf16.msra.mxu0 0
      %2098 = vmatpush.bf16.msra.mxu0 0
      %2099 = vmatpush.bf16.msra.mxu0 0
      %2100 = vmatpush.bf16.msra.mxu0 0
      %2101 = vmatpush.bf16.msra.mxu0 %v2080
      %2102 = vmatpush.bf16.msra.mxu0 %v2079
      %2103 = vmatpush.bf16.msra.mxu0 %v2078
      %2104 = vmatpush.bf16.msra.mxu0 %v2077
      %2105 = vmatmul.bf16.gmra.mxu0 %v2086
      %v2106 = vpop.f32.mrf.mxu0
      %v2107 = vadd.f32 0.0, %v2106
      %v2108 = vpop.f32.mrf.mxu0
      %v2109 = vadd.f32 0.0, %v2108
      %2110 = vmatmul.bf16.gmra.mxu0 %v2089
      %v2111 = vpop.f32.mrf.mxu0
      %v2112 = vadd.f32 0.0, %v2111
      %v2113 = vpop.f32.mrf.mxu0
      %v2114 = vadd.f32 0.0, %v2113
      %2115 = vmatmul.bf16.gmra.mxu0 %v2092
      %v2116 = vpop.f32.mrf.mxu0
      %v2117 = vadd.f32 0.0, %v2116
      %v2118 = vpop.f32.mrf.mxu0
      %v2119 = vadd.f32 0.0, %v2118
      %2120 = vmatmul.bf16.gmra.mxu0 %v2095
      %v2121 = vpop.f32.mrf.mxu0
      %v2122 = vadd.f32 0.0, %v2121
      %v2123 = vpop.f32.mrf.mxu0
      %v2124 = vadd.f32 0.0, %v2123
      %2125 = vdwg.mxu0
      %v2134 = vunpack.c.l.b16 %v2017
      %v2135 = vunpack.c.l.b16 %v2018
      %v2136 = vunpack.c.l.b16 %v2019
      %v2137 = vunpack.c.l.b16 %v2020
      %v2138 = vunpack.c.l.b16 %v2021
      %v2139 = vunpack.c.l.b16 %v2022
      %v2140 = vunpack.c.l.b16 %v2023
      %v2141 = vunpack.c.l.b16 %v2024
      %v2142 = vpack.c.b16 %v2135, %v2134
      %v2143 = vpack.c.b16 %v2137, %v2136
      %v2144 = vpack.c.b16 %v2139, %v2138
      %v2145 = vpack.c.b16 %v2141, %v2140
      %v2154 = vunpack.c.l.b16 %v1211
      %v2155 = vunpack.c.l.b16 %v1212
      %v2156 = vunpack.c.l.b16 %v1213
      %v2157 = vunpack.c.l.b16 %v1214
      %v2158 = vunpack.c.l.b16 %v1215
      %v2159 = vunpack.c.l.b16 %v1216
      %v2160 = vunpack.c.l.b16 %v1217
      %v2161 = vunpack.c.l.b16 %v1218
      %v2162 = vpack.c.b16 %v2155, %v2154
      %v2163 = vpack.c.b16 %v2157, %v2156
      %v2164 = vpack.c.b16 %v2159, %v2158
      %v2165 = vpack.c.b16 %v2161, %v2160
      %v2171 = vsel %vm1560, %v2142, 0
      %v2174 = vsel %vm1560, %v2143, 0
      %v2177 = vsel %vm1560, %v2144, 0
      %v2180 = vsel %vm1560, %v2145, 0
      %2182 = vmatpush.bf16.msra.mxu0 0
      %2183 = vmatpush.bf16.msra.mxu0 0
      %2184 = vmatpush.bf16.msra.mxu0 0
      %2185 = vmatpush.bf16.msra.mxu0 0
      %2186 = vmatpush.bf16.msra.mxu0 %v2165
      %2187 = vmatpush.bf16.msra.mxu0 %v2164
      %2188 = vmatpush.bf16.msra.mxu0 %v2163
      %2189 = vmatpush.bf16.msra.mxu0 %v2162
      %2190 = vmatmul.bf16.gmra.mxu0 %v2171
      %v2191 = vpop.f32.mrf.mxu0
      %v2192 = vadd.f32 0.0, %v2191
      %v2193 = vpop.f32.mrf.mxu0
      %v2194 = vadd.f32 0.0, %v2193
      %2195 = vmatmul.bf16.gmra.mxu0 %v2174
      %v2196 = vpop.f32.mrf.mxu0
      %v2197 = vadd.f32 0.0, %v2196
      %v2198 = vpop.f32.mrf.mxu0
      %v2199 = vadd.f32 0.0, %v2198
      %2200 = vmatmul.bf16.gmra.mxu0 %v2177
      %v2201 = vpop.f32.mrf.mxu0
      %v2202 = vadd.f32 0.0, %v2201
      %v2203 = vpop.f32.mrf.mxu0
      %v2204 = vadd.f32 0.0, %v2203
      %2205 = vmatmul.bf16.gmra.mxu0 %v2180
      %v2206 = vpop.f32.mrf.mxu0
      %v2207 = vadd.f32 0.0, %v2206
      %v2208 = vpop.f32.mrf.mxu0
      %v2209 = vadd.f32 0.0, %v2208
      %2210 = vdwg.mxu0
      %v2219 = vunpack.c.l.b16 %v2025
      %v2220 = vunpack.c.l.b16 %v2026
      %v2221 = vunpack.c.l.b16 %v2027
      %v2222 = vunpack.c.l.b16 %v2028
      %v2223 = vunpack.c.l.b16 %v2029
      %v2224 = vunpack.c.l.b16 %v2030
      %v2225 = vunpack.c.l.b16 %v2031
      %v2226 = vunpack.c.l.b16 %v2032
      %v2227 = vpack.c.b16 %v2220, %v2219
      %v2228 = vpack.c.b16 %v2222, %v2221
      %v2229 = vpack.c.b16 %v2224, %v2223
      %v2230 = vpack.c.b16 %v2226, %v2225
      %v2239 = vunpack.c.l.b16 %v1219
      %v2240 = vunpack.c.l.b16 %v1220
      %v2241 = vunpack.c.l.b16 %v1221
      %v2242 = vunpack.c.l.b16 %v1222
      %v2243 = vunpack.c.l.b16 %v1223
      %v2244 = vunpack.c.l.b16 %v1224
      %v2245 = vunpack.c.l.b16 %v1225
      %v2246 = vunpack.c.l.b16 %v1226
      %v2247 = vpack.c.b16 %v2240, %v2239
      %v2248 = vpack.c.b16 %v2242, %v2241
      %v2249 = vpack.c.b16 %v2244, %v2243
      %v2250 = vpack.c.b16 %v2246, %v2245
      %v2256 = vsel %vm1560, %v2227, 0
      %v2259 = vsel %vm1560, %v2228, 0
      %v2262 = vsel %vm1560, %v2229, 0
      %v2265 = vsel %vm1560, %v2230, 0
      %2267 = vmatpush.bf16.msra.mxu0 0
      %2268 = vmatpush.bf16.msra.mxu0 0
      %2269 = vmatpush.bf16.msra.mxu0 0
      %2270 = vmatpush.bf16.msra.mxu0 0
      %2271 = vmatpush.bf16.msra.mxu0 %v2250
      %2272 = vmatpush.bf16.msra.mxu0 %v2249
      %2273 = vmatpush.bf16.msra.mxu0 %v2248
      %2274 = vmatpush.bf16.msra.mxu0 %v2247
      %2275 = vmatmul.bf16.gmra.mxu0 %v2256
      %v2276 = vpop.f32.mrf.mxu0
      %v2277 = vadd.f32 0.0, %v2276
      %v2278 = vpop.f32.mrf.mxu0
      %v2279 = vadd.f32 0.0, %v2278
      %2280 = vmatmul.bf16.gmra.mxu0 %v2259
      %v2281 = vpop.f32.mrf.mxu0
      %v2282 = vadd.f32 0.0, %v2281
      %v2283 = vpop.f32.mrf.mxu0
      %v2284 = vadd.f32 0.0, %v2283
      %2285 = vmatmul.bf16.gmra.mxu0 %v2262
      %v2286 = vpop.f32.mrf.mxu0
      %v2287 = vadd.f32 0.0, %v2286
      %v2288 = vpop.f32.mrf.mxu0
      %v2289 = vadd.f32 0.0, %v2288
      %2290 = vmatmul.bf16.gmra.mxu0 %v2265
      %v2291 = vpop.f32.mrf.mxu0
      %v2292 = vadd.f32 0.0, %v2291
      %v2293 = vpop.f32.mrf.mxu0
      %v2294 = vadd.f32 0.0, %v2293
      %2295 = vdwg.mxu0
      %v2304 = vunpack.c.l.b16 %v2033
      %v2305 = vunpack.c.l.b16 %v2034
      %v2306 = vunpack.c.l.b16 %v2035
      %v2307 = vunpack.c.l.b16 %v2036
      %v2308 = vunpack.c.l.b16 %v2037
      %v2309 = vunpack.c.l.b16 %v2038
      %v2310 = vunpack.c.l.b16 %v2039
      %v2311 = vunpack.c.l.b16 %v2040
      %v2312 = vpack.c.b16 %v2305, %v2304
      %v2313 = vpack.c.b16 %v2307, %v2306
      %v2314 = vpack.c.b16 %v2309, %v2308
      %v2315 = vpack.c.b16 %v2311, %v2310
      %v2324 = vunpack.c.l.b16 %v1227
      %v2325 = vunpack.c.l.b16 %v1228
      %v2326 = vunpack.c.l.b16 %v1229
      %v2327 = vunpack.c.l.b16 %v1230
      %v2328 = vunpack.c.l.b16 %v1231
      %v2329 = vunpack.c.l.b16 %v1232
      %v2330 = vunpack.c.l.b16 %v1233
      %v2331 = vunpack.c.l.b16 %v1234
      %v2332 = vpack.c.b16 %v2325, %v2324
      %v2333 = vpack.c.b16 %v2327, %v2326
      %v2334 = vpack.c.b16 %v2329, %v2328
      %v2335 = vpack.c.b16 %v2331, %v2330
      %v2341 = vsel %vm1560, %v2312, 0
      %v2344 = vsel %vm1560, %v2313, 0
      %v2347 = vsel %vm1560, %v2314, 0
      %v2350 = vsel %vm1560, %v2315, 0
      %2352 = vmatpush.bf16.msra.mxu0 0
      %2353 = vmatpush.bf16.msra.mxu0 0
      %2354 = vmatpush.bf16.msra.mxu0 0
      %2355 = vmatpush.bf16.msra.mxu0 0
      %2356 = vmatpush.bf16.msra.mxu0 %v2335
      %2357 = vmatpush.bf16.msra.mxu0 %v2334
      %2358 = vmatpush.bf16.msra.mxu0 %v2333
      %2359 = vmatpush.bf16.msra.mxu0 %v2332
      %2360 = vmatmul.bf16.gmra.mxu0 %v2341
      %v2361 = vpop.f32.mrf.mxu0
      %v2362 = vadd.f32 0.0, %v2361
      %v2363 = vpop.f32.mrf.mxu0
      %v2364 = vadd.f32 0.0, %v2363
      %2365 = vmatmul.bf16.gmra.mxu0 %v2344
      %v2366 = vpop.f32.mrf.mxu0
      %v2367 = vadd.f32 0.0, %v2366
      %v2368 = vpop.f32.mrf.mxu0
      %v2369 = vadd.f32 0.0, %v2368
      %2370 = vmatmul.bf16.gmra.mxu0 %v2347
      %v2371 = vpop.f32.mrf.mxu0
      %v2372 = vadd.f32 0.0, %v2371
      %v2373 = vpop.f32.mrf.mxu0
      %v2374 = vadd.f32 0.0, %v2373
      %2375 = vmatmul.bf16.gmra.mxu0 %v2350
      %v2376 = vpop.f32.mrf.mxu0
      %v2377 = vadd.f32 0.0, %v2376
      %v2378 = vpop.f32.mrf.mxu0
      %v2379 = vadd.f32 0.0, %v2378
      %2380 = vdwg.mxu0
      %v2381 = vadd.f32 %v1849, %v2107
      %v2382 = vadd.f32 %v1850, %v2109
      %v2383 = vadd.f32 %v1851, %v2112
      %v2384 = vadd.f32 %v1852, %v2114
      %v2385 = vadd.f32 %v1853, %v2117
      %v2386 = vadd.f32 %v1854, %v2119
      %v2387 = vadd.f32 %v1855, %v2122
      %v2388 = vadd.f32 %v1856, %v2124
      %v2389 = vadd.f32 %v1857, %v2192
      %v2390 = vadd.f32 %v1858, %v2194
      %v2391 = vadd.f32 %v1859, %v2197
      %v2392 = vadd.f32 %v1860, %v2199
      %v2393 = vadd.f32 %v1861, %v2202
      %v2394 = vadd.f32 %v1862, %v2204
      %v2395 = vadd.f32 %v1863, %v2207
      %v2396 = vadd.f32 %v1864, %v2209
      %v2397 = vadd.f32 %v1865, %v2277
      %v2398 = vadd.f32 %v1866, %v2279
      %v2399 = vadd.f32 %v1867, %v2282
      %v2400 = vadd.f32 %v1868, %v2284
      %v2401 = vadd.f32 %v1869, %v2287
      %v2402 = vadd.f32 %v1870, %v2289
      %v2403 = vadd.f32 %v1871, %v2292
      %v2404 = vadd.f32 %v1872, %v2294
      %v2405 = vadd.f32 %v1873, %v2362
      %v2406 = vadd.f32 %v1874, %v2364
      %v2407 = vadd.f32 %v1875, %v2367
      %v2408 = vadd.f32 %v1876, %v2369
      %v2409 = vadd.f32 %v1877, %v2372
      %v2410 = vadd.f32 %v1878, %v2374
      %v2411 = vadd.f32 %v1879, %v2377
      %v2412 = vadd.f32 %v1880, %v2379
      %v2413 = vrcp.pop %v1977
      %v2414 = vrcp.pop %v1978
      %v2415 = vrcp.pop %v1979
      %v2416 = vrcp.pop %v1980
      %v2417 = vrcp.pop %v1981
      %v2418 = vrcp.pop %v1982
      %v2419 = vrcp.pop %v1983
      %v2420 = vrcp.pop %v1984
      %v2421 = vrcp.pop %v1985
      %v2422 = vrcp.pop %v1986
      %v2423 = vrcp.pop %v1987
      %v2424 = vrcp.pop %v1988
      %v2425 = vrcp.pop %v1989
      %v2426 = vrcp.pop %v1990
      %v2427 = vrcp.pop %v1991
      %v2428 = vrcp.pop %v1992
      %v2429 = vrcp.pop %v1993
      %v2430 = vrcp.pop %v1994
      %v2431 = vrcp.pop %v1995
      %v2432 = vrcp.pop %v1996
      %v2433 = vrcp.pop %v1997
      %v2434 = vrcp.pop %v1998
      %v2435 = vrcp.pop %v1999
      %v2436 = vrcp.pop %v2000
      %v2437 = vrcp.pop %v2001
      %v2438 = vrcp.pop %v2002
      %v2439 = vrcp.pop %v2003
      %v2440 = vrcp.pop %v2004
      %v2441 = vrcp.pop %v2005
      %v2442 = vrcp.pop %v2006
      %v2443 = vrcp.pop %v2007
      %v2444 = vrcp.pop %v2008
      %v2445 = vmul.f32 %v2381, %v2413
      %v2446 = vmul.f32 %v2382, %v2414
      %v2447 = vmul.f32 %v2383, %v2415
      %v2448 = vmul.f32 %v2384, %v2416
      %v2449 = vmul.f32 %v2385, %v2417
      %v2450 = vmul.f32 %v2386, %v2418
      %v2451 = vmul.f32 %v2387, %v2419
      %v2452 = vmul.f32 %v2388, %v2420
      %v2453 = vmul.f32 %v2389, %v2421
      %v2454 = vmul.f32 %v2390, %v2422
      %v2455 = vmul.f32 %v2391, %v2423
      %v2456 = vmul.f32 %v2392, %v2424
      %v2457 = vmul.f32 %v2393, %v2425
      %v2458 = vmul.f32 %v2394, %v2426
      %v2459 = vmul.f32 %v2395, %v2427
      %v2460 = vmul.f32 %v2396, %v2428
      %v2461 = vmul.f32 %v2397, %v2429
      %v2462 = vmul.f32 %v2398, %v2430
      %v2463 = vmul.f32 %v2399, %v2431
      %v2464 = vmul.f32 %v2400, %v2432
      %v2465 = vmul.f32 %v2401, %v2433
      %v2466 = vmul.f32 %v2402, %v2434
      %v2467 = vmul.f32 %v2403, %v2435
      %v2468 = vmul.f32 %v2404, %v2436
      %v2469 = vmul.f32 %v2405, %v2437
      %v2470 = vmul.f32 %v2406, %v2438
      %v2471 = vmul.f32 %v2407, %v2439
      %v2472 = vmul.f32 %v2408, %v2440
      %v2473 = vmul.f32 %v2409, %v2441
      %v2474 = vmul.f32 %v2410, %v2442
      %v2475 = vmul.f32 %v2411, %v2443
      %v2476 = vmul.f32 %v2412, %v2444
      %v2477 = vpack.c.bf16 %v2445, %v2445
      %v2478 = vpack.c.bf16 %v2446, %v2446
      %v2479 = vpack.c.bf16 %v2447, %v2447
      %v2480 = vpack.c.bf16 %v2448, %v2448
      %v2481 = vpack.c.bf16 %v2449, %v2449
      %v2482 = vpack.c.bf16 %v2450, %v2450
      %v2483 = vpack.c.bf16 %v2451, %v2451
      %v2484 = vpack.c.bf16 %v2452, %v2452
      %v2485 = vpack.c.bf16 %v2453, %v2453
      %v2486 = vpack.c.bf16 %v2454, %v2454
      %v2487 = vpack.c.bf16 %v2455, %v2455
      %v2488 = vpack.c.bf16 %v2456, %v2456
      %v2489 = vpack.c.bf16 %v2457, %v2457
      %v2490 = vpack.c.bf16 %v2458, %v2458
      %v2491 = vpack.c.bf16 %v2459, %v2459
      %v2492 = vpack.c.bf16 %v2460, %v2460
      %v2493 = vpack.c.bf16 %v2461, %v2461
      %v2494 = vpack.c.bf16 %v2462, %v2462
      %v2495 = vpack.c.bf16 %v2463, %v2463
      %v2496 = vpack.c.bf16 %v2464, %v2464
      %v2497 = vpack.c.bf16 %v2465, %v2465
      %v2498 = vpack.c.bf16 %v2466, %v2466
      %v2499 = vpack.c.bf16 %v2467, %v2467
      %v2500 = vpack.c.bf16 %v2468, %v2468
      %v2501 = vpack.c.bf16 %v2469, %v2469
      %v2502 = vpack.c.bf16 %v2470, %v2470
      %v2503 = vpack.c.bf16 %v2471, %v2471
      %v2504 = vpack.c.bf16 %v2472, %v2472
      %v2505 = vpack.c.bf16 %v2473, %v2473
      %v2506 = vpack.c.bf16 %v2474, %v2474
      %v2507 = vpack.c.bf16 %v2475, %v2475
      %v2508 = vpack.c.bf16 %v2476, %v2476
      %v2509 = vld [vmem:[%s797] sm:$0xf]
      %v2510 = vld [vmem:[%s797 + $0x4] sm:$0xf]
      %v2511 = vld [vmem:[%s797 + $0x8] sm:$0xf]
      %v2512 = vld [vmem:[%s797 + $0xc] sm:$0xf]
      %v2521 = vunpack.c.l.b16 %v2477
      %v2522 = vunpack.c.l.b16 %v2478
      %v2523 = vunpack.c.l.b16 %v2479
      %v2524 = vunpack.c.l.b16 %v2480
      %v2525 = vunpack.c.l.b16 %v2481
      %v2526 = vunpack.c.l.b16 %v2482
      %v2527 = vunpack.c.l.b16 %v2483
      %v2528 = vunpack.c.l.b16 %v2484
      %v2529 = vpack.c.b16 %v2522, %v2521
      %v2530 = vpack.c.b16 %v2524, %v2523
      %v2531 = vpack.c.b16 %v2526, %v2525
      %v2532 = vpack.c.b16 %v2528, %v2527
      %v2534 = vsel %vm1263, %v2529, 0
      %v2537 = vsel %vm1263, %v2530, 0
      %v2540 = vsel %vm1263, %v2531, 0
      %v2543 = vsel %vm1263, %v2532, 0
      %vm2545 = vcmask 1043456
      %v2547 = vsel %vm2545, %v2509, 0
      %2549 = vmatpush.bf16.msra.mxu0 0
      %2550 = vmatpush.bf16.msra.mxu0 0
      %2551 = vmatpush.bf16.msra.mxu0 0
      %2552 = vmatpush.bf16.msra.mxu0 0
      %2553 = vmatpush.bf16.msra.mxu0 0
      %2554 = vmatpush.bf16.msra.mxu0 0
      %2555 = vmatpush.bf16.msra.mxu0 0
      %2556 = vmatpush.bf16.msra.mxu0 %v2547
      %2557 = vmatmul.bf16.gmra.mxu0 %v2534
      %v2558 = vpop.f32.mrf.mxu0
      %v2559 = vadd.f32 0.0, %v2558
      %v2560 = vpop.f32.mrf.mxu0
      %v2561 = vadd.f32 0.0, %v2560
      %2562 = vmatmul.bf16.gmra.mxu0 %v2537
      %v2563 = vpop.f32.mrf.mxu0
      %v2564 = vadd.f32 0.0, %v2563
      %v2565 = vpop.f32.mrf.mxu0
      %v2566 = vadd.f32 0.0, %v2565
      %2567 = vmatmul.bf16.gmra.mxu0 %v2540
      %v2568 = vpop.f32.mrf.mxu0
      %v2569 = vadd.f32 0.0, %v2568
      %v2570 = vpop.f32.mrf.mxu0
      %v2571 = vadd.f32 0.0, %v2570
      %2572 = vmatmul.bf16.gmra.mxu0 %v2543
      %v2573 = vpop.f32.mrf.mxu0
      %v2574 = vadd.f32 0.0, %v2573
      %v2575 = vpop.f32.mrf.mxu0
      %v2576 = vadd.f32 0.0, %v2575
      %2577 = vdwg.mxu0
      %v2586 = vunpack.c.l.b16 %v2485
      %v2587 = vunpack.c.l.b16 %v2486
      %v2588 = vunpack.c.l.b16 %v2487
      %v2589 = vunpack.c.l.b16 %v2488
      %v2590 = vunpack.c.l.b16 %v2489
      %v2591 = vunpack.c.l.b16 %v2490
      %v2592 = vunpack.c.l.b16 %v2491
      %v2593 = vunpack.c.l.b16 %v2492
      %v2594 = vpack.c.b16 %v2587, %v2586
      %v2595 = vpack.c.b16 %v2589, %v2588
      %v2596 = vpack.c.b16 %v2591, %v2590
      %v2597 = vpack.c.b16 %v2593, %v2592
      %v2599 = vsel %vm1263, %v2594, 0
      %v2602 = vsel %vm1263, %v2595, 0
      %v2605 = vsel %vm1263, %v2596, 0
      %v2608 = vsel %vm1263, %v2597, 0
      %v2611 = vsel %vm2545, %v2510, 0
      %2613 = vmatpush.bf16.msra.mxu0 0
      %2614 = vmatpush.bf16.msra.mxu0 0
      %2615 = vmatpush.bf16.msra.mxu0 0
      %2616 = vmatpush.bf16.msra.mxu0 0
      %2617 = vmatpush.bf16.msra.mxu0 0
      %2618 = vmatpush.bf16.msra.mxu0 0
      %2619 = vmatpush.bf16.msra.mxu0 0
      %2620 = vmatpush.bf16.msra.mxu0 %v2611
      %2621 = vmatmul.bf16.gmra.mxu0 %v2599
      %v2622 = vpop.f32.mrf.mxu0
      %v2623 = vadd.f32 0.0, %v2622
      %v2624 = vpop.f32.mrf.mxu0
      %v2625 = vadd.f32 0.0, %v2624
      %2626 = vmatmul.bf16.gmra.mxu0 %v2602
      %v2627 = vpop.f32.mrf.mxu0
      %v2628 = vadd.f32 0.0, %v2627
      %v2629 = vpop.f32.mrf.mxu0
      %v2630 = vadd.f32 0.0, %v2629
      %2631 = vmatmul.bf16.gmra.mxu0 %v2605
      %v2632 = vpop.f32.mrf.mxu0
      %v2633 = vadd.f32 0.0, %v2632
      %v2634 = vpop.f32.mrf.mxu0
      %v2635 = vadd.f32 0.0, %v2634
      %2636 = vmatmul.bf16.gmra.mxu0 %v2608
      %v2637 = vpop.f32.mrf.mxu0
      %v2638 = vadd.f32 0.0, %v2637
      %v2639 = vpop.f32.mrf.mxu0
      %v2640 = vadd.f32 0.0, %v2639
      %2641 = vdwg.mxu0
      %v2650 = vunpack.c.l.b16 %v2493
      %v2651 = vunpack.c.l.b16 %v2494
      %v2652 = vunpack.c.l.b16 %v2495
      %v2653 = vunpack.c.l.b16 %v2496
      %v2654 = vunpack.c.l.b16 %v2497
      %v2655 = vunpack.c.l.b16 %v2498
      %v2656 = vunpack.c.l.b16 %v2499
      %v2657 = vunpack.c.l.b16 %v2500
      %v2658 = vpack.c.b16 %v2651, %v2650
      %v2659 = vpack.c.b16 %v2653, %v2652
      %v2660 = vpack.c.b16 %v2655, %v2654
      %v2661 = vpack.c.b16 %v2657, %v2656
      %v2663 = vsel %vm1263, %v2658, 0
      %v2666 = vsel %vm1263, %v2659, 0
      %v2669 = vsel %vm1263, %v2660, 0
      %v2672 = vsel %vm1263, %v2661, 0
      %v2675 = vsel %vm2545, %v2511, 0
      %2677 = vmatpush.bf16.msra.mxu0 0
      %2678 = vmatpush.bf16.msra.mxu0 0
      %2679 = vmatpush.bf16.msra.mxu0 0
      %2680 = vmatpush.bf16.msra.mxu0 0
      %2681 = vmatpush.bf16.msra.mxu0 0
      %2682 = vmatpush.bf16.msra.mxu0 0
      %2683 = vmatpush.bf16.msra.mxu0 0
      %2684 = vmatpush.bf16.msra.mxu0 %v2675
      %2685 = vmatmul.bf16.gmra.mxu0 %v2663
      %v2686 = vpop.f32.mrf.mxu0
      %v2687 = vadd.f32 0.0, %v2686
      %v2688 = vpop.f32.mrf.mxu0
      %v2689 = vadd.f32 0.0, %v2688
      %2690 = vmatmul.bf16.gmra.mxu0 %v2666
      %v2691 = vpop.f32.mrf.mxu0
      %v2692 = vadd.f32 0.0, %v2691
      %v2693 = vpop.f32.mrf.mxu0
      %v2694 = vadd.f32 0.0, %v2693
      %2695 = vmatmul.bf16.gmra.mxu0 %v2669
      %v2696 = vpop.f32.mrf.mxu0
      %v2697 = vadd.f32 0.0, %v2696
      %v2698 = vpop.f32.mrf.mxu0
      %v2699 = vadd.f32 0.0, %v2698
      %2700 = vmatmul.bf16.gmra.mxu0 %v2672
      %v2701 = vpop.f32.mrf.mxu0
      %v2702 = vadd.f32 0.0, %v2701
      %v2703 = vpop.f32.mrf.mxu0
      %v2704 = vadd.f32 0.0, %v2703
      %2705 = vdwg.mxu0
      %v2714 = vunpack.c.l.b16 %v2501
      %v2715 = vunpack.c.l.b16 %v2502
      %v2716 = vunpack.c.l.b16 %v2503
      %v2717 = vunpack.c.l.b16 %v2504
      %v2718 = vunpack.c.l.b16 %v2505
      %v2719 = vunpack.c.l.b16 %v2506
      %v2720 = vunpack.c.l.b16 %v2507
      %v2721 = vunpack.c.l.b16 %v2508
      %v2722 = vpack.c.b16 %v2715, %v2714
      %v2723 = vpack.c.b16 %v2717, %v2716
      %v2724 = vpack.c.b16 %v2719, %v2718
      %v2725 = vpack.c.b16 %v2721, %v2720
      %v2727 = vsel %vm1263, %v2722, 0
      %v2730 = vsel %vm1263, %v2723, 0
      %v2733 = vsel %vm1263, %v2724, 0
      %v2736 = vsel %vm1263, %v2725, 0
      %v2739 = vsel %vm2545, %v2512, 0
      %2741 = vmatpush.bf16.msra.mxu0 0
      %2742 = vmatpush.bf16.msra.mxu0 0
      %2743 = vmatpush.bf16.msra.mxu0 0
      %2744 = vmatpush.bf16.msra.mxu0 0
      %2745 = vmatpush.bf16.msra.mxu0 0
      %2746 = vmatpush.bf16.msra.mxu0 0
      %2747 = vmatpush.bf16.msra.mxu0 0
      %2748 = vmatpush.bf16.msra.mxu0 %v2739
      %2749 = vmatmul.bf16.gmra.mxu0 %v2727
      %v2750 = vpop.f32.mrf.mxu0
      %v2751 = vadd.f32 0.0, %v2750
      %v2752 = vpop.f32.mrf.mxu0
      %v2753 = vadd.f32 0.0, %v2752
      %2754 = vmatmul.bf16.gmra.mxu0 %v2730
      %v2755 = vpop.f32.mrf.mxu0
      %v2756 = vadd.f32 0.0, %v2755
      %v2757 = vpop.f32.mrf.mxu0
      %v2758 = vadd.f32 0.0, %v2757
      %2759 = vmatmul.bf16.gmra.mxu0 %v2733
      %v2760 = vpop.f32.mrf.mxu0
      %v2761 = vadd.f32 0.0, %v2760
      %v2762 = vpop.f32.mrf.mxu0
      %v2763 = vadd.f32 0.0, %v2762
      %2764 = vmatmul.bf16.gmra.mxu0 %v2736
      %v2765 = vpop.f32.mrf.mxu0
      %v2766 = vadd.f32 0.0, %v2765
      %v2767 = vpop.f32.mrf.mxu0
      %v2768 = vadd.f32 0.0, %v2767
      %2769 = vdwg.mxu0
      %v2770 = vsel %vm904, %v2559, 0.0
      %v2771 = vsel %vm904, %v2623, 0.0
      %v2772 = vadd.f32 %v2770, %v2771
      %v2773 = vsel %vm904, %v2687, 0.0
      %v2774 = vadd.f32 %v2772, %v2773
      %v2775 = vsel %vm904, %v2751, 0.0
      %v2776 = vadd.f32 %v2774, %v2775
      %v2777 = vsel %vm904, %v2561, 0.0
      %v2778 = vsel %vm904, %v2625, 0.0
      %v2779 = vadd.f32 %v2777, %v2778
      %v2780 = vsel %vm904, %v2689, 0.0
      %v2781 = vadd.f32 %v2779, %v2780
      %v2782 = vsel %vm904, %v2753, 0.0
      %v2783 = vadd.f32 %v2781, %v2782
      %v2784 = vsel %vm904, %v2564, 0.0
      %v2785 = vsel %vm904, %v2628, 0.0
      %v2786 = vadd.f32 %v2784, %v2785
      %v2787 = vsel %vm904, %v2692, 0.0
      %v2788 = vadd.f32 %v2786, %v2787
      %v2789 = vsel %vm904, %v2756, 0.0
      %v2790 = vadd.f32 %v2788, %v2789
      %v2791 = vsel %vm904, %v2566, 0.0
      %v2792 = vsel %vm904, %v2630, 0.0
      %v2793 = vadd.f32 %v2791, %v2792
      %v2794 = vsel %vm904, %v2694, 0.0
      %v2795 = vadd.f32 %v2793, %v2794
      %v2796 = vsel %vm904, %v2758, 0.0
      %v2797 = vadd.f32 %v2795, %v2796
      %v2798 = vsel %vm904, %v2569, 0.0
      %v2799 = vsel %vm904, %v2633, 0.0
      %v2800 = vadd.f32 %v2798, %v2799
      %v2801 = vsel %vm904, %v2697, 0.0
      %v2802 = vadd.f32 %v2800, %v2801
      %v2803 = vsel %vm904, %v2761, 0.0
      %v2804 = vadd.f32 %v2802, %v2803
      %v2805 = vsel %vm904, %v2571, 0.0
      %v2806 = vsel %vm904, %v2635, 0.0
      %v2807 = vadd.f32 %v2805, %v2806
      %v2808 = vsel %vm904, %v2699, 0.0
      %v2809 = vadd.f32 %v2807, %v2808
      %v2810 = vsel %vm904, %v2763, 0.0
      %v2811 = vadd.f32 %v2809, %v2810
      %v2812 = vsel %vm904, %v2574, 0.0
      %v2813 = vsel %vm904, %v2638, 0.0
      %v2814 = vadd.f32 %v2812, %v2813
      %v2815 = vsel %vm904, %v2702, 0.0
      %v2816 = vadd.f32 %v2814, %v2815
      %v2817 = vsel %vm904, %v2766, 0.0
      %v2818 = vadd.f32 %v2816, %v2817
      %v2819 = vsel %vm904, %v2576, 0.0
      %v2820 = vsel %vm904, %v2640, 0.0
      %v2821 = vadd.f32 %v2819, %v2820
      %v2822 = vsel %vm904, %v2704, 0.0
      %v2823 = vadd.f32 %v2821, %v2822
      %v2824 = vsel %vm904, %v2768, 0.0
      %v2825 = vadd.f32 %v2823, %v2824
      %v2826 = vld [vmem:[%s800] sm:$0x1]
      %v2828 = vperm.slane %v2826, 0
      %v2830 = vadd.f32 %v2776, %v2828
      %v2831 = vadd.f32 %v2783, %v2828
      %v2832 = vadd.f32 %v2790, %v2828
      %v2833 = vadd.f32 %v2797, %v2828
      %v2834 = vadd.f32 %v2804, %v2828
      %v2835 = vadd.f32 %v2811, %v2828
      %v2836 = vadd.f32 %v2818, %v2828
      %v2837 = vadd.f32 %v2825, %v2828
      %v2838 = vadd.f32 %v856, %v2830
      %v2839 = vadd.f32 %v857, %v2831
      %v2840 = vadd.f32 %v858, %v2832
      %v2841 = vadd.f32 %v859, %v2833
      %v2842 = vadd.f32 %v860, %v2834
      %v2843 = vadd.f32 %v861, %v2835
      %v2844 = vadd.f32 %v862, %v2836
      %v2845 = vadd.f32 %v863, %v2837
      %v2846 = vld [vmem:[%s803] sm:$0x1]
      %v2847 = vld [vmem:[%s806] sm:$0x1]
      %v2848 = vsel %vm904, %v2838, 0.0
      %2849 = vadd.xlane.f32.xlu0 %v2848
      %v2850 = vpop.xlane.xlu0 %2849
      %v2851 = vsel %vm904, %v2839, 0.0
      %2852 = vadd.xlane.f32.xlu0 %v2851
      %v2853 = vpop.xlane.xlu0 %2852
      %v2854 = vsel %vm904, %v2840, 0.0
      %2855 = vadd.xlane.f32.xlu0 %v2854
      %v2856 = vpop.xlane.xlu0 %2855
      %v2857 = vsel %vm904, %v2841, 0.0
      %2858 = vadd.xlane.f32.xlu0 %v2857
      %v2859 = vpop.xlane.xlu0 %2858
      %v2860 = vsel %vm904, %v2842, 0.0
      %2861 = vadd.xlane.f32.xlu0 %v2860
      %v2862 = vpop.xlane.xlu0 %2861
      %v2863 = vsel %vm904, %v2843, 0.0
      %2864 = vadd.xlane.f32.xlu0 %v2863
      %v2865 = vpop.xlane.xlu0 %2864
      %v2866 = vsel %vm904, %v2844, 0.0
      %2867 = vadd.xlane.f32.xlu0 %v2866
      %v2868 = vpop.xlane.xlu0 %2867
      %v2869 = vsel %vm904, %v2845, 0.0
      %2870 = vadd.xlane.f32.xlu0 %v2869
      %v2871 = vpop.xlane.xlu0 %2870
      %v2872 = vrcp.pop 32.0
      %v2873 = vmul.f32 32.0, %v2872
      %v2874 = vsub.f32 1.0, %v2873
      %v2875 = vmul.f32 %v2872, %v2874
      %v2876 = vadd.f32 %v2872, %v2875
      %vm2877 = vweird.f32 %v2872
      %v2878 = vsel %vm2877, %v2872, %v2876
      %v2879 = vmul.f32 %v2850, %v2878
      %v2880 = vmul.f32 %v2853, %v2878
      %v2881 = vmul.f32 %v2856, %v2878
      %v2882 = vmul.f32 %v2859, %v2878
      %v2883 = vmul.f32 %v2862, %v2878
      %v2884 = vmul.f32 %v2865, %v2878
      %v2885 = vmul.f32 %v2868, %v2878
      %v2886 = vmul.f32 %v2871, %v2878
      %v2887 = vsub.f32 %v2838, %v2879
      %v2888 = vsub.f32 %v2839, %v2880
      %v2889 = vsub.f32 %v2840, %v2881
      %v2890 = vsub.f32 %v2841, %v2882
      %v2891 = vsub.f32 %v2842, %v2883
      %v2892 = vsub.f32 %v2843, %v2884
      %v2893 = vsub.f32 %v2844, %v2885
      %v2894 = vsub.f32 %v2845, %v2886
      %v2895 = vmul.f32 %v2887, %v2887
      %v2896 = vmul.f32 %v2888, %v2888
      %v2897 = vmul.f32 %v2889, %v2889
      %v2898 = vmul.f32 %v2890, %v2890
      %v2899 = vmul.f32 %v2891, %v2891
      %v2900 = vmul.f32 %v2892, %v2892
      %v2901 = vmul.f32 %v2893, %v2893
      %v2902 = vmul.f32 %v2894, %v2894
      %v2903 = vsel %vm904, %v2895, 0.0
      %2904 = vadd.xlane.f32.xlu0 %v2903
      %v2905 = vpop.xlane.xlu0 %2904
      %v2906 = vsel %vm904, %v2896, 0.0
      %2907 = vadd.xlane.f32.xlu0 %v2906
      %v2908 = vpop.xlane.xlu0 %2907
      %v2909 = vsel %vm904, %v2897, 0.0
      %2910 = vadd.xlane.f32.xlu0 %v2909
      %v2911 = vpop.xlane.xlu0 %2910
      %v2912 = vsel %vm904, %v2898, 0.0
      %2913 = vadd.xlane.f32.xlu0 %v2912
      %v2914 = vpop.xlane.xlu0 %2913
      %v2915 = vsel %vm904, %v2899, 0.0
      %2916 = vadd.xlane.f32.xlu0 %v2915
      %v2917 = vpop.xlane.xlu0 %2916
      %v2918 = vsel %vm904, %v2900, 0.0
      %2919 = vadd.xlane.f32.xlu0 %v2918
      %v2920 = vpop.xlane.xlu0 %2919
      %v2921 = vsel %vm904, %v2901, 0.0
      %2922 = vadd.xlane.f32.xlu0 %v2921
      %v2923 = vpop.xlane.xlu0 %2922
      %v2924 = vsel %vm904, %v2902, 0.0
      %2925 = vadd.xlane.f32.xlu0 %v2924
      %v2926 = vpop.xlane.xlu0 %2925
      %v2927 = vmul.f32 %v2905, %v2878
      %v2928 = vmul.f32 %v2908, %v2878
      %v2929 = vmul.f32 %v2911, %v2878
      %v2930 = vmul.f32 %v2914, %v2878
      %v2931 = vmul.f32 %v2917, %v2878
      %v2932 = vmul.f32 %v2920, %v2878
      %v2933 = vmul.f32 %v2923, %v2878
      %v2934 = vmul.f32 %v2926, %v2878
      %v2935 = vadd.f32 %v2927, 1e-05
      %v2936 = vadd.f32 %v2928, 1e-05
      %v2937 = vadd.f32 %v2929, 1e-05
      %v2938 = vadd.f32 %v2930, 1e-05
      %v2939 = vadd.f32 %v2931, 1e-05
      %v2940 = vadd.f32 %v2932, 1e-05
      %v2941 = vadd.f32 %v2933, 1e-05
      %v2942 = vadd.f32 %v2934, 1e-05
      %v2943 = vrsqrt.pop %v2935
      %v2944 = vmul.f32 %v2943, %v2935
      %v2945 = vmul.f32 %v2944, %v2943
      %v2946 = vmul.f32 0.5, %v2945
      %v2947 = vsub.f32 1.5, %v2946
      %v2948 = vmul.f32 %v2943, %v2947
      %vm2949 = vweird.f32 %v2935
      %vm2950 = vweird.f32 %v2943
      %vm2951 = vmor %vm2949, %vm2950
      %v2952 = vsel %vm2951, %v2943, %v2948
      %v2953 = vrsqrt.pop %v2936
      %v2954 = vmul.f32 %v2953, %v2936
      %v2955 = vmul.f32 %v2954, %v2953
      %v2956 = vmul.f32 0.5, %v2955
      %v2957 = vsub.f32 1.5, %v2956
      %v2958 = vmul.f32 %v2953, %v2957
      %vm2959 = vweird.f32 %v2936
      %vm2960 = vweird.f32 %v2953
      %vm2961 = vmor %vm2959, %vm2960
      %v2962 = vsel %vm2961, %v2953, %v2958
      %v2963 = vrsqrt.pop %v2937
      %v2964 = vmul.f32 %v2963, %v2937
      %v2965 = vmul.f32 %v2964, %v2963
      %v2966 = vmul.f32 0.5, %v2965
      %v2967 = vsub.f32 1.5, %v2966
      %v2968 = vmul.f32 %v2963, %v2967
      %vm2969 = vweird.f32 %v2937
      %vm2970 = vweird.f32 %v2963
      %vm2971 = vmor %vm2969, %vm2970
      %v2972 = vsel %vm2971, %v2963, %v2968
      %v2973 = vrsqrt.pop %v2938
      %v2974 = vmul.f32 %v2973, %v2938
      %v2975 = vmul.f32 %v2974, %v2973
      %v2976 = vmul.f32 0.5, %v2975
      %v2977 = vsub.f32 1.5, %v2976
      %v2978 = vmul.f32 %v2973, %v2977
      %vm2979 = vweird.f32 %v2938
      %vm2980 = vweird.f32 %v2973
      %vm2981 = vmor %vm2979, %vm2980
      %v2982 = vsel %vm2981, %v2973, %v2978
      %v2983 = vrsqrt.pop %v2939
      %v2984 = vmul.f32 %v2983, %v2939
      %v2985 = vmul.f32 %v2984, %v2983
      %v2986 = vmul.f32 0.5, %v2985
      %v2987 = vsub.f32 1.5, %v2986
      %v2988 = vmul.f32 %v2983, %v2987
      %vm2989 = vweird.f32 %v2939
      %vm2990 = vweird.f32 %v2983
      %vm2991 = vmor %vm2989, %vm2990
      %v2992 = vsel %vm2991, %v2983, %v2988
      %v2993 = vrsqrt.pop %v2940
      %v2994 = vmul.f32 %v2993, %v2940
      %v2995 = vmul.f32 %v2994, %v2993
      %v2996 = vmul.f32 0.5, %v2995
      %v2997 = vsub.f32 1.5, %v2996
      %v2998 = vmul.f32 %v2993, %v2997
      %vm2999 = vweird.f32 %v2940
      %vm3000 = vweird.f32 %v2993
      %vm3001 = vmor %vm2999, %vm3000
      %v3002 = vsel %vm3001, %v2993, %v2998
      %v3003 = vrsqrt.pop %v2941
      %v3004 = vmul.f32 %v3003, %v2941
      %v3005 = vmul.f32 %v3004, %v3003
      %v3006 = vmul.f32 0.5, %v3005
      %v3007 = vsub.f32 1.5, %v3006
      %v3008 = vmul.f32 %v3003, %v3007
      %vm3009 = vweird.f32 %v2941
      %vm3010 = vweird.f32 %v3003
      %vm3011 = vmor %vm3009, %vm3010
      %v3012 = vsel %vm3011, %v3003, %v3008
      %v3013 = vrsqrt.pop %v2942
      %v3014 = vmul.f32 %v3013, %v2942
      %v3015 = vmul.f32 %v3014, %v3013
      %v3016 = vmul.f32 0.5, %v3015
      %v3017 = vsub.f32 1.5, %v3016
      %v3018 = vmul.f32 %v3013, %v3017
      %vm3019 = vweird.f32 %v2942
      %vm3020 = vweird.f32 %v3013
      %vm3021 = vmor %vm3019, %vm3020
      %v3022 = vsel %vm3021, %v3013, %v3018
      %v3023 = vmul.f32 %v2887, %v2952
      %v3024 = vmul.f32 %v2888, %v2962
      %v3025 = vmul.f32 %v2889, %v2972
      %v3026 = vmul.f32 %v2890, %v2982
      %v3027 = vmul.f32 %v2891, %v2992
      %v3028 = vmul.f32 %v2892, %v3002
      %v3029 = vmul.f32 %v2893, %v3012
      %v3030 = vmul.f32 %v2894, %v3022
      %v3032 = vperm.slane %v2846, 0
      %v3034 = vmul.f32 %v3023, %v3032
      %v3035 = vmul.f32 %v3024, %v3032
      %v3036 = vmul.f32 %v3025, %v3032
      %v3037 = vmul.f32 %v3026, %v3032
      %v3038 = vmul.f32 %v3027, %v3032
      %v3039 = vmul.f32 %v3028, %v3032
      %v3040 = vmul.f32 %v3029, %v3032
      %v3041 = vmul.f32 %v3030, %v3032
      %v3043 = vperm.slane %v2847, 0
      %v3045 = vadd.f32 %v3034, %v3043
      %v3046 = vadd.f32 %v3035, %v3043
      %v3047 = vadd.f32 %v3036, %v3043
      %v3048 = vadd.f32 %v3037, %v3043
      %v3049 = vadd.f32 %v3038, %v3043
      %v3050 = vadd.f32 %v3039, %v3043
      %v3051 = vadd.f32 %v3040, %v3043
      %v3052 = vadd.f32 %v3041, %v3043
      %v3053 = vpack.c.bf16 %v3046, %v3045
      %v3054 = vpack.c.bf16 %v3048, %v3047
      %v3055 = vpack.c.bf16 %v3050, %v3049
      %v3056 = vpack.c.bf16 %v3052, %v3051
      %v3057 = vld [vmem:[%s811] sm:$0xf]
      %v3058 = vld [vmem:[%s811 + $0x4] sm:$0xf]
      %v3059 = vld [vmem:[%s811 + $0x8] sm:$0xf]
      %v3060 = vld [vmem:[%s811 + $0xc] sm:$0xf]
      %v3061 = vld [vmem:[%s814] sm:$0x1]
      %v3063 = vperm.slane %v3061, 0
      %v3069 = vunpack.c.l.b16 %v3057
      %v3070 = vunpack.c.l.b16 %v3058
      %v3071 = vunpack.c.l.b16 %v3059
      %v3072 = vunpack.c.l.b16 %v3060
      %v3073 = vpack.c.b16 %v3070, %v3069
      %v3074 = vpack.c.b16 %v3072, %v3071
      %v3078 = vsel %vm904, %v3053, 0
      %v3081 = vsel %vm904, %v3054, 0
      %v3084 = vsel %vm904, %v3055, 0
      %v3087 = vsel %vm904, %v3056, 0
      %3089 = vmatpush.bf16.msra.mxu0 0
      %3090 = vmatpush.bf16.msra.mxu0 0
      %3091 = vmatpush.bf16.msra.mxu0 0
      %3092 = vmatpush.bf16.msra.mxu0 0
      %3093 = vmatpush.bf16.msra.mxu0 0
      %3094 = vmatpush.bf16.msra.mxu0 0
      %3095 = vmatpush.bf16.msra.mxu0 %v3074
      %3096 = vmatpush.bf16.msra.mxu0 %v3073
      %3097 = vmatmul.bf16.gmra.mxu0 %v3078
      %v3098 = vpop.f32.mrf.mxu0
      %v3099 = vadd.f32 %v3063, %v3098
      %v3100 = vpop.f32.mrf.mxu0
      %v3101 = vadd.f32 %v3063, %v3100
      %3102 = vmatmul.bf16.gmra.mxu0 %v3081
      %v3103 = vpop.f32.mrf.mxu0
      %v3104 = vadd.f32 %v3063, %v3103
      %v3105 = vpop.f32.mrf.mxu0
      %v3106 = vadd.f32 %v3063, %v3105
      %3107 = vmatmul.bf16.gmra.mxu0 %v3084
      %v3108 = vpop.f32.mrf.mxu0
      %v3109 = vadd.f32 %v3063, %v3108
      %v3110 = vpop.f32.mrf.mxu0
      %v3111 = vadd.f32 %v3063, %v3110
      %3112 = vmatmul.bf16.gmra.mxu0 %v3087
      %v3113 = vpop.f32.mrf.mxu0
      %v3114 = vadd.f32 %v3063, %v3113
      %v3115 = vpop.f32.mrf.mxu0
      %v3116 = vadd.f32 %v3063, %v3115
      %3117 = vdwg.mxu0
      %v3118 = vmax.f32 %v3099, 0.0
      %v3119 = vmax.f32 %v3101, 0.0
      %v3120 = vmax.f32 %v3104, 0.0
      %v3121 = vmax.f32 %v3106, 0.0
      %v3122 = vmax.f32 %v3109, 0.0
      %v3123 = vmax.f32 %v3111, 0.0
      %v3124 = vmax.f32 %v3114, 0.0
      %v3125 = vmax.f32 %v3116, 0.0
      %v3126 = vpack.c.bf16 %v3119, %v3118
      %v3127 = vpack.c.bf16 %v3121, %v3120
      %v3128 = vpack.c.bf16 %v3123, %v3122
      %v3129 = vpack.c.bf16 %v3125, %v3124
      %v3130 = vld [vmem:[%s819] sm:$0xf]
      %v3131 = vld [vmem:[%s819 + $0x4] sm:$0xf]
      %v3132 = vld [vmem:[%s819 + $0x8] sm:$0xf]
      %v3133 = vld [vmem:[%s819 + $0xc] sm:$0xf]
      %v3134 = vld [vmem:[%s819 + $0x10] sm:$0xf]
      %v3135 = vld [vmem:[%s819 + $0x14] sm:$0xf]
      %v3136 = vld [vmem:[%s819 + $0x18] sm:$0xf]
      %v3137 = vld [vmem:[%s819 + $0x1c] sm:$0xf]
      %v3138 = vld [vmem:[%s822] sm:$0x1]
      %v3140 = vperm.slane %v3138, 0
      %v3150 = vunpack.c.l.b16 %v3130
      %v3151 = vunpack.c.l.b16 %v3131
      %v3152 = vunpack.c.l.b16 %v3132
      %v3153 = vunpack.c.l.b16 %v3133
      %v3154 = vunpack.c.l.b16 %v3134
      %v3155 = vunpack.c.l.b16 %v3135
      %v3156 = vunpack.c.l.b16 %v3136
      %v3157 = vunpack.c.l.b16 %v3137
      %v3158 = vpack.c.b16 %v3151, %v3150
      %v3159 = vpack.c.b16 %v3153, %v3152
      %v3160 = vpack.c.b16 %v3155, %v3154
      %v3161 = vpack.c.b16 %v3157, %v3156
      %v3167 = vsel %vm1560, %v3126, 0
      %v3170 = vsel %vm1560, %v3127, 0
      %v3173 = vsel %vm1560, %v3128, 0
      %v3176 = vsel %vm1560, %v3129, 0
      %3178 = vmatpush.bf16.msra.mxu0 0
      %3179 = vmatpush.bf16.msra.mxu0 0
      %3180 = vmatpush.bf16.msra.mxu0 0
      %3181 = vmatpush.bf16.msra.mxu0 0
      %3182 = vmatpush.bf16.msra.mxu0 %v3161
      %3183 = vmatpush.bf16.msra.mxu0 %v3160
      %3184 = vmatpush.bf16.msra.mxu0 %v3159
      %3185 = vmatpush.bf16.msra.mxu0 %v3158
      %3186 = vmatmul.bf16.gmra.mxu0 %v3167
      %v3187 = vpop.f32.mrf.mxu0
      %v3188 = vadd.f32 %v3140, %v3187
      %v3189 = vpop.f32.mrf.mxu0
      %v3190 = vadd.f32 %v3140, %v3189
      %3191 = vmatmul.bf16.gmra.mxu0 %v3170
      %v3192 = vpop.f32.mrf.mxu0
      %v3193 = vadd.f32 %v3140, %v3192
      %v3194 = vpop.f32.mrf.mxu0
      %v3195 = vadd.f32 %v3140, %v3194
      %3196 = vmatmul.bf16.gmra.mxu0 %v3173
      %v3197 = vpop.f32.mrf.mxu0
      %v3198 = vadd.f32 %v3140, %v3197
      %v3199 = vpop.f32.mrf.mxu0
      %v3200 = vadd.f32 %v3140, %v3199
      %3201 = vmatmul.bf16.gmra.mxu0 %v3176
      %v3202 = vpop.f32.mrf.mxu0
      %v3203 = vadd.f32 %v3140, %v3202
      %v3204 = vpop.f32.mrf.mxu0
      %v3205 = vadd.f32 %v3140, %v3204
      %3206 = vdwg.mxu0
      %v3207 = vadd.f32 %v3045, %v3188
      %v3208 = vadd.f32 %v3046, %v3190
      %v3209 = vadd.f32 %v3047, %v3193
      %v3210 = vadd.f32 %v3048, %v3195
      %v3211 = vadd.f32 %v3049, %v3198
      %v3212 = vadd.f32 %v3050, %v3200
      %v3213 = vadd.f32 %v3051, %v3203
      %v3214 = vadd.f32 %v3052, %v3205
      %v3215 = vld [vmem:[%s825] sm:$0x1]
      %v3216 = vld [vmem:[%s828] sm:$0x1]
      %v3217 = vsel %vm904, %v3207, 0.0
      %3218 = vadd.xlane.f32.xlu0 %v3217
      %v3219 = vpop.xlane.xlu0 %3218
      %v3220 = vsel %vm904, %v3208, 0.0
      %3221 = vadd.xlane.f32.xlu0 %v3220
      %v3222 = vpop.xlane.xlu0 %3221
      %v3223 = vsel %vm904, %v3209, 0.0
      %3224 = vadd.xlane.f32.xlu0 %v3223
      %v3225 = vpop.xlane.xlu0 %3224
      %v3226 = vsel %vm904, %v3210, 0.0
      %3227 = vadd.xlane.f32.xlu0 %v3226
      %v3228 = vpop.xlane.xlu0 %3227
      %v3229 = vsel %vm904, %v3211, 0.0
      %3230 = vadd.xlane.f32.xlu0 %v3229
      %v3231 = vpop.xlane.xlu0 %3230
      %v3232 = vsel %vm904, %v3212, 0.0
      %3233 = vadd.xlane.f32.xlu0 %v3232
      %v3234 = vpop.xlane.xlu0 %3233
      %v3235 = vsel %vm904, %v3213, 0.0
      %3236 = vadd.xlane.f32.xlu0 %v3235
      %v3237 = vpop.xlane.xlu0 %3236
      %v3238 = vsel %vm904, %v3214, 0.0
      %3239 = vadd.xlane.f32.xlu0 %v3238
      %v3240 = vpop.xlane.xlu0 %3239
      %v3241 = vmul.f32 %v3219, %v2878
      %v3242 = vmul.f32 %v3222, %v2878
      %v3243 = vmul.f32 %v3225, %v2878
      %v3244 = vmul.f32 %v3228, %v2878
      %v3245 = vmul.f32 %v3231, %v2878
      %v3246 = vmul.f32 %v3234, %v2878
      %v3247 = vmul.f32 %v3237, %v2878
      %v3248 = vmul.f32 %v3240, %v2878
      %v3249 = vsub.f32 %v3207, %v3241
      %v3250 = vsub.f32 %v3208, %v3242
      %v3251 = vsub.f32 %v3209, %v3243
      %v3252 = vsub.f32 %v3210, %v3244
      %v3253 = vsub.f32 %v3211, %v3245
      %v3254 = vsub.f32 %v3212, %v3246
      %v3255 = vsub.f32 %v3213, %v3247
      %v3256 = vsub.f32 %v3214, %v3248
      %v3257 = vmul.f32 %v3249, %v3249
      %v3258 = vmul.f32 %v3250, %v3250
      %v3259 = vmul.f32 %v3251, %v3251
      %v3260 = vmul.f32 %v3252, %v3252
      %v3261 = vmul.f32 %v3253, %v3253
      %v3262 = vmul.f32 %v3254, %v3254
      %v3263 = vmul.f32 %v3255, %v3255
      %v3264 = vmul.f32 %v3256, %v3256
      %v3265 = vsel %vm904, %v3257, 0.0
      %3266 = vadd.xlane.f32.xlu0 %v3265
      %v3267 = vpop.xlane.xlu0 %3266
      %v3268 = vsel %vm904, %v3258, 0.0
      %3269 = vadd.xlane.f32.xlu0 %v3268
      %v3270 = vpop.xlane.xlu0 %3269
      %v3271 = vsel %vm904, %v3259, 0.0
      %3272 = vadd.xlane.f32.xlu0 %v3271
      %v3273 = vpop.xlane.xlu0 %3272
      %v3274 = vsel %vm904, %v3260, 0.0
      %3275 = vadd.xlane.f32.xlu0 %v3274
      %v3276 = vpop.xlane.xlu0 %3275
      %v3277 = vsel %vm904, %v3261, 0.0
      %3278 = vadd.xlane.f32.xlu0 %v3277
      %v3279 = vpop.xlane.xlu0 %3278
      %v3280 = vsel %vm904, %v3262, 0.0
      %3281 = vadd.xlane.f32.xlu0 %v3280
      %v3282 = vpop.xlane.xlu0 %3281
      %v3283 = vsel %vm904, %v3263, 0.0
      %3284 = vadd.xlane.f32.xlu0 %v3283
      %v3285 = vpop.xlane.xlu0 %3284
      %v3286 = vsel %vm904, %v3264, 0.0
      %3287 = vadd.xlane.f32.xlu0 %v3286
      %v3288 = vpop.xlane.xlu0 %3287
      %v3289 = vmul.f32 %v3267, %v2878
      %v3290 = vmul.f32 %v3270, %v2878
      %v3291 = vmul.f32 %v3273, %v2878
      %v3292 = vmul.f32 %v3276, %v2878
      %v3293 = vmul.f32 %v3279, %v2878
      %v3294 = vmul.f32 %v3282, %v2878
      %v3295 = vmul.f32 %v3285, %v2878
      %v3296 = vmul.f32 %v3288, %v2878
      %v3297 = vadd.f32 %v3289, 1e-05
      %v3298 = vadd.f32 %v3290, 1e-05
      %v3299 = vadd.f32 %v3291, 1e-05
      %v3300 = vadd.f32 %v3292, 1e-05
      %v3301 = vadd.f32 %v3293, 1e-05
      %v3302 = vadd.f32 %v3294, 1e-05
      %v3303 = vadd.f32 %v3295, 1e-05
      %v3304 = vadd.f32 %v3296, 1e-05
      %v3305 = vrsqrt.pop %v3297
      %v3306 = vmul.f32 %v3305, %v3297
      %v3307 = vmul.f32 %v3306, %v3305
      %v3308 = vmul.f32 0.5, %v3307
      %v3309 = vsub.f32 1.5, %v3308
      %v3310 = vmul.f32 %v3305, %v3309
      %vm3311 = vweird.f32 %v3297
      %vm3312 = vweird.f32 %v3305
      %vm3313 = vmor %vm3311, %vm3312
      %v3314 = vsel %vm3313, %v3305, %v3310
      %v3315 = vrsqrt.pop %v3298
      %v3316 = vmul.f32 %v3315, %v3298
      %v3317 = vmul.f32 %v3316, %v3315
      %v3318 = vmul.f32 0.5, %v3317
      %v3319 = vsub.f32 1.5, %v3318
      %v3320 = vmul.f32 %v3315, %v3319
      %vm3321 = vweird.f32 %v3298
      %vm3322 = vweird.f32 %v3315
      %vm3323 = vmor %vm3321, %vm3322
      %v3324 = vsel %vm3323, %v3315, %v3320
      %v3325 = vrsqrt.pop %v3299
      %v3326 = vmul.f32 %v3325, %v3299
      %v3327 = vmul.f32 %v3326, %v3325
      %v3328 = vmul.f32 0.5, %v3327
      %v3329 = vsub.f32 1.5, %v3328
      %v3330 = vmul.f32 %v3325, %v3329
      %vm3331 = vweird.f32 %v3299
      %vm3332 = vweird.f32 %v3325
      %vm3333 = vmor %vm3331, %vm3332
      %v3334 = vsel %vm3333, %v3325, %v3330
      %v3335 = vrsqrt.pop %v3300
      %v3336 = vmul.f32 %v3335, %v3300
      %v3337 = vmul.f32 %v3336, %v3335
      %v3338 = vmul.f32 0.5, %v3337
      %v3339 = vsub.f32 1.5, %v3338
      %v3340 = vmul.f32 %v3335, %v3339
      %vm3341 = vweird.f32 %v3300
      %vm3342 = vweird.f32 %v3335
      %vm3343 = vmor %vm3341, %vm3342
      %v3344 = vsel %vm3343, %v3335, %v3340
      %v3345 = vrsqrt.pop %v3301
      %v3346 = vmul.f32 %v3345, %v3301
      %v3347 = vmul.f32 %v3346, %v3345
      %v3348 = vmul.f32 0.5, %v3347
      %v3349 = vsub.f32 1.5, %v3348
      %v3350 = vmul.f32 %v3345, %v3349
      %vm3351 = vweird.f32 %v3301
      %vm3352 = vweird.f32 %v3345
      %vm3353 = vmor %vm3351, %vm3352
      %v3354 = vsel %vm3353, %v3345, %v3350
      %v3355 = vrsqrt.pop %v3302
      %v3356 = vmul.f32 %v3355, %v3302
      %v3357 = vmul.f32 %v3356, %v3355
      %v3358 = vmul.f32 0.5, %v3357
      %v3359 = vsub.f32 1.5, %v3358
      %v3360 = vmul.f32 %v3355, %v3359
      %vm3361 = vweird.f32 %v3302
      %vm3362 = vweird.f32 %v3355
      %vm3363 = vmor %vm3361, %vm3362
      %v3364 = vsel %vm3363, %v3355, %v3360
      %v3365 = vrsqrt.pop %v3303
      %v3366 = vmul.f32 %v3365, %v3303
      %v3367 = vmul.f32 %v3366, %v3365
      %v3368 = vmul.f32 0.5, %v3367
      %v3369 = vsub.f32 1.5, %v3368
      %v3370 = vmul.f32 %v3365, %v3369
      %vm3371 = vweird.f32 %v3303
      %vm3372 = vweird.f32 %v3365
      %vm3373 = vmor %vm3371, %vm3372
      %v3374 = vsel %vm3373, %v3365, %v3370
      %v3375 = vrsqrt.pop %v3304
      %v3376 = vmul.f32 %v3375, %v3304
      %v3377 = vmul.f32 %v3376, %v3375
      %v3378 = vmul.f32 0.5, %v3377
      %v3379 = vsub.f32 1.5, %v3378
      %v3380 = vmul.f32 %v3375, %v3379
      %vm3381 = vweird.f32 %v3304
      %vm3382 = vweird.f32 %v3375
      %vm3383 = vmor %vm3381, %vm3382
      %v3384 = vsel %vm3383, %v3375, %v3380
      %v3385 = vmul.f32 %v3249, %v3314
      %v3386 = vmul.f32 %v3250, %v3324
      %v3387 = vmul.f32 %v3251, %v3334
      %v3388 = vmul.f32 %v3252, %v3344
      %v3389 = vmul.f32 %v3253, %v3354
      %v3390 = vmul.f32 %v3254, %v3364
      %v3391 = vmul.f32 %v3255, %v3374
      %v3392 = vmul.f32 %v3256, %v3384
      %v3394 = vperm.slane %v3215, 0
      %v3396 = vmul.f32 %v3385, %v3394
      %v3397 = vmul.f32 %v3386, %v3394
      %v3398 = vmul.f32 %v3387, %v3394
      %v3399 = vmul.f32 %v3388, %v3394
      %v3400 = vmul.f32 %v3389, %v3394
      %v3401 = vmul.f32 %v3390, %v3394
      %v3402 = vmul.f32 %v3391, %v3394
      %v3403 = vmul.f32 %v3392, %v3394
      %v3405 = vperm.slane %v3216, 0
      %v3407 = vadd.f32 %v3396, %v3405
      %v3408 = vadd.f32 %v3397, %v3405
      %v3409 = vadd.f32 %v3398, %v3405
      %v3410 = vadd.f32 %v3399, %v3405
      %v3411 = vadd.f32 %v3400, %v3405
      %v3412 = vadd.f32 %v3401, %v3405
      %v3413 = vadd.f32 %v3402, %v3405
      %v3414 = vadd.f32 %v3403, %v3405
      %3415 = vst.msk [vmem:[#allocation2] sm:$0xff] %vm904, %v3407
      %3416 = vst.msk [vmem:[#allocation2 + $0x8] sm:$0xff] %vm904, %v3408
      %3417 = vst.msk [vmem:[#allocation2 + $0x10] sm:$0xff] %vm904, %v3409
      %3418 = vst.msk [vmem:[#allocation2 + $0x18] sm:$0xff] %vm904, %v3410
      %3419 = vst.msk [vmem:[#allocation2 + $0x20] sm:$0xff] %vm904, %v3411
      %3420 = vst.msk [vmem:[#allocation2 + $0x28] sm:$0xff] %vm904, %v3412
      %3421 = vst.msk [vmem:[#allocation2 + $0x30] sm:$0xff] %vm904, %v3413
      %3422 = vst.msk [vmem:[#allocation2 + $0x38] sm:$0xff] %vm904, %v3414
      %p3423 = scmp.eq.s32.totalorder %s34, 1
      // Predicated region
      $region97: #{tpu_custom_call.1} parent=91 // pred_check
        %p3424 = pneg %p3423
      $region98: #{tpu_custom_call.1} parent=91 // pred_check_branch
        %3426 = sbr.rel (%p3424) target = $region100
      $region99: #{tpu_custom_call.1} parent=91 // pred_region
        %v3427 = vld [vmem:[%s16] sm:$0x1]
        %v3428 = vld [vmem:[%s17] sm:$0x1]
        %v3429 = vsel %vm904, %v3407, 0.0
        %3430 = vadd.xlane.f32.xlu0 %v3429
        %v3431 = vpop.xlane.xlu0 %3430
        %v3432 = vsel %vm904, %v3408, 0.0
        %3433 = vadd.xlane.f32.xlu0 %v3432
        %v3434 = vpop.xlane.xlu0 %3433
        %v3435 = vsel %vm904, %v3409, 0.0
        %3436 = vadd.xlane.f32.xlu0 %v3435
        %v3437 = vpop.xlane.xlu0 %3436
        %v3438 = vsel %vm904, %v3410, 0.0
        %3439 = vadd.xlane.f32.xlu0 %v3438
        %v3440 = vpop.xlane.xlu0 %3439
        %v3441 = vsel %vm904, %v3411, 0.0
        %3442 = vadd.xlane.f32.xlu0 %v3441
        %v3443 = vpop.xlane.xlu0 %3442
        %v3444 = vsel %vm904, %v3412, 0.0
        %3445 = vadd.xlane.f32.xlu0 %v3444
        %v3446 = vpop.xlane.xlu0 %3445
        %v3447 = vsel %vm904, %v3413, 0.0
        %3448 = vadd.xlane.f32.xlu0 %v3447
        %v3449 = vpop.xlane.xlu0 %3448
        %v3450 = vsel %vm904, %v3414, 0.0
        %3451 = vadd.xlane.f32.xlu0 %v3450
        %v3452 = vpop.xlane.xlu0 %3451
        %v3453 = vmul.f32 %v3431, %v2878
        %v3454 = vmul.f32 %v3434, %v2878
        %v3455 = vmul.f32 %v3437, %v2878
        %v3456 = vmul.f32 %v3440, %v2878
        %v3457 = vmul.f32 %v3443, %v2878
        %v3458 = vmul.f32 %v3446, %v2878
        %v3459 = vmul.f32 %v3449, %v2878
        %v3460 = vmul.f32 %v3452, %v2878
        %v3461 = vsub.f32 %v3407, %v3453
        %v3462 = vsub.f32 %v3408, %v3454
        %v3463 = vsub.f32 %v3409, %v3455
        %v3464 = vsub.f32 %v3410, %v3456
        %v3465 = vsub.f32 %v3411, %v3457
        %v3466 = vsub.f32 %v3412, %v3458
        %v3467 = vsub.f32 %v3413, %v3459
        %v3468 = vsub.f32 %v3414, %v3460
        %v3469 = vmul.f32 %v3461, %v3461
        %v3470 = vmul.f32 %v3462, %v3462
        %v3471 = vmul.f32 %v3463, %v3463
        %v3472 = vmul.f32 %v3464, %v3464
        %v3473 = vmul.f32 %v3465, %v3465
        %v3474 = vmul.f32 %v3466, %v3466
        %v3475 = vmul.f32 %v3467, %v3467
        %v3476 = vmul.f32 %v3468, %v3468
        %v3477 = vsel %vm904, %v3469, 0.0
        %3478 = vadd.xlane.f32.xlu0 %v3477
        %v3479 = vpop.xlane.xlu0 %3478
        %v3480 = vsel %vm904, %v3470, 0.0
        %3481 = vadd.xlane.f32.xlu0 %v3480
        %v3482 = vpop.xlane.xlu0 %3481
        %v3483 = vsel %vm904, %v3471, 0.0
        %3484 = vadd.xlane.f32.xlu0 %v3483
        %v3485 = vpop.xlane.xlu0 %3484
        %v3486 = vsel %vm904, %v3472, 0.0
        %3487 = vadd.xlane.f32.xlu0 %v3486
        %v3488 = vpop.xlane.xlu0 %3487
        %v3489 = vsel %vm904, %v3473, 0.0
        %3490 = vadd.xlane.f32.xlu0 %v3489
        %v3491 = vpop.xlane.xlu0 %3490
        %v3492 = vsel %vm904, %v3474, 0.0
        %3493 = vadd.xlane.f32.xlu0 %v3492
        %v3494 = vpop.xlane.xlu0 %3493
        %v3495 = vsel %vm904, %v3475, 0.0
        %3496 = vadd.xlane.f32.xlu0 %v3495
        %v3497 = vpop.xlane.xlu0 %3496
        %v3498 = vsel %vm904, %v3476, 0.0
        %3499 = vadd.xlane.f32.xlu0 %v3498
        %v3500 = vpop.xlane.xlu0 %3499
        %v3501 = vmul.f32 %v3479, %v2878
        %v3502 = vmul.f32 %v3482, %v2878
        %v3503 = vmul.f32 %v3485, %v2878
        %v3504 = vmul.f32 %v3488, %v2878
        %v3505 = vmul.f32 %v3491, %v2878
        %v3506 = vmul.f32 %v3494, %v2878
        %v3507 = vmul.f32 %v3497, %v2878
        %v3508 = vmul.f32 %v3500, %v2878
        %v3509 = vadd.f32 %v3501, 1e-05
        %v3510 = vadd.f32 %v3502, 1e-05
        %v3511 = vadd.f32 %v3503, 1e-05
        %v3512 = vadd.f32 %v3504, 1e-05
        %v3513 = vadd.f32 %v3505, 1e-05
        %v3514 = vadd.f32 %v3506, 1e-05
        %v3515 = vadd.f32 %v3507, 1e-05
        %v3516 = vadd.f32 %v3508, 1e-05
        %v3517 = vrsqrt.pop %v3509
        %v3518 = vmul.f32 %v3517, %v3509
        %v3519 = vmul.f32 %v3518, %v3517
        %v3520 = vmul.f32 0.5, %v3519
        %v3521 = vsub.f32 1.5, %v3520
        %v3522 = vmul.f32 %v3517, %v3521
        %vm3523 = vweird.f32 %v3509
        %vm3524 = vweird.f32 %v3517
        %vm3525 = vmor %vm3523, %vm3524
        %v3526 = vsel %vm3525, %v3517, %v3522
        %v3527 = vrsqrt.pop %v3510
        %v3528 = vmul.f32 %v3527, %v3510
        %v3529 = vmul.f32 %v3528, %v3527
        %v3530 = vmul.f32 0.5, %v3529
        %v3531 = vsub.f32 1.5, %v3530
        %v3532 = vmul.f32 %v3527, %v3531
        %vm3533 = vweird.f32 %v3510
        %vm3534 = vweird.f32 %v3527
        %vm3535 = vmor %vm3533, %vm3534
        %v3536 = vsel %vm3535, %v3527, %v3532
        %v3537 = vrsqrt.pop %v3511
        %v3538 = vmul.f32 %v3537, %v3511
        %v3539 = vmul.f32 %v3538, %v3537
        %v3540 = vmul.f32 0.5, %v3539
        %v3541 = vsub.f32 1.5, %v3540
        %v3542 = vmul.f32 %v3537, %v3541
        %vm3543 = vweird.f32 %v3511
        %vm3544 = vweird.f32 %v3537
        %vm3545 = vmor %vm3543, %vm3544
        %v3546 = vsel %vm3545, %v3537, %v3542
        %v3547 = vrsqrt.pop %v3512
        %v3548 = vmul.f32 %v3547, %v3512
        %v3549 = vmul.f32 %v3548, %v3547
        %v3550 = vmul.f32 0.5, %v3549
        %v3551 = vsub.f32 1.5, %v3550
        %v3552 = vmul.f32 %v3547, %v3551
        %vm3553 = vweird.f32 %v3512
        %vm3554 = vweird.f32 %v3547
        %vm3555 = vmor %vm3553, %vm3554
        %v3556 = vsel %vm3555, %v3547, %v3552
        %v3557 = vrsqrt.pop %v3513
        %v3558 = vmul.f32 %v3557, %v3513
        %v3559 = vmul.f32 %v3558, %v3557
        %v3560 = vmul.f32 0.5, %v3559
        %v3561 = vsub.f32 1.5, %v3560
        %v3562 = vmul.f32 %v3557, %v3561
        %vm3563 = vweird.f32 %v3513
        %vm3564 = vweird.f32 %v3557
        %vm3565 = vmor %vm3563, %vm3564
        %v3566 = vsel %vm3565, %v3557, %v3562
        %v3567 = vrsqrt.pop %v3514
        %v3568 = vmul.f32 %v3567, %v3514
        %v3569 = vmul.f32 %v3568, %v3567
        %v3570 = vmul.f32 0.5, %v3569
        %v3571 = vsub.f32 1.5, %v3570
        %v3572 = vmul.f32 %v3567, %v3571
        %vm3573 = vweird.f32 %v3514
        %vm3574 = vweird.f32 %v3567
        %vm3575 = vmor %vm3573, %vm3574
        %v3576 = vsel %vm3575, %v3567, %v3572
        %v3577 = vrsqrt.pop %v3515
        %v3578 = vmul.f32 %v3577, %v3515
        %v3579 = vmul.f32 %v3578, %v3577
        %v3580 = vmul.f32 0.5, %v3579
        %v3581 = vsub.f32 1.5, %v3580
        %v3582 = vmul.f32 %v3577, %v3581
        %vm3583 = vweird.f32 %v3515
        %vm3584 = vweird.f32 %v3577
        %vm3585 = vmor %vm3583, %vm3584
        %v3586 = vsel %vm3585, %v3577, %v3582
        %v3587 = vrsqrt.pop %v3516
        %v3588 = vmul.f32 %v3587, %v3516
        %v3589 = vmul.f32 %v3588, %v3587
        %v3590 = vmul.f32 0.5, %v3589
        %v3591 = vsub.f32 1.5, %v3590
        %v3592 = vmul.f32 %v3587, %v3591
        %vm3593 = vweird.f32 %v3516
        %vm3594 = vweird.f32 %v3587
        %vm3595 = vmor %vm3593, %vm3594
        %v3596 = vsel %vm3595, %v3587, %v3592
        %v3597 = vmul.f32 %v3461, %v3526
        %v3598 = vmul.f32 %v3462, %v3536
        %v3599 = vmul.f32 %v3463, %v3546
        %v3600 = vmul.f32 %v3464, %v3556
        %v3601 = vmul.f32 %v3465, %v3566
        %v3602 = vmul.f32 %v3466, %v3576
        %v3603 = vmul.f32 %v3467, %v3586
        %v3604 = vmul.f32 %v3468, %v3596
        %v3606 = vperm.slane %v3427, 0
        %v3608 = vmul.f32 %v3597, %v3606
        %v3609 = vmul.f32 %v3598, %v3606
        %v3610 = vmul.f32 %v3599, %v3606
        %v3611 = vmul.f32 %v3600, %v3606
        %v3612 = vmul.f32 %v3601, %v3606
        %v3613 = vmul.f32 %v3602, %v3606
        %v3614 = vmul.f32 %v3603, %v3606
        %v3615 = vmul.f32 %v3604, %v3606
        %v3617 = vperm.slane %v3428, 0
        %v3619 = vadd.f32 %v3608, %v3617
        %v3620 = vadd.f32 %v3609, %v3617
        %v3621 = vadd.f32 %v3610, %v3617
        %v3622 = vadd.f32 %v3611, %v3617
        %v3623 = vadd.f32 %v3612, %v3617
        %v3624 = vadd.f32 %v3613, %v3617
        %v3625 = vadd.f32 %v3614, %v3617
        %v3626 = vadd.f32 %v3615, %v3617
        %3627 = vst.msk [vmem:[%s833] sm:$0xff] %vm904, %v3619
        %3628 = vst.msk [vmem:[%s833 + $0x8] sm:$0xff] %vm904, %v3620
        %3629 = vst.msk [vmem:[%s833 + $0x10] sm:$0xff] %vm904, %v3621
        %3630 = vst.msk [vmem:[%s833 + $0x18] sm:$0xff] %vm904, %v3622
        %3631 = vst.msk [vmem:[%s833 + $0x20] sm:$0xff] %vm904, %v3623
        %3632 = vst.msk [vmem:[%s833 + $0x28] sm:$0xff] %vm904, %v3624
        %3633 = vst.msk [vmem:[%s833 + $0x30] sm:$0xff] %vm904, %v3625
        %3634 = vst.msk [vmem:[%s833 + $0x38] sm:$0xff] %vm904, %v3626
      $region100: #{tpu_custom_call.1} parent=91 // pred_fallthru
        _
      %p3635 = scmp.lt.s32.totalorder %s33, 1
      %s3636 = scalar_select %p3635, %s33, 1
      %s3637 = smul.addr %s3636, 8
      %s3638 = smul.addr %s3637, 8
      %s3639 = scalar_lea.vmem %s18, %s3638
      // Predicated region
      $region101: #{tpu_custom_call.1} parent=91 // pred_check
        %p3640 = pneg %p517
      $region102: #{tpu_custom_call.1} parent=91 // pred_check_branch
        %3642 = sbr.rel (%p3640) target = $region104
      $region103: #{tpu_custom_call.1} parent=91 // pred_region
        _
      $region104: #{tpu_custom_call.1} parent=91 // pred_fallthru
        _
    $region92: #{tpu_custom_call.1} parent=5 // pred_fallthru
      _
    %p3643 = scmp.le.s32.totalorder 2, %s24
    // Predicated region
    $region105: #{tpu_custom_call.1} parent=5 // pred_check
      %p3644 = pneg %p3643
    $region106: #{tpu_custom_call.1} parent=5 // pred_check_branch
      %3646 = sbr.rel (%p3644) target = $region108
    $region107: #{tpu_custom_call.1} parent=5 // pred_region
      %s3647 = ssub.s32 %s24, 2
      // Predicated region
      $region109: #{tpu_custom_call.1} parent=107 // pred_check
        %p3648 = pneg %p523
      $region110: #{tpu_custom_call.1} parent=107 // pred_check_branch
        %3650 = sbr.rel (%p3648) target = $region112
      $region111: #{tpu_custom_call.1} parent=107 // pred_region
        %p3651 = scmp.lt.s32.totalorder %s35, 1
        %s3652 = scalar_select %p3651, %s35, 1
        %s3653 = smul.addr %s3652, 8
        %s3654 = smul.addr %s3653, 8
        %s3655 = scalar_lea.vmem %s18, %s3654
      $region112: #{tpu_custom_call.1} parent=107 // pred_fallthru
        _
    $region108: #{tpu_custom_call.1} parent=5 // pred_fallthru
      _
  $region6: #{tpu_custom_call.1} parent=0 // loop_footer
    %s28 = sadd.s32 1, %s24
  $region7: #{tpu_custom_call.1} parent=0 // loop_footer_branch
    %23 = sbr.rel target = $region3
  $region8: #{tpu_custom_call.1} parent=0 // loop_exit
    _

</llo_original>
